<compile_context>
chip_gen: v7x
topology: tpu7x:2x2x1
jax: 0.10.0
libtpu: 0.0.40
codegen_flags: <defaults>
</compile_context>

<pallas_src>
import math

import numpy as np

import jax
import jax.numpy as jnp
from jax.experimental import pallas as pl
from jax.experimental.pallas import tpu as pltpu


LP = 128   # padded latent width (lane-dense recurrent state)
CP = 128   # padded class width (lane-dense final store; sliced back in the wrapper)


# ----------------------------------------------------------------------------
# Pallas kernel: entire DGM2_O forward for one batch block, time loop inside.
# ----------------------------------------------------------------------------
def _dgm2_kernel(data_ref, static_ref, dts_ref,
                 w_ode_ref, b_ode_ref,
                 w_xall_ref, b_xall_ref,
                 w_yzr_ref, w_yn_ref,
                 w_mlp_t_ref, w_mlp_s_ref, b_mlp_ref,
                 out_ref):
    T, TB, D = data_ref.shape
    lp = w_ode_ref.shape[0]
    cp = out_ref.shape[1]
    bf16 = jnp.bfloat16
    f32 = jnp.float32

    # Bias rows loaded once; the per-step adds broadcast a single (1, N) vreg row across
    # sublanes (cheaper than keeping a (TB, N) broadcast constant live across the loop).
    b_ode_row = b_ode_ref[...]          # (1, LP)   f32
    b_x_row = b_xall_ref[...]           # (1, 3*LP) f32

    def step(t, carry):
        y, acc = carry                  # f32 carries: (TB, LP), (TB, CP)
        dt = dts_ref[t]                 # SMEM scalar

        # Euler ODE step between observations (reference's dt < minimum_step branch).
        inc = jnp.tanh(jnp.dot(y.astype(bf16), w_ode_ref[...],
                               preferred_element_type=f32) + b_ode_row)
        yi = y + dt * inc               # yi_ode, f32

        # Fused 384-wide x-projection of all three gates for this timestep (K = D).
        x_t = data_ref[t].astype(bf16)  # (TB, D)
        xp = jnp.dot(x_t, w_xall_ref[...], preferred_element_type=f32) + b_x_row

        # Fused update+reset gates: one 256-wide matmul (good MXU column use on v6e/v7x).
        g = jnp.dot(yi.astype(bf16), w_yzr_ref[...],
                    preferred_element_type=f32) + xp[:, :2 * lp]
        z = jax.nn.sigmoid(g[:, :lp])
        r = jax.nn.sigmoid(g[:, lp:])

        # new_state_net (no activation in the reference).
        n = jnp.dot((yi * r).astype(bf16), w_yn_ref[...],
                    preferred_element_type=f32) + xp[:, 2 * lp:]
        y_new = (1.0 - z) * n + z * yi

        # Fold this timestep's MLP weight slice into the recurrence (lane-dense accumulate).
        wrow = pl.multiple_of(t * lp, lp)
        acc = acc + jnp.dot(y_new.astype(bf16), w_mlp_t_ref[pl.ds(wrow, lp), :],
                            preferred_element_type=f32)
        return (y_new, acc)

    y0 = jnp.zeros((TB, lp), f32)
    acc0 = jnp.zeros((TB, cp), f32)
    # Full unroll only for short recurrences; larger T keeps the loop visible (avoid spills).
    unroll = T if T <= 8 else 4
    _, acc = jax.lax.fori_loop(0, T, step, (y0, acc0), unroll=unroll)

    # Static-feature part of the MLP + bias, then one unmasked lane-dense store.
    acc = acc + jnp.dot(static_ref[...].astype(bf16), w_mlp_s_ref[...],
                        preferred_element_type=f32)
    out_ref[...] = acc + b_mlp_ref[...]


# ----------------------------------------------------------------------------
# Batch-block selection (perf feedback): keep the per-step matmuls ~128 rows tall,
# give v7x's two TensorCores >= 2 parallel blocks, keep the grid short on v5e/v6e.
# ----------------------------------------------------------------------------
def _round_up(x, m):
    return -(-x // m) * m


def _pick_batch_block(B):
    try:
        kind = jax.devices()[0].device_kind.lower()
    except Exception:
        kind = ""
    two_tensorcores = "7" in kind          # v7x: 2 TensorCores per chip
    if B >= 256:
        return 128                         # M = 128 blocks and >= 2 grid steps anyway
    if two_tensorcores and B >= 16:
        return _round_up(_round_up(B, 2) // 2, 8)   # two blocks -> both TCs busy
    return min(B, 128)                     # single-TC: one fat block (grid = serial loop)


# ----------------------------------------------------------------------------
# Wrapper: weight packing / zero padding + pallas_call.
# ----------------------------------------------------------------------------
def dgm2_o_forward(data, time_steps, static_data, params, *, batch_block=None):
    """data: (B, T, D); time_steps: (T,); static_data: (B, S). Returns (B, n_classes)."""
    B, T, D = data.shape
    L = params["w_ode"].shape[0]
    C = params["w_mlp"].shape[1]
    S = static_data.shape[1]
    if T < 2:
        raise NotImplementedError("len(time_steps)==1 branch of forward() is not implemented")

    # dt per step: 0.01 for the first step, then consecutive time differences.
    dts = jnp.concatenate([jnp.full((1,), 0.01, jnp.float32),
                           jnp.diff(time_steps).astype(jnp.float32)])

    # Guard: only the reference's small-step Euler branch is implemented.
    ts_host = None
    try:
        ts_host = np.asarray(jax.device_get(time_steps), dtype=np.float64)
    except Exception:
        ts_host = None                      # traced inputs: skip the host-side guard
    if ts_host is not None and ts_host.size > 1:
        min_step = (ts_host[-1] - ts_host[0]) / (ts_host.size * 0.5)
        dt_host = np.concatenate([[0.01], np.diff(ts_host)])
        if np.any(dt_host >= min_step):
            raise NotImplementedError(
                "dt >= minimum_step requires the external z0_diffeq_solver; only the "
                "small-step Euler branch of run_odernn is implemented")

    # --- batch-block selection + zero padding of the batch dimension ---
    TB = _pick_batch_block(B) if batch_block is None else max(1, min(batch_block, B))
    nb = -(-B // TB)
    if nb > 1 and TB % 8 != 0:              # (8,128) tiling: block M must be a multiple of 8
        TB = _round_up(TB, 8)
        nb = -(-B // TB)
    B_pad = nb * TB
    if B_pad != B:
        data = jnp.concatenate(
            [data, jnp.zeros((B_pad - B, T, D), data.dtype)], axis=0)
        static_data = jnp.concatenate(
            [static_data, jnp.zeros((B_pad - B, S), static_data.dtype)], axis=0)

    data_t = jnp.transpose(data, (1, 0, 2)).astype(jnp.float32)     # (T, B_pad, D)
    static_f = static_data.astype(jnp.float32)

    # --- weight packing: matrices in bf16 (MXU operands), biases in f32 ---
    # Padded-lane invariant: every padded weight column/row and bias lane is zero, y0 = 0,
    # so the recurrent state stays exactly zero in lanes >= L (n and yi are both zero there
    # even though z = r = 0.5); w_mlp_t rows >= L are zero, so acc is never polluted.
    wdt = jnp.bfloat16

    def pad2(a, rows, cols, dtype):
        return (jnp.zeros((rows, cols), jnp.float32)
                .at[:a.shape[0], :a.shape[1]].set(a)).astype(dtype)

    # GRU_unit_cluster gate weights, stored (in, out): rows [:L] act on y, rows [L:] on x.
    w_u, w_r, w_n = params["w_update"], params["w_reset"], params["w_new"]

    # y-side: fused [update | reset] 256-wide matmul, and the new_state matmul.
    w_yzr = (jnp.zeros((LP, 2 * LP), jnp.float32)
             .at[:L, :L].set(w_u[:L]).at[:L, LP:LP + L].set(w_r[:L])).astype(wdt)
    w_yn = pad2(w_n[:L], LP, LP, wdt)

    # x-side: one fused [update | reset | new] projection (applied per step in the kernel).
    w_xall = (jnp.zeros((D, 3 * LP), jnp.float32)
              .at[:, :L].set(w_u[L:])
              .at[:, LP:LP + L].set(w_r[L:])
              .at[:, 2 * LP:2 * LP + L].set(w_n[L:])).astype(wdt)
    b_xall = (jnp.zeros((1, 3 * LP), jnp.float32)
              .at[0, :L].set(params["b_update"])
              .at[0, LP:LP + L].set(params["b_reset"])
              .at[0, 2 * LP:2 * LP + L].set(params["b_new"]))

    w_ode_p = pad2(params["w_ode"], LP, LP, wdt)
    b_ode_p = pad2(params["b_ode"][None, :], 1, LP, jnp.float32)

    # Final MLP: per-timestep (LP, CP) bf16 slices (the flatten+Linear epilogue becomes a
    # per-step accumulation) plus the static part.
    w_mlp = params["w_mlp"]
    w_time = w_mlp[:T * L].reshape(T, L, C)
    w_mlp_t = (jnp.zeros((T, LP, CP), jnp.float32)
               .at[:, :L, :C].set(w_time)).reshape(T * LP, CP).astype(wdt)
    w_mlp_s = pad2(w_mlp[T * L:], S, CP, wdt)
    b_mlp_p = pad2(params["b_mlp"][None, :], 1, CP, jnp.float32)

    full_block = lambda arr: pl.BlockSpec(arr.shape, lambda b: (0, 0))

    out = pl.pallas_call(
        _dgm2_kernel,
        out_shape=jax.ShapeDtypeStruct((B_pad, CP), jnp.float32),
        grid=(nb,),
        in_specs=[
            pl.BlockSpec((T, TB, D), lambda b: (0, b, 0)),            # data (time-major)
            pl.BlockSpec((TB, S), lambda b: (b, 0)),                  # static features
            pl.BlockSpec(memory_space=pltpu.MemorySpace.SMEM),        # per-step dt scalars
            full_block(w_ode_p), full_block(b_ode_p),
            full_block(w_xall), full_block(b_xall),
            full_block(w_yzr), full_block(w_yn),
            full_block(w_mlp_t), full_block(w_mlp_s), full_block(b_mlp_p),
        ],
        out_specs=pl.BlockSpec((TB, CP), lambda b: (b, 0)),
        compiler_params=pltpu.CompilerParams(
            dimension_semantics=("parallel",),                        # batch blocks -> megacore
            vmem_limit_bytes=32 * 1024 * 1024),                       # explicit, safe on v5e..v7x
    )(data_t, static_f, dts,
      w_ode_p, b_ode_p, w_xall, b_xall, w_yzr, w_yn,
      w_mlp_t, w_mlp_s, b_mlp_p)

    return out[:B, :C]


# ----------------------------------------------------------------------------
# Deterministic parameter init (PyTorch Linear-style uniform(-1/sqrt(fan_in), 1/sqrt(fan_in))).
# Weights stored pre-transposed as (in, out); biases as (out,).
# ----------------------------------------------------------------------------
def init_params(key, latent_dim, input_dim, n_tp, static_dim, n_classes):
    L, D = latent_dim, input_dim

    def lin(k, fan_in, fan_out):
        kw, kb = jax.random.split(k)
        bound = 1.0 / math.sqrt(fan_in)
        w = jax.random.uniform(kw, (fan_in, fan_out), jnp.float32, -bound, bound)
        b = jax.random.uniform(kb, (fan_out,), jnp.float32, -bound, bound)
        return w, b

    ks = jax.random.split(key, 5)
    w_u, b_u = lin(ks[0], L + D, L)        # update_gate
    w_r, b_r = lin(ks[1], L + D, L)        # reset_gate
    w_n, b_n = lin(ks[2], L + D, L)        # new_state_net
    w_o, b_o = lin(ks[3], L, L)            # built-in ode_func (external in the reference)
    w_m, b_m = lin(ks[4], n_tp * L + static_dim, n_classes)   # self.mlp
    return dict(w_update=w_u, b_update=b_u, w_reset=w_r, b_reset=b_r,
                w_new=w_n, b_new=b_n, w_ode=w_o, b_ode=b_o,
                w_mlp=w_m, b_mlp=b_m)


# ----------------------------------------------------------------------------
# Pure-JAX reference (plain Python loop, f32 math).  Weight matrices are rounded to bf16 to
# match the kernel's weight storage; biases / carries stay f32, mirroring the kernel.
# ----------------------------------------------------------------------------
def dgm2_reference(data, time_steps, static_data, params, weight_dtype=jnp.bfloat16):
    q = lambda w: w.astype(weight_dtype).astype(jnp.float32)
    B, T, D = data.shape
    L = params["w_ode"].shape[0]
    y = jnp.zeros((B, L), jnp.float32)
    states = []
    prev_t = time_steps[0] - 0.01
    for i in range(T):
        t_i = time_steps[i]
        dt = t_i - prev_t
        inc = jnp.tanh(y @ q(params["w_ode"]) + params["b_ode"])
        yi = y + inc * dt
        x = data[:, i, :]
        yc = jnp.concatenate([yi, x], axis=-1)
        z = jax.nn.sigmoid(yc @ q(params["w_update"]) + params["b_update"])
        r = jax.nn.sigmoid(yc @ q(params["w_reset"]) + params["b_reset"])
        cc = jnp.concatenate([yi * r, x], axis=-1)
        n = cc @ q(params["w_new"]) + params["b_new"]
        y = (1.0 - z) * n + z * yi
        states.append(y)
        prev_t = t_i
    vec = jnp.stack(states, axis=1).reshape(B, T * L)
    vec = jnp.concatenate([vec, static_data], axis=1)
    return vec @ q(params["w_mlp"]) + params["b_mlp"]


if __name__ == "__main__":
    key = jax.random.PRNGKey(0)
    L, S, C = 10, 4, 2      # latent dim (mlp expects ts*10), static features, n_classes

    def run_case(B, T, D, k, batch_block=None):
        kd, ks, kp = jax.random.split(k, 3)
        data = jax.random.normal(kd, (B, T, D), jnp.float32)
        static_data = jax.random.normal(ks, (B, S), jnp.float32)
        time_steps = jnp.arange(T, dtype=jnp.float32)   # uniform grid -> Euler branch everywhere
        params = init_params(kp, L, D, T, S, C)

        out = dgm2_o_forward(data, time_steps, static_data, params, batch_block=batch_block)
        out = jax.block_until_ready(out)

        ref = dgm2_reference(data, time_steps, static_data, params)
        assert out.shape == (B, C)
        max_err = float(jnp.max(jnp.abs(out - ref)))
        # bf16 MXU operands (f32 carries/accumulators/biases) -> bf16-level tolerance.
        assert jnp.allclose(out, ref, atol=1e-2, rtol=1e-2), \
            f"mismatch: max abs err {max_err}"
        return max_err

    # Tiny batch: single fat block (generation-aware TB selection).
    run_case(8, 8, 16, jax.random.fold_in(key, 0))
    # Forces 2 grid blocks + batch zero-padding path (TB=16, B padded 24 -> 32).
    run_case(24, 8, 16, jax.random.fold_in(key, 1), batch_block=16)

    print("KERNEL_OK")
</pallas_src>

<mosaic_0001>
module attributes {stable_mosaic.version = 11 : i64} {
  func.func @_dgm2_kernel(%arg0: i32, %arg1: memref<8x8x16xf32, #tpu.memory_space<vmem>>, %arg2: memref<8x4xf32, #tpu.memory_space<vmem>>, %arg3: memref<8xf32, #tpu.memory_space<smem>>, %arg4: memref<128x128xbf16, #tpu.memory_space<vmem>>, %arg5: memref<1x128xf32, #tpu.memory_space<vmem>>, %arg6: memref<16x384xbf16, #tpu.memory_space<vmem>>, %arg7: memref<1x384xf32, #tpu.memory_space<vmem>>, %arg8: memref<128x256xbf16, #tpu.memory_space<vmem>>, %arg9: memref<128x128xbf16, #tpu.memory_space<vmem>>, %arg10: memref<1024x128xbf16, #tpu.memory_space<vmem>>, %arg11: memref<4x128xbf16, #tpu.memory_space<vmem>>, %arg12: memref<1x128xf32, #tpu.memory_space<vmem>>, %arg13: memref<8x128xf32, #tpu.memory_space<vmem>>) attributes {dimension_semantics = [#tpu.dimension_semantics<parallel>], iteration_bounds = array<i64: 1>, scalar_prefetch = 0 : i64, scratch_operands = 0 : i64, tpu.core_type = #tpu.core_type<tc>, window_params = [{transform_indices = @transform_0, window_bounds = array<i64: 8, 8, 16>}, {transform_indices = @transform_1, window_bounds = array<i64: 8, 4>}, {transform_indices = @transform_2, window_bounds = array<i64: 8>}, {pipeline_mode = #tpu.pipeline_mode<synchronous>, transform_indices = @transform_3, window_bounds = array<i64: 128, 128>}, {pipeline_mode = #tpu.pipeline_mode<synchronous>, transform_indices = @transform_4, window_bounds = array<i64: 1, 128>}, {pipeline_mode = #tpu.pipeline_mode<synchronous>, transform_indices = @transform_5, window_bounds = array<i64: 16, 384>}, {pipeline_mode = #tpu.pipeline_mode<synchronous>, transform_indices = @transform_6, window_bounds = array<i64: 1, 384>}, {pipeline_mode = #tpu.pipeline_mode<synchronous>, transform_indices = @transform_7, window_bounds = array<i64: 128, 256>}, {pipeline_mode = #tpu.pipeline_mode<synchronous>, transform_indices = @transform_8, window_bounds = array<i64: 128, 128>}, {pipeline_mode = #tpu.pipeline_mode<synchronous>, transform_indices = @transform_9, window_bounds = array<i64: 1024, 128>}, {pipeline_mode = #tpu.pipeline_mode<synchronous>, transform_indices = @transform_10, window_bounds = array<i64: 4, 128>}, {pipeline_mode = #tpu.pipeline_mode<synchronous>, transform_indices = @transform_11, window_bounds = array<i64: 1, 128>}, {transform_indices = @transform_12, window_bounds = array<i64: 8, 128>}]} {
    %c0 = arith.constant 0 : index
    %c0_0 = arith.constant 0 : index
    %0 = vector.load %arg5[%c0, %c0_0] : memref<1x128xf32, #tpu.memory_space<vmem>>, vector<1x128xf32>
    %c0_1 = arith.constant 0 : index
    %c0_2 = arith.constant 0 : index
    %1 = vector.load %arg7[%c0_1, %c0_2] : memref<1x384xf32, #tpu.memory_space<vmem>>, vector<1x384xf32>
    %cst = arith.constant 0.000000e+00 : f32
    %2 = vector.broadcast %cst : f32 to vector<8x128xf32>
    %cst_3 = arith.constant 0.000000e+00 : f32
    %3 = vector.broadcast %cst_3 : f32 to vector<8x128xf32>
    %c0_i32 = arith.constant 0 : i32
    %4 = arith.index_cast %c0_i32 : i32 to index
    %5 = memref.load %arg3[%4] : memref<8xf32, #tpu.memory_space<smem>>
    %6 = arith.truncf %2 : vector<8x128xf32> to vector<8x128xbf16>
    %c0_4 = arith.constant 0 : index
    %c0_5 = arith.constant 0 : index
    %7 = vector.load %arg4[%c0_4, %c0_5] : memref<128x128xbf16, #tpu.memory_space<vmem>>, vector<128x128xbf16>
    %cst_6 = arith.constant dense<0.000000e+00> : vector<8x128xf32>
    %8 = tpu.matmul %6, %7, %cst_6 {dimension_numbers = #tpu.dot_dimension_numbers<[1], [0], [0], [1], [0, 0, 1, 1], [], []>} : vector<8x128xbf16>, vector<128x128xbf16>, vector<8x128xf32> -> vector<8x128xf32>
    %9 = vector.broadcast %0 : vector<1x128xf32> to vector<8x128xf32>
    %10 = arith.addf %8, %9 : vector<8x128xf32>
    %11 = math.tanh %10 : vector<8x128xf32>
    %12 = vector.broadcast %5 : f32 to vector<8x128xf32>
    %13 = arith.mulf %12, %11 : vector<8x128xf32>
    %14 = arith.addf %2, %13 : vector<8x128xf32>
    %15 = arith.index_cast %c0_i32 : i32 to index
    %c0_7 = arith.constant 0 : index
    %c0_8 = arith.constant 0 : index
    %16 = vector.load %arg1[%15, %c0_7, %c0_8] : memref<8x8x16xf32, #tpu.memory_space<vmem>>, vector<1x8x16xf32>
    %17 = vector.shape_cast %16 : vector<1x8x16xf32> to vector<8x16xf32>
    %18 = arith.truncf %17 : vector<8x16xf32> to vector<8x16xbf16>
    %c0_9 = arith.constant 0 : index
    %c0_10 = arith.constant 0 : index
    %19 = vector.load %arg6[%c0_9, %c0_10] : memref<16x384xbf16, #tpu.memory_space<vmem>>, vector<16x384xbf16>
    %cst_11 = arith.constant dense<0.000000e+00> : vector<8x384xf32>
    %20 = tpu.matmul %18, %19, %cst_11 {dimension_numbers = #tpu.dot_dimension_numbers<[1], [0], [0], [1], [0, 0, 1, 1], [], []>} : vector<8x16xbf16>, vector<16x384xbf16>, vector<8x384xf32> -> vector<8x384xf32>
    %21 = vector.broadcast %1 : vector<1x384xf32> to vector<8x384xf32>
    %22 = arith.addf %20, %21 : vector<8x384xf32>
    %23 = arith.truncf %14 : vector<8x128xf32> to vector<8x128xbf16>
    %c0_12 = arith.constant 0 : index
    %c0_13 = arith.constant 0 : index
    %24 = vector.load %arg8[%c0_12, %c0_13] : memref<128x256xbf16, #tpu.memory_space<vmem>>, vector<128x256xbf16>
    %cst_14 = arith.constant dense<0.000000e+00> : vector<8x256xf32>
    %25 = tpu.matmul %23, %24, %cst_14 {dimension_numbers = #tpu.dot_dimension_numbers<[1], [0], [0], [1], [0, 0, 1, 1], [], []>} : vector<8x128xbf16>, vector<128x256xbf16>, vector<8x256xf32> -> vector<8x256xf32>
    %26 = vector.extract_strided_slice %22 {offsets = [0, 0], sizes = [8, 256], strides = [1, 1]} : vector<8x384xf32> to vector<8x256xf32>
    %27 = arith.addf %25, %26 : vector<8x256xf32>
    %28 = vector.extract_strided_slice %27 {offsets = [0, 0], sizes = [8, 128], strides = [1, 1]} : vector<8x256xf32> to vector<8x128xf32>
    %29 = arith.negf %28 : vector<8x128xf32>
    %30 = math.exp %29 : vector<8x128xf32>
    %cst_15 = arith.constant 1.000000e+00 : f32
    %31 = vector.broadcast %cst_15 : f32 to vector<8x128xf32>
    %32 = arith.addf %31, %30 : vector<8x128xf32>
    %33 = arith.divf %31, %32 : vector<8x128xf32>
    %34 = vector.extract_strided_slice %27 {offsets = [0, 128], sizes = [8, 128], strides = [1, 1]} : vector<8x256xf32> to vector<8x128xf32>
    %35 = arith.negf %34 : vector<8x128xf32>
    %36 = math.exp %35 : vector<8x128xf32>
    %cst_16 = arith.constant 1.000000e+00 : f32
    %37 = vector.broadcast %cst_16 : f32 to vector<8x128xf32>
    %38 = arith.addf %37, %36 : vector<8x128xf32>
    %39 = arith.divf %37, %38 : vector<8x128xf32>
    %40 = arith.mulf %14, %39 : vector<8x128xf32>
    %41 = arith.truncf %40 : vector<8x128xf32> to vector<8x128xbf16>
    %c0_17 = arith.constant 0 : index
    %c0_18 = arith.constant 0 : index
    %42 = vector.load %arg9[%c0_17, %c0_18] : memref<128x128xbf16, #tpu.memory_space<vmem>>, vector<128x128xbf16>
    %cst_19 = arith.constant dense<0.000000e+00> : vector<8x128xf32>
    %43 = tpu.matmul %41, %42, %cst_19 {dimension_numbers = #tpu.dot_dimension_numbers<[1], [0], [0], [1], [0, 0, 1, 1], [], []>} : vector<8x128xbf16>, vector<128x128xbf16>, vector<8x128xf32> -> vector<8x128xf32>
    %44 = vector.extract_strided_slice %22 {offsets = [0, 256], sizes = [8, 128], strides = [1, 1]} : vector<8x384xf32> to vector<8x128xf32>
    %45 = arith.addf %43, %44 : vector<8x128xf32>
    %cst_20 = arith.constant 1.000000e+00 : f32
    %46 = vector.broadcast %cst_20 : f32 to vector<8x128xf32>
    %47 = arith.subf %46, %33 : vector<8x128xf32>
    %48 = arith.mulf %47, %45 : vector<8x128xf32>
    %49 = arith.mulf %33, %14 : vector<8x128xf32>
    %50 = arith.addf %48, %49 : vector<8x128xf32>
    %c128_i32 = arith.constant 128 : i32
    %51 = arith.muli %c0_i32, %c128_i32 : i32
    %52 = tpu.assume_multiple %51, 128 : i32
    %53 = arith.truncf %50 : vector<8x128xf32> to vector<8x128xbf16>
    %54 = arith.index_cast %52 : i32 to index
    %c0_21 = arith.constant 0 : index
    %55 = vector.load %arg10[%54, %c0_21] : memref<1024x128xbf16, #tpu.memory_space<vmem>>, vector<128x128xbf16>
    %cst_22 = arith.constant dense<0.000000e+00> : vector<8x128xf32>
    %56 = tpu.matmul %53, %55, %cst_22 {dimension_numbers = #tpu.dot_dimension_numbers<[1], [0], [0], [1], [0, 0, 1, 1], [], []>} : vector<8x128xbf16>, vector<128x128xbf16>, vector<8x128xf32> -> vector<8x128xf32>
    %57 = arith.addf %3, %56 : vector<8x128xf32>
    %c1_i32 = arith.constant 1 : i32
    %58 = arith.index_cast %c1_i32 : i32 to index
    %59 = memref.load %arg3[%58] : memref<8xf32, #tpu.memory_space<smem>>
    %60 = arith.truncf %50 : vector<8x128xf32> to vector<8x128xbf16>
    %c0_23 = arith.constant 0 : index
    %c0_24 = arith.constant 0 : index
    %61 = vector.load %arg4[%c0_23, %c0_24] : memref<128x128xbf16, #tpu.memory_space<vmem>>, vector<128x128xbf16>
    %cst_25 = arith.constant dense<0.000000e+00> : vector<8x128xf32>
    %62 = tpu.matmul %60, %61, %cst_25 {dimension_numbers = #tpu.dot_dimension_numbers<[1], [0], [0], [1], [0, 0, 1, 1], [], []>} : vector<8x128xbf16>, vector<128x128xbf16>, vector<8x128xf32> -> vector<8x128xf32>
    %63 = vector.broadcast %0 : vector<1x128xf32> to vector<8x128xf32>
    %64 = arith.addf %62, %63 : vector<8x128xf32>
    %65 = math.tanh %64 : vector<8x128xf32>
    %66 = vector.broadcast %59 : f32 to vector<8x128xf32>
    %67 = arith.mulf %66, %65 : vector<8x128xf32>
    %68 = arith.addf %50, %67 : vector<8x128xf32>
    %69 = arith.index_cast %c1_i32 : i32 to index
    %c0_26 = arith.constant 0 : index
    %c0_27 = arith.constant 0 : index
    %70 = vector.load %arg1[%69, %c0_26, %c0_27] : memref<8x8x16xf32, #tpu.memory_space<vmem>>, vector<1x8x16xf32>
    %71 = vector.shape_cast %70 : vector<1x8x16xf32> to vector<8x16xf32>
    %72 = arith.truncf %71 : vector<8x16xf32> to vector<8x16xbf16>
    %c0_28 = arith.constant 0 : index
    %c0_29 = arith.constant 0 : index
    %73 = vector.load %arg6[%c0_28, %c0_29] : memref<16x384xbf16, #tpu.memory_space<vmem>>, vector<16x384xbf16>
    %cst_30 = arith.constant dense<0.000000e+00> : vector<8x384xf32>
    %74 = tpu.matmul %72, %73, %cst_30 {dimension_numbers = #tpu.dot_dimension_numbers<[1], [0], [0], [1], [0, 0, 1, 1], [], []>} : vector<8x16xbf16>, vector<16x384xbf16>, vector<8x384xf32> -> vector<8x384xf32>
    %75 = vector.broadcast %1 : vector<1x384xf32> to vector<8x384xf32>
    %76 = arith.addf %74, %75 : vector<8x384xf32>
    %77 = arith.truncf %68 : vector<8x128xf32> to vector<8x128xbf16>
    %c0_31 = arith.constant 0 : index
    %c0_32 = arith.constant 0 : index
    %78 = vector.load %arg8[%c0_31, %c0_32] : memref<128x256xbf16, #tpu.memory_space<vmem>>, vector<128x256xbf16>
    %cst_33 = arith.constant dense<0.000000e+00> : vector<8x256xf32>
    %79 = tpu.matmul %77, %78, %cst_33 {dimension_numbers = #tpu.dot_dimension_numbers<[1], [0], [0], [1], [0, 0, 1, 1], [], []>} : vector<8x128xbf16>, vector<128x256xbf16>, vector<8x256xf32> -> vector<8x256xf32>
    %80 = vector.extract_strided_slice %76 {offsets = [0, 0], sizes = [8, 256], strides = [1, 1]} : vector<8x384xf32> to vector<8x256xf32>
    %81 = arith.addf %79, %80 : vector<8x256xf32>
    %82 = vector.extract_strided_slice %81 {offsets = [0, 0], sizes = [8, 128], strides = [1, 1]} : vector<8x256xf32> to vector<8x128xf32>
    %83 = arith.negf %82 : vector<8x128xf32>
    %84 = math.exp %83 : vector<8x128xf32>
    %cst_34 = arith.constant 1.000000e+00 : f32
    %85 = vector.broadcast %cst_34 : f32 to vector<8x128xf32>
    %86 = arith.addf %85, %84 : vector<8x128xf32>
    %87 = arith.divf %85, %86 : vector<8x128xf32>
    %88 = vector.extract_strided_slice %81 {offsets = [0, 128], sizes = [8, 128], strides = [1, 1]} : vector<8x256xf32> to vector<8x128xf32>
    %89 = arith.negf %88 : vector<8x128xf32>
    %90 = math.exp %89 : vector<8x128xf32>
    %cst_35 = arith.constant 1.000000e+00 : f32
    %91 = vector.broadcast %cst_35 : f32 to vector<8x128xf32>
    %92 = arith.addf %91, %90 : vector<8x128xf32>
    %93 = arith.divf %91, %92 : vector<8x128xf32>
    %94 = arith.mulf %68, %93 : vector<8x128xf32>
    %95 = arith.truncf %94 : vector<8x128xf32> to vector<8x128xbf16>
    %c0_36 = arith.constant 0 : index
    %c0_37 = arith.constant 0 : index
    %96 = vector.load %arg9[%c0_36, %c0_37] : memref<128x128xbf16, #tpu.memory_space<vmem>>, vector<128x128xbf16>
    %cst_38 = arith.constant dense<0.000000e+00> : vector<8x128xf32>
    %97 = tpu.matmul %95, %96, %cst_38 {dimension_numbers = #tpu.dot_dimension_numbers<[1], [0], [0], [1], [0, 0, 1, 1], [], []>} : vector<8x128xbf16>, vector<128x128xbf16>, vector<8x128xf32> -> vector<8x128xf32>
    %98 = vector.extract_strided_slice %76 {offsets = [0, 256], sizes = [8, 128], strides = [1, 1]} : vector<8x384xf32> to vector<8x128xf32>
    %99 = arith.addf %97, %98 : vector<8x128xf32>
    %cst_39 = arith.constant 1.000000e+00 : f32
    %100 = vector.broadcast %cst_39 : f32 to vector<8x128xf32>
    %101 = arith.subf %100, %87 : vector<8x128xf32>
    %102 = arith.mulf %101, %99 : vector<8x128xf32>
    %103 = arith.mulf %87, %68 : vector<8x128xf32>
    %104 = arith.addf %102, %103 : vector<8x128xf32>
    %c128_i32_40 = arith.constant 128 : i32
    %105 = arith.muli %c1_i32, %c128_i32_40 : i32
    %106 = tpu.assume_multiple %105, 128 : i32
    %107 = arith.truncf %104 : vector<8x128xf32> to vector<8x128xbf16>
    %108 = arith.index_cast %106 : i32 to index
    %c0_41 = arith.constant 0 : index
    %109 = vector.load %arg10[%108, %c0_41] : memref<1024x128xbf16, #tpu.memory_space<vmem>>, vector<128x128xbf16>
    %cst_42 = arith.constant dense<0.000000e+00> : vector<8x128xf32>
    %110 = tpu.matmul %107, %109, %cst_42 {dimension_numbers = #tpu.dot_dimension_numbers<[1], [0], [0], [1], [0, 0, 1, 1], [], []>} : vector<8x128xbf16>, vector<128x128xbf16>, vector<8x128xf32> -> vector<8x128xf32>
    %111 = arith.addf %57, %110 : vector<8x128xf32>
    %c2_i32 = arith.constant 2 : i32
    %112 = arith.index_cast %c2_i32 : i32 to index
    %113 = memref.load %arg3[%112] : memref<8xf32, #tpu.memory_space<smem>>
    %114 = arith.truncf %104 : vector<8x128xf32> to vector<8x128xbf16>
    %c0_43 = arith.constant 0 : index
    %c0_44 = arith.constant 0 : index
    %115 = vector.load %arg4[%c0_43, %c0_44] : memref<128x128xbf16, #tpu.memory_space<vmem>>, vector<128x128xbf16>
    %cst_45 = arith.constant dense<0.000000e+00> : vector<8x128xf32>
    %116 = tpu.matmul %114, %115, %cst_45 {dimension_numbers = #tpu.dot_dimension_numbers<[1], [0], [0], [1], [0, 0, 1, 1], [], []>} : vector<8x128xbf16>, vector<128x128xbf16>, vector<8x128xf32> -> vector<8x128xf32>
    %117 = vector.broadcast %0 : vector<1x128xf32> to vector<8x128xf32>
    %118 = arith.addf %116, %117 : vector<8x128xf32>
    %119 = math.tanh %118 : vector<8x128xf32>
    %120 = vector.broadcast %113 : f32 to vector<8x128xf32>
    %121 = arith.mulf %120, %119 : vector<8x128xf32>
    %122 = arith.addf %104, %121 : vector<8x128xf32>
    %123 = arith.index_cast %c2_i32 : i32 to index
    %c0_46 = arith.constant 0 : index
    %c0_47 = arith.constant 0 : index
    %124 = vector.load %arg1[%123, %c0_46, %c0_47] : memref<8x8x16xf32, #tpu.memory_space<vmem>>, vector<1x8x16xf32>
    %125 = vector.shape_cast %124 : vector<1x8x16xf32> to vector<8x16xf32>
    %126 = arith.truncf %125 : vector<8x16xf32> to vector<8x16xbf16>
    %c0_48 = arith.constant 0 : index
    %c0_49 = arith.constant 0 : index
    %127 = vector.load %arg6[%c0_48, %c0_49] : memref<16x384xbf16, #tpu.memory_space<vmem>>, vector<16x384xbf16>
    %cst_50 = arith.constant dense<0.000000e+00> : vector<8x384xf32>
    %128 = tpu.matmul %126, %127, %cst_50 {dimension_numbers = #tpu.dot_dimension_numbers<[1], [0], [0], [1], [0, 0, 1, 1], [], []>} : vector<8x16xbf16>, vector<16x384xbf16>, vector<8x384xf32> -> vector<8x384xf32>
    %129 = vector.broadcast %1 : vector<1x384xf32> to vector<8x384xf32>
    %130 = arith.addf %128, %129 : vector<8x384xf32>
    %131 = arith.truncf %122 : vector<8x128xf32> to vector<8x128xbf16>
    %c0_51 = arith.constant 0 : index
    %c0_52 = arith.constant 0 : index
    %132 = vector.load %arg8[%c0_51, %c0_52] : memref<128x256xbf16, #tpu.memory_space<vmem>>, vector<128x256xbf16>
    %cst_53 = arith.constant dense<0.000000e+00> : vector<8x256xf32>
    %133 = tpu.matmul %131, %132, %cst_53 {dimension_numbers = #tpu.dot_dimension_numbers<[1], [0], [0], [1], [0, 0, 1, 1], [], []>} : vector<8x128xbf16>, vector<128x256xbf16>, vector<8x256xf32> -> vector<8x256xf32>
    %134 = vector.extract_strided_slice %130 {offsets = [0, 0], sizes = [8, 256], strides = [1, 1]} : vector<8x384xf32> to vector<8x256xf32>
    %135 = arith.addf %133, %134 : vector<8x256xf32>
    %136 = vector.extract_strided_slice %135 {offsets = [0, 0], sizes = [8, 128], strides = [1, 1]} : vector<8x256xf32> to vector<8x128xf32>
    %137 = arith.negf %136 : vector<8x128xf32>
    %138 = math.exp %137 : vector<8x128xf32>
    %cst_54 = arith.constant 1.000000e+00 : f32
    %139 = vector.broadcast %cst_54 : f32 to vector<8x128xf32>
    %140 = arith.addf %139, %138 : vector<8x128xf32>
    %141 = arith.divf %139, %140 : vector<8x128xf32>
    %142 = vector.extract_strided_slice %135 {offsets = [0, 128], sizes = [8, 128], strides = [1, 1]} : vector<8x256xf32> to vector<8x128xf32>
    %143 = arith.negf %142 : vector<8x128xf32>
    %144 = math.exp %143 : vector<8x128xf32>
    %cst_55 = arith.constant 1.000000e+00 : f32
    %145 = vector.broadcast %cst_55 : f32 to vector<8x128xf32>
    %146 = arith.addf %145, %144 : vector<8x128xf32>
    %147 = arith.divf %145, %146 : vector<8x128xf32>
    %148 = arith.mulf %122, %147 : vector<8x128xf32>
    %149 = arith.truncf %148 : vector<8x128xf32> to vector<8x128xbf16>
    %c0_56 = arith.constant 0 : index
    %c0_57 = arith.constant 0 : index
    %150 = vector.load %arg9[%c0_56, %c0_57] : memref<128x128xbf16, #tpu.memory_space<vmem>>, vector<128x128xbf16>
    %cst_58 = arith.constant dense<0.000000e+00> : vector<8x128xf32>
    %151 = tpu.matmul %149, %150, %cst_58 {dimension_numbers = #tpu.dot_dimension_numbers<[1], [0], [0], [1], [0, 0, 1, 1], [], []>} : vector<8x128xbf16>, vector<128x128xbf16>, vector<8x128xf32> -> vector<8x128xf32>
    %152 = vector.extract_strided_slice %130 {offsets = [0, 256], sizes = [8, 128], strides = [1, 1]} : vector<8x384xf32> to vector<8x128xf32>
    %153 = arith.addf %151, %152 : vector<8x128xf32>
    %cst_59 = arith.constant 1.000000e+00 : f32
    %154 = vector.broadcast %cst_59 : f32 to vector<8x128xf32>
    %155 = arith.subf %154, %141 : vector<8x128xf32>
    %156 = arith.mulf %155, %153 : vector<8x128xf32>
    %157 = arith.mulf %141, %122 : vector<8x128xf32>
    %158 = arith.addf %156, %157 : vector<8x128xf32>
    %c128_i32_60 = arith.constant 128 : i32
    %159 = arith.muli %c2_i32, %c128_i32_60 : i32
    %160 = tpu.assume_multiple %159, 128 : i32
    %161 = arith.truncf %158 : vector<8x128xf32> to vector<8x128xbf16>
    %162 = arith.index_cast %160 : i32 to index
    %c0_61 = arith.constant 0 : index
    %163 = vector.load %arg10[%162, %c0_61] : memref<1024x128xbf16, #tpu.memory_space<vmem>>, vector<128x128xbf16>
    %cst_62 = arith.constant dense<0.000000e+00> : vector<8x128xf32>
    %164 = tpu.matmul %161, %163, %cst_62 {dimension_numbers = #tpu.dot_dimension_numbers<[1], [0], [0], [1], [0, 0, 1, 1], [], []>} : vector<8x128xbf16>, vector<128x128xbf16>, vector<8x128xf32> -> vector<8x128xf32>
    %165 = arith.addf %111, %164 : vector<8x128xf32>
    %c3_i32 = arith.constant 3 : i32
    %166 = arith.index_cast %c3_i32 : i32 to index
    %167 = memref.load %arg3[%166] : memref<8xf32, #tpu.memory_space<smem>>
    %168 = arith.truncf %158 : vector<8x128xf32> to vector<8x128xbf16>
    %c0_63 = arith.constant 0 : index
    %c0_64 = arith.constant 0 : index
    %169 = vector.load %arg4[%c0_63, %c0_64] : memref<128x128xbf16, #tpu.memory_space<vmem>>, vector<128x128xbf16>
    %cst_65 = arith.constant dense<0.000000e+00> : vector<8x128xf32>
    %170 = tpu.matmul %168, %169, %cst_65 {dimension_numbers = #tpu.dot_dimension_numbers<[1], [0], [0], [1], [0, 0, 1, 1], [], []>} : vector<8x128xbf16>, vector<128x128xbf16>, vector<8x128xf32> -> vector<8x128xf32>
    %171 = vector.broadcast %0 : vector<1x128xf32> to vector<8x128xf32>
    %172 = arith.addf %170, %171 : vector<8x128xf32>
    %173 = math.tanh %172 : vector<8x128xf32>
    %174 = vector.broadcast %167 : f32 to vector<8x128xf32>
    %175 = arith.mulf %174, %173 : vector<8x128xf32>
    %176 = arith.addf %158, %175 : vector<8x128xf32>
    %177 = arith.index_cast %c3_i32 : i32 to index
    %c0_66 = arith.constant 0 : index
    %c0_67 = arith.constant 0 : index
    %178 = vector.load %arg1[%177, %c0_66, %c0_67] : memref<8x8x16xf32, #tpu.memory_space<vmem>>, vector<1x8x16xf32>
    %179 = vector.shape_cast %178 : vector<1x8x16xf32> to vector<8x16xf32>
    %180 = arith.truncf %179 : vector<8x16xf32> to vector<8x16xbf16>
    %c0_68 = arith.constant 0 : index
    %c0_69 = arith.constant 0 : index
    %181 = vector.load %arg6[%c0_68, %c0_69] : memref<16x384xbf16, #tpu.memory_space<vmem>>, vector<16x384xbf16>
    %cst_70 = arith.constant dense<0.000000e+00> : vector<8x384xf32>
    %182 = tpu.matmul %180, %181, %cst_70 {dimension_numbers = #tpu.dot_dimension_numbers<[1], [0], [0], [1], [0, 0, 1, 1], [], []>} : vector<8x16xbf16>, vector<16x384xbf16>, vector<8x384xf32> -> vector<8x384xf32>
    %183 = vector.broadcast %1 : vector<1x384xf32> to vector<8x384xf32>
    %184 = arith.addf %182, %183 : vector<8x384xf32>
    %185 = arith.truncf %176 : vector<8x128xf32> to vector<8x128xbf16>
    %c0_71 = arith.constant 0 : index
    %c0_72 = arith.constant 0 : index
    %186 = vector.load %arg8[%c0_71, %c0_72] : memref<128x256xbf16, #tpu.memory_space<vmem>>, vector<128x256xbf16>
    %cst_73 = arith.constant dense<0.000000e+00> : vector<8x256xf32>
    %187 = tpu.matmul %185, %186, %cst_73 {dimension_numbers = #tpu.dot_dimension_numbers<[1], [0], [0], [1], [0, 0, 1, 1], [], []>} : vector<8x128xbf16>, vector<128x256xbf16>, vector<8x256xf32> -> vector<8x256xf32>
    %188 = vector.extract_strided_slice %184 {offsets = [0, 0], sizes = [8, 256], strides = [1, 1]} : vector<8x384xf32> to vector<8x256xf32>
    %189 = arith.addf %187, %188 : vector<8x256xf32>
    %190 = vector.extract_strided_slice %189 {offsets = [0, 0], sizes = [8, 128], strides = [1, 1]} : vector<8x256xf32> to vector<8x128xf32>
    %191 = arith.negf %190 : vector<8x128xf32>
    %192 = math.exp %191 : vector<8x128xf32>
    %cst_74 = arith.constant 1.000000e+00 : f32
    %193 = vector.broadcast %cst_74 : f32 to vector<8x128xf32>
    %194 = arith.addf %193, %192 : vector<8x128xf32>
    %195 = arith.divf %193, %194 : vector<8x128xf32>
    %196 = vector.extract_strided_slice %189 {offsets = [0, 128], sizes = [8, 128], strides = [1, 1]} : vector<8x256xf32> to vector<8x128xf32>
    %197 = arith.negf %196 : vector<8x128xf32>
    %198 = math.exp %197 : vector<8x128xf32>
    %cst_75 = arith.constant 1.000000e+00 : f32
    %199 = vector.broadcast %cst_75 : f32 to vector<8x128xf32>
    %200 = arith.addf %199, %198 : vector<8x128xf32>
    %201 = arith.divf %199, %200 : vector<8x128xf32>
    %202 = arith.mulf %176, %201 : vector<8x128xf32>
    %203 = arith.truncf %202 : vector<8x128xf32> to vector<8x128xbf16>
    %c0_76 = arith.constant 0 : index
    %c0_77 = arith.constant 0 : index
    %204 = vector.load %arg9[%c0_76, %c0_77] : memref<128x128xbf16, #tpu.memory_space<vmem>>, vector<128x128xbf16>
    %cst_78 = arith.constant dense<0.000000e+00> : vector<8x128xf32>
    %205 = tpu.matmul %203, %204, %cst_78 {dimension_numbers = #tpu.dot_dimension_numbers<[1], [0], [0], [1], [0, 0, 1, 1], [], []>} : vector<8x128xbf16>, vector<128x128xbf16>, vector<8x128xf32> -> vector<8x128xf32>
    %206 = vector.extract_strided_slice %184 {offsets = [0, 256], sizes = [8, 128], strides = [1, 1]} : vector<8x384xf32> to vector<8x128xf32>
    %207 = arith.addf %205, %206 : vector<8x128xf32>
    %cst_79 = arith.constant 1.000000e+00 : f32
    %208 = vector.broadcast %cst_79 : f32 to vector<8x128xf32>
    %209 = arith.subf %208, %195 : vector<8x128xf32>
    %210 = arith.mulf %209, %207 : vector<8x128xf32>
    %211 = arith.mulf %195, %176 : vector<8x128xf32>
    %212 = arith.addf %210, %211 : vector<8x128xf32>
    %c128_i32_80 = arith.constant 128 : i32
    %213 = arith.muli %c3_i32, %c128_i32_80 : i32
    %214 = tpu.assume_multiple %213, 128 : i32
    %215 = arith.truncf %212 : vector<8x128xf32> to vector<8x128xbf16>
    %216 = arith.index_cast %214 : i32 to index
    %c0_81 = arith.constant 0 : index
    %217 = vector.load %arg10[%216, %c0_81] : memref<1024x128xbf16, #tpu.memory_space<vmem>>, vector<128x128xbf16>
    %cst_82 = arith.constant dense<0.000000e+00> : vector<8x128xf32>
    %218 = tpu.matmul %215, %217, %cst_82 {dimension_numbers = #tpu.dot_dimension_numbers<[1], [0], [0], [1], [0, 0, 1, 1], [], []>} : vector<8x128xbf16>, vector<128x128xbf16>, vector<8x128xf32> -> vector<8x128xf32>
    %219 = arith.addf %165, %218 : vector<8x128xf32>
    %c4_i32 = arith.constant 4 : i32
    %220 = arith.index_cast %c4_i32 : i32 to index
    %221 = memref.load %arg3[%220] : memref<8xf32, #tpu.memory_space<smem>>
    %222 = arith.truncf %212 : vector<8x128xf32> to vector<8x128xbf16>
    %c0_83 = arith.constant 0 : index
    %c0_84 = arith.constant 0 : index
    %223 = vector.load %arg4[%c0_83, %c0_84] : memref<128x128xbf16, #tpu.memory_space<vmem>>, vector<128x128xbf16>
    %cst_85 = arith.constant dense<0.000000e+00> : vector<8x128xf32>
    %224 = tpu.matmul %222, %223, %cst_85 {dimension_numbers = #tpu.dot_dimension_numbers<[1], [0], [0], [1], [0, 0, 1, 1], [], []>} : vector<8x128xbf16>, vector<128x128xbf16>, vector<8x128xf32> -> vector<8x128xf32>
    %225 = vector.broadcast %0 : vector<1x128xf32> to vector<8x128xf32>
    %226 = arith.addf %224, %225 : vector<8x128xf32>
    %227 = math.tanh %226 : vector<8x128xf32>
    %228 = vector.broadcast %221 : f32 to vector<8x128xf32>
    %229 = arith.mulf %228, %227 : vector<8x128xf32>
    %230 = arith.addf %212, %229 : vector<8x128xf32>
    %231 = arith.index_cast %c4_i32 : i32 to index
    %c0_86 = arith.constant 0 : index
    %c0_87 = arith.constant 0 : index
    %232 = vector.load %arg1[%231, %c0_86, %c0_87] : memref<8x8x16xf32, #tpu.memory_space<vmem>>, vector<1x8x16xf32>
    %233 = vector.shape_cast %232 : vector<1x8x16xf32> to vector<8x16xf32>
    %234 = arith.truncf %233 : vector<8x16xf32> to vector<8x16xbf16>
    %c0_88 = arith.constant 0 : index
    %c0_89 = arith.constant 0 : index
    %235 = vector.load %arg6[%c0_88, %c0_89] : memref<16x384xbf16, #tpu.memory_space<vmem>>, vector<16x384xbf16>
    %cst_90 = arith.constant dense<0.000000e+00> : vector<8x384xf32>
    %236 = tpu.matmul %234, %235, %cst_90 {dimension_numbers = #tpu.dot_dimension_numbers<[1], [0], [0], [1], [0, 0, 1, 1], [], []>} : vector<8x16xbf16>, vector<16x384xbf16>, vector<8x384xf32> -> vector<8x384xf32>
    %237 = vector.broadcast %1 : vector<1x384xf32> to vector<8x384xf32>
    %238 = arith.addf %236, %237 : vector<8x384xf32>
    %239 = arith.truncf %230 : vector<8x128xf32> to vector<8x128xbf16>
    %c0_91 = arith.constant 0 : index
    %c0_92 = arith.constant 0 : index
    %240 = vector.load %arg8[%c0_91, %c0_92] : memref<128x256xbf16, #tpu.memory_space<vmem>>, vector<128x256xbf16>
    %cst_93 = arith.constant dense<0.000000e+00> : vector<8x256xf32>
    %241 = tpu.matmul %239, %240, %cst_93 {dimension_numbers = #tpu.dot_dimension_numbers<[1], [0], [0], [1], [0, 0, 1, 1], [], []>} : vector<8x128xbf16>, vector<128x256xbf16>, vector<8x256xf32> -> vector<8x256xf32>
    %242 = vector.extract_strided_slice %238 {offsets = [0, 0], sizes = [8, 256], strides = [1, 1]} : vector<8x384xf32> to vector<8x256xf32>
    %243 = arith.addf %241, %242 : vector<8x256xf32>
    %244 = vector.extract_strided_slice %243 {offsets = [0, 0], sizes = [8, 128], strides = [1, 1]} : vector<8x256xf32> to vector<8x128xf32>
    %245 = arith.negf %244 : vector<8x128xf32>
    %246 = math.exp %245 : vector<8x128xf32>
    %cst_94 = arith.constant 1.000000e+00 : f32
    %247 = vector.broadcast %cst_94 : f32 to vector<8x128xf32>
    %248 = arith.addf %247, %246 : vector<8x128xf32>
    %249 = arith.divf %247, %248 : vector<8x128xf32>
    %250 = vector.extract_strided_slice %243 {offsets = [0, 128], sizes = [8, 128], strides = [1, 1]} : vector<8x256xf32> to vector<8x128xf32>
    %251 = arith.negf %250 : vector<8x128xf32>
    %252 = math.exp %251 : vector<8x128xf32>
    %cst_95 = arith.constant 1.000000e+00 : f32
    %253 = vector.broadcast %cst_95 : f32 to vector<8x128xf32>
    %254 = arith.addf %253, %252 : vector<8x128xf32>
    %255 = arith.divf %253, %254 : vector<8x128xf32>
    %256 = arith.mulf %230, %255 : vector<8x128xf32>
    %257 = arith.truncf %256 : vector<8x128xf32> to vector<8x128xbf16>
    %c0_96 = arith.constant 0 : index
    %c0_97 = arith.constant 0 : index
    %258 = vector.load %arg9[%c0_96, %c0_97] : memref<128x128xbf16, #tpu.memory_space<vmem>>, vector<128x128xbf16>
    %cst_98 = arith.constant dense<0.000000e+00> : vector<8x128xf32>
    %259 = tpu.matmul %257, %258, %cst_98 {dimension_numbers = #tpu.dot_dimension_numbers<[1], [0], [0], [1], [0, 0, 1, 1], [], []>} : vector<8x128xbf16>, vector<128x128xbf16>, vector<8x128xf32> -> vector<8x128xf32>
    %260 = vector.extract_strided_slice %238 {offsets = [0, 256], sizes = [8, 128], strides = [1, 1]} : vector<8x384xf32> to vector<8x128xf32>
    %261 = arith.addf %259, %260 : vector<8x128xf32>
    %cst_99 = arith.constant 1.000000e+00 : f32
    %262 = vector.broadcast %cst_99 : f32 to vector<8x128xf32>
    %263 = arith.subf %262, %249 : vector<8x128xf32>
    %264 = arith.mulf %263, %261 : vector<8x128xf32>
    %265 = arith.mulf %249, %230 : vector<8x128xf32>
    %266 = arith.addf %264, %265 : vector<8x128xf32>
    %c128_i32_100 = arith.constant 128 : i32
    %267 = arith.muli %c4_i32, %c128_i32_100 : i32
    %268 = tpu.assume_multiple %267, 128 : i32
    %269 = arith.truncf %266 : vector<8x128xf32> to vector<8x128xbf16>
    %270 = arith.index_cast %268 : i32 to index
    %c0_101 = arith.constant 0 : index
    %271 = vector.load %arg10[%270, %c0_101] : memref<1024x128xbf16, #tpu.memory_space<vmem>>, vector<128x128xbf16>
    %cst_102 = arith.constant dense<0.000000e+00> : vector<8x128xf32>
    %272 = tpu.matmul %269, %271, %cst_102 {dimension_numbers = #tpu.dot_dimension_numbers<[1], [0], [0], [1], [0, 0, 1, 1], [], []>} : vector<8x128xbf16>, vector<128x128xbf16>, vector<8x128xf32> -> vector<8x128xf32>
    %273 = arith.addf %219, %272 : vector<8x128xf32>
    %c5_i32 = arith.constant 5 : i32
    %274 = arith.index_cast %c5_i32 : i32 to index
    %275 = memref.load %arg3[%274] : memref<8xf32, #tpu.memory_space<smem>>
    %276 = arith.truncf %266 : vector<8x128xf32> to vector<8x128xbf16>
    %c0_103 = arith.constant 0 : index
    %c0_104 = arith.constant 0 : index
    %277 = vector.load %arg4[%c0_103, %c0_104] : memref<128x128xbf16, #tpu.memory_space<vmem>>, vector<128x128xbf16>
    %cst_105 = arith.constant dense<0.000000e+00> : vector<8x128xf32>
    %278 = tpu.matmul %276, %277, %cst_105 {dimension_numbers = #tpu.dot_dimension_numbers<[1], [0], [0], [1], [0, 0, 1, 1], [], []>} : vector<8x128xbf16>, vector<128x128xbf16>, vector<8x128xf32> -> vector<8x128xf32>
    %279 = vector.broadcast %0 : vector<1x128xf32> to vector<8x128xf32>
    %280 = arith.addf %278, %279 : vector<8x128xf32>
    %281 = math.tanh %280 : vector<8x128xf32>
    %282 = vector.broadcast %275 : f32 to vector<8x128xf32>
    %283 = arith.mulf %282, %281 : vector<8x128xf32>
    %284 = arith.addf %266, %283 : vector<8x128xf32>
    %285 = arith.index_cast %c5_i32 : i32 to index
    %c0_106 = arith.constant 0 : index
    %c0_107 = arith.constant 0 : index
    %286 = vector.load %arg1[%285, %c0_106, %c0_107] : memref<8x8x16xf32, #tpu.memory_space<vmem>>, vector<1x8x16xf32>
    %287 = vector.shape_cast %286 : vector<1x8x16xf32> to vector<8x16xf32>
    %288 = arith.truncf %287 : vector<8x16xf32> to vector<8x16xbf16>
    %c0_108 = arith.constant 0 : index
    %c0_109 = arith.constant 0 : index
    %289 = vector.load %arg6[%c0_108, %c0_109] : memref<16x384xbf16, #tpu.memory_space<vmem>>, vector<16x384xbf16>
    %cst_110 = arith.constant dense<0.000000e+00> : vector<8x384xf32>
    %290 = tpu.matmul %288, %289, %cst_110 {dimension_numbers = #tpu.dot_dimension_numbers<[1], [0], [0], [1], [0, 0, 1, 1], [], []>} : vector<8x16xbf16>, vector<16x384xbf16>, vector<8x384xf32> -> vector<8x384xf32>
    %291 = vector.broadcast %1 : vector<1x384xf32> to vector<8x384xf32>
    %292 = arith.addf %290, %291 : vector<8x384xf32>
    %293 = arith.truncf %284 : vector<8x128xf32> to vector<8x128xbf16>
    %c0_111 = arith.constant 0 : index
    %c0_112 = arith.constant 0 : index
    %294 = vector.load %arg8[%c0_111, %c0_112] : memref<128x256xbf16, #tpu.memory_space<vmem>>, vector<128x256xbf16>
    %cst_113 = arith.constant dense<0.000000e+00> : vector<8x256xf32>
    %295 = tpu.matmul %293, %294, %cst_113 {dimension_numbers = #tpu.dot_dimension_numbers<[1], [0], [0], [1], [0, 0, 1, 1], [], []>} : vector<8x128xbf16>, vector<128x256xbf16>, vector<8x256xf32> -> vector<8x256xf32>
    %296 = vector.extract_strided_slice %292 {offsets = [0, 0], sizes = [8, 256], strides = [1, 1]} : vector<8x384xf32> to vector<8x256xf32>
    %297 = arith.addf %295, %296 : vector<8x256xf32>
    %298 = vector.extract_strided_slice %297 {offsets = [0, 0], sizes = [8, 128], strides = [1, 1]} : vector<8x256xf32> to vector<8x128xf32>
    %299 = arith.negf %298 : vector<8x128xf32>
    %300 = math.exp %299 : vector<8x128xf32>
    %cst_114 = arith.constant 1.000000e+00 : f32
    %301 = vector.broadcast %cst_114 : f32 to vector<8x128xf32>
    %302 = arith.addf %301, %300 : vector<8x128xf32>
    %303 = arith.divf %301, %302 : vector<8x128xf32>
    %304 = vector.extract_strided_slice %297 {offsets = [0, 128], sizes = [8, 128], strides = [1, 1]} : vector<8x256xf32> to vector<8x128xf32>
    %305 = arith.negf %304 : vector<8x128xf32>
    %306 = math.exp %305 : vector<8x128xf32>
    %cst_115 = arith.constant 1.000000e+00 : f32
    %307 = vector.broadcast %cst_115 : f32 to vector<8x128xf32>
    %308 = arith.addf %307, %306 : vector<8x128xf32>
    %309 = arith.divf %307, %308 : vector<8x128xf32>
    %310 = arith.mulf %284, %309 : vector<8x128xf32>
    %311 = arith.truncf %310 : vector<8x128xf32> to vector<8x128xbf16>
    %c0_116 = arith.constant 0 : index
    %c0_117 = arith.constant 0 : index
    %312 = vector.load %arg9[%c0_116, %c0_117] : memref<128x128xbf16, #tpu.memory_space<vmem>>, vector<128x128xbf16>
    %cst_118 = arith.constant dense<0.000000e+00> : vector<8x128xf32>
    %313 = tpu.matmul %311, %312, %cst_118 {dimension_numbers = #tpu.dot_dimension_numbers<[1], [0], [0], [1], [0, 0, 1, 1], [], []>} : vector<8x128xbf16>, vector<128x128xbf16>, vector<8x128xf32> -> vector<8x128xf32>
    %314 = vector.extract_strided_slice %292 {offsets = [0, 256], sizes = [8, 128], strides = [1, 1]} : vector<8x384xf32> to vector<8x128xf32>
    %315 = arith.addf %313, %314 : vector<8x128xf32>
    %cst_119 = arith.constant 1.000000e+00 : f32
    %316 = vector.broadcast %cst_119 : f32 to vector<8x128xf32>
    %317 = arith.subf %316, %303 : vector<8x128xf32>
    %318 = arith.mulf %317, %315 : vector<8x128xf32>
    %319 = arith.mulf %303, %284 : vector<8x128xf32>
    %320 = arith.addf %318, %319 : vector<8x128xf32>
    %c128_i32_120 = arith.constant 128 : i32
    %321 = arith.muli %c5_i32, %c128_i32_120 : i32
    %322 = tpu.assume_multiple %321, 128 : i32
    %323 = arith.truncf %320 : vector<8x128xf32> to vector<8x128xbf16>
    %324 = arith.index_cast %322 : i32 to index
    %c0_121 = arith.constant 0 : index
    %325 = vector.load %arg10[%324, %c0_121] : memref<1024x128xbf16, #tpu.memory_space<vmem>>, vector<128x128xbf16>
    %cst_122 = arith.constant dense<0.000000e+00> : vector<8x128xf32>
    %326 = tpu.matmul %323, %325, %cst_122 {dimension_numbers = #tpu.dot_dimension_numbers<[1], [0], [0], [1], [0, 0, 1, 1], [], []>} : vector<8x128xbf16>, vector<128x128xbf16>, vector<8x128xf32> -> vector<8x128xf32>
    %327 = arith.addf %273, %326 : vector<8x128xf32>
    %c6_i32 = arith.constant 6 : i32
    %328 = arith.index_cast %c6_i32 : i32 to index
    %329 = memref.load %arg3[%328] : memref<8xf32, #tpu.memory_space<smem>>
    %330 = arith.truncf %320 : vector<8x128xf32> to vector<8x128xbf16>
    %c0_123 = arith.constant 0 : index
    %c0_124 = arith.constant 0 : index
    %331 = vector.load %arg4[%c0_123, %c0_124] : memref<128x128xbf16, #tpu.memory_space<vmem>>, vector<128x128xbf16>
    %cst_125 = arith.constant dense<0.000000e+00> : vector<8x128xf32>
    %332 = tpu.matmul %330, %331, %cst_125 {dimension_numbers = #tpu.dot_dimension_numbers<[1], [0], [0], [1], [0, 0, 1, 1], [], []>} : vector<8x128xbf16>, vector<128x128xbf16>, vector<8x128xf32> -> vector<8x128xf32>
    %333 = vector.broadcast %0 : vector<1x128xf32> to vector<8x128xf32>
    %334 = arith.addf %332, %333 : vector<8x128xf32>
    %335 = math.tanh %334 : vector<8x128xf32>
    %336 = vector.broadcast %329 : f32 to vector<8x128xf32>
    %337 = arith.mulf %336, %335 : vector<8x128xf32>
    %338 = arith.addf %320, %337 : vector<8x128xf32>
    %339 = arith.index_cast %c6_i32 : i32 to index
    %c0_126 = arith.constant 0 : index
    %c0_127 = arith.constant 0 : index
    %340 = vector.load %arg1[%339, %c0_126, %c0_127] : memref<8x8x16xf32, #tpu.memory_space<vmem>>, vector<1x8x16xf32>
    %341 = vector.shape_cast %340 : vector<1x8x16xf32> to vector<8x16xf32>
    %342 = arith.truncf %341 : vector<8x16xf32> to vector<8x16xbf16>
    %c0_128 = arith.constant 0 : index
    %c0_129 = arith.constant 0 : index
    %343 = vector.load %arg6[%c0_128, %c0_129] : memref<16x384xbf16, #tpu.memory_space<vmem>>, vector<16x384xbf16>
    %cst_130 = arith.constant dense<0.000000e+00> : vector<8x384xf32>
    %344 = tpu.matmul %342, %343, %cst_130 {dimension_numbers = #tpu.dot_dimension_numbers<[1], [0], [0], [1], [0, 0, 1, 1], [], []>} : vector<8x16xbf16>, vector<16x384xbf16>, vector<8x384xf32> -> vector<8x384xf32>
    %345 = vector.broadcast %1 : vector<1x384xf32> to vector<8x384xf32>
    %346 = arith.addf %344, %345 : vector<8x384xf32>
    %347 = arith.truncf %338 : vector<8x128xf32> to vector<8x128xbf16>
    %c0_131 = arith.constant 0 : index
    %c0_132 = arith.constant 0 : index
    %348 = vector.load %arg8[%c0_131, %c0_132] : memref<128x256xbf16, #tpu.memory_space<vmem>>, vector<128x256xbf16>
    %cst_133 = arith.constant dense<0.000000e+00> : vector<8x256xf32>
    %349 = tpu.matmul %347, %348, %cst_133 {dimension_numbers = #tpu.dot_dimension_numbers<[1], [0], [0], [1], [0, 0, 1, 1], [], []>} : vector<8x128xbf16>, vector<128x256xbf16>, vector<8x256xf32> -> vector<8x256xf32>
    %350 = vector.extract_strided_slice %346 {offsets = [0, 0], sizes = [8, 256], strides = [1, 1]} : vector<8x384xf32> to vector<8x256xf32>
    %351 = arith.addf %349, %350 : vector<8x256xf32>
    %352 = vector.extract_strided_slice %351 {offsets = [0, 0], sizes = [8, 128], strides = [1, 1]} : vector<8x256xf32> to vector<8x128xf32>
    %353 = arith.negf %352 : vector<8x128xf32>
    %354 = math.exp %353 : vector<8x128xf32>
    %cst_134 = arith.constant 1.000000e+00 : f32
    %355 = vector.broadcast %cst_134 : f32 to vector<8x128xf32>
    %356 = arith.addf %355, %354 : vector<8x128xf32>
    %357 = arith.divf %355, %356 : vector<8x128xf32>
    %358 = vector.extract_strided_slice %351 {offsets = [0, 128], sizes = [8, 128], strides = [1, 1]} : vector<8x256xf32> to vector<8x128xf32>
    %359 = arith.negf %358 : vector<8x128xf32>
    %360 = math.exp %359 : vector<8x128xf32>
    %cst_135 = arith.constant 1.000000e+00 : f32
    %361 = vector.broadcast %cst_135 : f32 to vector<8x128xf32>
    %362 = arith.addf %361, %360 : vector<8x128xf32>
    %363 = arith.divf %361, %362 : vector<8x128xf32>
    %364 = arith.mulf %338, %363 : vector<8x128xf32>
    %365 = arith.truncf %364 : vector<8x128xf32> to vector<8x128xbf16>
    %c0_136 = arith.constant 0 : index
    %c0_137 = arith.constant 0 : index
    %366 = vector.load %arg9[%c0_136, %c0_137] : memref<128x128xbf16, #tpu.memory_space<vmem>>, vector<128x128xbf16>
    %cst_138 = arith.constant dense<0.000000e+00> : vector<8x128xf32>
    %367 = tpu.matmul %365, %366, %cst_138 {dimension_numbers = #tpu.dot_dimension_numbers<[1], [0], [0], [1], [0, 0, 1, 1], [], []>} : vector<8x128xbf16>, vector<128x128xbf16>, vector<8x128xf32> -> vector<8x128xf32>
    %368 = vector.extract_strided_slice %346 {offsets = [0, 256], sizes = [8, 128], strides = [1, 1]} : vector<8x384xf32> to vector<8x128xf32>
    %369 = arith.addf %367, %368 : vector<8x128xf32>
    %cst_139 = arith.constant 1.000000e+00 : f32
    %370 = vector.broadcast %cst_139 : f32 to vector<8x128xf32>
    %371 = arith.subf %370, %357 : vector<8x128xf32>
    %372 = arith.mulf %371, %369 : vector<8x128xf32>
    %373 = arith.mulf %357, %338 : vector<8x128xf32>
    %374 = arith.addf %372, %373 : vector<8x128xf32>
    %c128_i32_140 = arith.constant 128 : i32
    %375 = arith.muli %c6_i32, %c128_i32_140 : i32
    %376 = tpu.assume_multiple %375, 128 : i32
    %377 = arith.truncf %374 : vector<8x128xf32> to vector<8x128xbf16>
    %378 = arith.index_cast %376 : i32 to index
    %c0_141 = arith.constant 0 : index
    %379 = vector.load %arg10[%378, %c0_141] : memref<1024x128xbf16, #tpu.memory_space<vmem>>, vector<128x128xbf16>
    %cst_142 = arith.constant dense<0.000000e+00> : vector<8x128xf32>
    %380 = tpu.matmul %377, %379, %cst_142 {dimension_numbers = #tpu.dot_dimension_numbers<[1], [0], [0], [1], [0, 0, 1, 1], [], []>} : vector<8x128xbf16>, vector<128x128xbf16>, vector<8x128xf32> -> vector<8x128xf32>
    %381 = arith.addf %327, %380 : vector<8x128xf32>
    %c7_i32 = arith.constant 7 : i32
    %382 = arith.index_cast %c7_i32 : i32 to index
    %383 = memref.load %arg3[%382] : memref<8xf32, #tpu.memory_space<smem>>
    %384 = arith.truncf %374 : vector<8x128xf32> to vector<8x128xbf16>
    %c0_143 = arith.constant 0 : index
    %c0_144 = arith.constant 0 : index
    %385 = vector.load %arg4[%c0_143, %c0_144] : memref<128x128xbf16, #tpu.memory_space<vmem>>, vector<128x128xbf16>
    %cst_145 = arith.constant dense<0.000000e+00> : vector<8x128xf32>
    %386 = tpu.matmul %384, %385, %cst_145 {dimension_numbers = #tpu.dot_dimension_numbers<[1], [0], [0], [1], [0, 0, 1, 1], [], []>} : vector<8x128xbf16>, vector<128x128xbf16>, vector<8x128xf32> -> vector<8x128xf32>
    %387 = vector.broadcast %0 : vector<1x128xf32> to vector<8x128xf32>
    %388 = arith.addf %386, %387 : vector<8x128xf32>
    %389 = math.tanh %388 : vector<8x128xf32>
    %390 = vector.broadcast %383 : f32 to vector<8x128xf32>
    %391 = arith.mulf %390, %389 : vector<8x128xf32>
    %392 = arith.addf %374, %391 : vector<8x128xf32>
    %393 = arith.index_cast %c7_i32 : i32 to index
    %c0_146 = arith.constant 0 : index
    %c0_147 = arith.constant 0 : index
    %394 = vector.load %arg1[%393, %c0_146, %c0_147] : memref<8x8x16xf32, #tpu.memory_space<vmem>>, vector<1x8x16xf32>
    %395 = vector.shape_cast %394 : vector<1x8x16xf32> to vector<8x16xf32>
    %396 = arith.truncf %395 : vector<8x16xf32> to vector<8x16xbf16>
    %c0_148 = arith.constant 0 : index
    %c0_149 = arith.constant 0 : index
    %397 = vector.load %arg6[%c0_148, %c0_149] : memref<16x384xbf16, #tpu.memory_space<vmem>>, vector<16x384xbf16>
    %cst_150 = arith.constant dense<0.000000e+00> : vector<8x384xf32>
    %398 = tpu.matmul %396, %397, %cst_150 {dimension_numbers = #tpu.dot_dimension_numbers<[1], [0], [0], [1], [0, 0, 1, 1], [], []>} : vector<8x16xbf16>, vector<16x384xbf16>, vector<8x384xf32> -> vector<8x384xf32>
    %399 = vector.broadcast %1 : vector<1x384xf32> to vector<8x384xf32>
    %400 = arith.addf %398, %399 : vector<8x384xf32>
    %401 = arith.truncf %392 : vector<8x128xf32> to vector<8x128xbf16>
    %c0_151 = arith.constant 0 : index
    %c0_152 = arith.constant 0 : index
    %402 = vector.load %arg8[%c0_151, %c0_152] : memref<128x256xbf16, #tpu.memory_space<vmem>>, vector<128x256xbf16>
    %cst_153 = arith.constant dense<0.000000e+00> : vector<8x256xf32>
    %403 = tpu.matmul %401, %402, %cst_153 {dimension_numbers = #tpu.dot_dimension_numbers<[1], [0], [0], [1], [0, 0, 1, 1], [], []>} : vector<8x128xbf16>, vector<128x256xbf16>, vector<8x256xf32> -> vector<8x256xf32>
    %404 = vector.extract_strided_slice %400 {offsets = [0, 0], sizes = [8, 256], strides = [1, 1]} : vector<8x384xf32> to vector<8x256xf32>
    %405 = arith.addf %403, %404 : vector<8x256xf32>
    %406 = vector.extract_strided_slice %405 {offsets = [0, 0], sizes = [8, 128], strides = [1, 1]} : vector<8x256xf32> to vector<8x128xf32>
    %407 = arith.negf %406 : vector<8x128xf32>
    %408 = math.exp %407 : vector<8x128xf32>
    %cst_154 = arith.constant 1.000000e+00 : f32
    %409 = vector.broadcast %cst_154 : f32 to vector<8x128xf32>
    %410 = arith.addf %409, %408 : vector<8x128xf32>
    %411 = arith.divf %409, %410 : vector<8x128xf32>
    %412 = vector.extract_strided_slice %405 {offsets = [0, 128], sizes = [8, 128], strides = [1, 1]} : vector<8x256xf32> to vector<8x128xf32>
    %413 = arith.negf %412 : vector<8x128xf32>
    %414 = math.exp %413 : vector<8x128xf32>
    %cst_155 = arith.constant 1.000000e+00 : f32
    %415 = vector.broadcast %cst_155 : f32 to vector<8x128xf32>
    %416 = arith.addf %415, %414 : vector<8x128xf32>
    %417 = arith.divf %415, %416 : vector<8x128xf32>
    %418 = arith.mulf %392, %417 : vector<8x128xf32>
    %419 = arith.truncf %418 : vector<8x128xf32> to vector<8x128xbf16>
    %c0_156 = arith.constant 0 : index
    %c0_157 = arith.constant 0 : index
    %420 = vector.load %arg9[%c0_156, %c0_157] : memref<128x128xbf16, #tpu.memory_space<vmem>>, vector<128x128xbf16>
    %cst_158 = arith.constant dense<0.000000e+00> : vector<8x128xf32>
    %421 = tpu.matmul %419, %420, %cst_158 {dimension_numbers = #tpu.dot_dimension_numbers<[1], [0], [0], [1], [0, 0, 1, 1], [], []>} : vector<8x128xbf16>, vector<128x128xbf16>, vector<8x128xf32> -> vector<8x128xf32>
    %422 = vector.extract_strided_slice %400 {offsets = [0, 256], sizes = [8, 128], strides = [1, 1]} : vector<8x384xf32> to vector<8x128xf32>
    %423 = arith.addf %421, %422 : vector<8x128xf32>
    %cst_159 = arith.constant 1.000000e+00 : f32
    %424 = vector.broadcast %cst_159 : f32 to vector<8x128xf32>
    %425 = arith.subf %424, %411 : vector<8x128xf32>
    %426 = arith.mulf %425, %423 : vector<8x128xf32>
    %427 = arith.mulf %411, %392 : vector<8x128xf32>
    %428 = arith.addf %426, %427 : vector<8x128xf32>
    %c128_i32_160 = arith.constant 128 : i32
    %429 = arith.muli %c7_i32, %c128_i32_160 : i32
    %430 = tpu.assume_multiple %429, 128 : i32
    %431 = arith.truncf %428 : vector<8x128xf32> to vector<8x128xbf16>
    %432 = arith.index_cast %430 : i32 to index
    %c0_161 = arith.constant 0 : index
    %433 = vector.load %arg10[%432, %c0_161] : memref<1024x128xbf16, #tpu.memory_space<vmem>>, vector<128x128xbf16>
    %cst_162 = arith.constant dense<0.000000e+00> : vector<8x128xf32>
    %434 = tpu.matmul %431, %433, %cst_162 {dimension_numbers = #tpu.dot_dimension_numbers<[1], [0], [0], [1], [0, 0, 1, 1], [], []>} : vector<8x128xbf16>, vector<128x128xbf16>, vector<8x128xf32> -> vector<8x128xf32>
    %435 = arith.addf %381, %434 : vector<8x128xf32>
    %c8_i32 = arith.constant 8 : i32
    %c0_163 = arith.constant 0 : index
    %c0_164 = arith.constant 0 : index
    %436 = vector.load %arg2[%c0_163, %c0_164] : memref<8x4xf32, #tpu.memory_space<vmem>>, vector<8x4xf32>
    %437 = arith.truncf %436 : vector<8x4xf32> to vector<8x4xbf16>
    %c0_165 = arith.constant 0 : index
    %c0_166 = arith.constant 0 : index
    %438 = vector.load %arg11[%c0_165, %c0_166] : memref<4x128xbf16, #tpu.memory_space<vmem>>, vector<4x128xbf16>
    %cst_167 = arith.constant dense<0.000000e+00> : vector<8x128xf32>
    %439 = tpu.matmul %437, %438, %cst_167 {dimension_numbers = #tpu.dot_dimension_numbers<[1], [0], [0], [1], [0, 0, 1, 1], [], []>} : vector<8x4xbf16>, vector<4x128xbf16>, vector<8x128xf32> -> vector<8x128xf32>
    %440 = arith.addf %435, %439 : vector<8x128xf32>
    %c0_168 = arith.constant 0 : index
    %c0_169 = arith.constant 0 : index
    %441 = vector.load %arg12[%c0_168, %c0_169] : memref<1x128xf32, #tpu.memory_space<vmem>>, vector<1x128xf32>
    %442 = vector.broadcast %441 : vector<1x128xf32> to vector<8x128xf32>
    %443 = arith.addf %440, %442 : vector<8x128xf32>
    %c0_170 = arith.constant 0 : index
    %c0_171 = arith.constant 0 : index
    %444 = vector.load %arg13[%c0_170, %c0_171] : memref<8x128xf32, #tpu.memory_space<vmem>>, vector<8x128xf32>
    tpu.vector_store %arg13[%c0_170, %c0_171], %443 {strides = array<i32>} : memref<8x128xf32, #tpu.memory_space<vmem>>, vector<8x128xf32>,
    return
  }
  func.func @transform_0(%arg0: i32) -> (i32, i32, i32) {
    %c0_i32 = arith.constant 0 : i32
    %c0_i32_0 = arith.constant 0 : i32
    %c0_i32_1 = arith.constant 0 : i32
    return %c0_i32, %arg0, %c0_i32_0 : i32, i32, i32
  }
  func.func @transform_1(%arg0: i32) -> (i32, i32) {
    %c0_i32 = arith.constant 0 : i32
    %c0_i32_0 = arith.constant 0 : i32
    return %arg0, %c0_i32 : i32, i32
  }
  func.func @transform_2(%arg0: i32) -> i32 {
    %c0_i32 = arith.constant 0 : i32
    %c0_i32_0 = arith.constant 0 : i32
    return %c0_i32 : i32
  }
  func.func @transform_3(%arg0: i32) -> (i32, i32) {
    %c0_i32 = arith.constant 0 : i32
    %c0_i32_0 = arith.constant 0 : i32
    %c0_i32_1 = arith.constant 0 : i32
    return %c0_i32, %c0_i32_0 : i32, i32
  }
  func.func @transform_4(%arg0: i32) -> (i32, i32) {
    %c0_i32 = arith.constant 0 : i32
    %c0_i32_0 = arith.constant 0 : i32
    %c0_i32_1 = arith.constant 0 : i32
    return %c0_i32, %c0_i32_0 : i32, i32
  }
  func.func @transform_5(%arg0: i32) -> (i32, i32) {
    %c0_i32 = arith.constant 0 : i32
    %c0_i32_0 = arith.constant 0 : i32
    %c0_i32_1 = arith.constant 0 : i32
    return %c0_i32, %c0_i32_0 : i32, i32
  }
  func.func @transform_6(%arg0: i32) -> (i32, i32) {
    %c0_i32 = arith.constant 0 : i32
    %c0_i32_0 = arith.constant 0 : i32
    %c0_i32_1 = arith.constant 0 : i32
    return %c0_i32, %c0_i32_0 : i32, i32
  }
  func.func @transform_7(%arg0: i32) -> (i32, i32) {
    %c0_i32 = arith.constant 0 : i32
    %c0_i32_0 = arith.constant 0 : i32
    %c0_i32_1 = arith.constant 0 : i32
    return %c0_i32, %c0_i32_0 : i32, i32
  }
  func.func @transform_8(%arg0: i32) -> (i32, i32) {
    %c0_i32 = arith.constant 0 : i32
    %c0_i32_0 = arith.constant 0 : i32
    %c0_i32_1 = arith.constant 0 : i32
    return %c0_i32, %c0_i32_0 : i32, i32
  }
  func.func @transform_9(%arg0: i32) -> (i32, i32) {
    %c0_i32 = arith.constant 0 : i32
    %c0_i32_0 = arith.constant 0 : i32
    %c0_i32_1 = arith.constant 0 : i32
    return %c0_i32, %c0_i32_0 : i32, i32
  }
  func.func @transform_10(%arg0: i32) -> (i32, i32) {
    %c0_i32 = arith.constant 0 : i32
    %c0_i32_0 = arith.constant 0 : i32
    %c0_i32_1 = arith.constant 0 : i32
    return %c0_i32, %c0_i32_0 : i32, i32
  }
  func.func @transform_11(%arg0: i32) -> (i32, i32) {
    %c0_i32 = arith.constant 0 : i32
    %c0_i32_0 = arith.constant 0 : i32
    %c0_i32_1 = arith.constant 0 : i32
    return %c0_i32, %c0_i32_0 : i32, i32
  }
  func.func @transform_12(%arg0: i32) -> (i32, i32) {
    %c0_i32 = arith.constant 0 : i32
    %c0_i32_0 = arith.constant 0 : i32
    return %arg0, %c0_i32 : i32, i32
  }
}

</mosaic_0001>

<llo_original>
// kernel: tpu_custom_call.1
$region0: #{tpu_custom_call.1}
  #allocation0 [shape = 'u32[]', space=smem, size = 0x4, offset = 0x4, fixed_abs, tag = 'smem constant byte address 0x4 - core index']
  #allocation1 [shape = 'u32[144,128]{1,0:T(1,128)}', space=vmem, size = 0x12000, scoped, tag = 'internal scratch']
  %s0 = inlined_call_operand.hbm [shape: f32[8,8,16], index: 0, kind: input, shape index: {}]
  %s1 = inlined_call_operand.vmem [shape: f32[8,4], index: 1, kind: input, shape index: {}]
  %s2 = inlined_call_operand.vmem [shape: f32[8], index: 2, kind: input, shape index: {}]
  %s3 = inlined_call_operand.hbm [shape: bf16[128,128], index: 3, kind: input, shape index: {}]
  %s4 = inlined_call_operand.hbm [shape: f32[1,128], index: 4, kind: input, shape index: {}]
  %s5 = inlined_call_operand.vmem [shape: bf16[16,384], index: 5, kind: input, shape index: {}]
  %s6 = inlined_call_operand.vmem [shape: f32[1,384], index: 6, kind: input, shape index: {}]
  %s7 = inlined_call_operand.hbm [shape: bf16[128,256], index: 7, kind: input, shape index: {}]
  %s8 = inlined_call_operand.hbm [shape: bf16[128,128], index: 8, kind: input, shape index: {}]
  %s9 = inlined_call_operand.hbm [shape: bf16[1024,128], index: 9, kind: input, shape index: {}]
  %s10 = inlined_call_operand.vmem [shape: bf16[4,128], index: 10, kind: input, shape index: {}]
  %s11 = inlined_call_operand.vmem [shape: f32[1,128], index: 11, kind: input, shape index: {}]
  %s12 = inlined_call_operand.hbm [shape: f32[8,128], index: 12, kind: output, shape index: {}]
  %s13 = sld [smem:[#allocation0]]
  $region86: #{tpu_custom_call.1} parent=0
    _
  %s15 = ssub.s32 1, %s13
  %s16 = scalar_select 0, %s15, %s13
  $region1: #{tpu_custom_call.1} parent=0
    #allocation2 [shape = 'u8[32768]{0}', space=vmem, size = 0x8000, scoped, tag = 'input window, operand 0, single buffered']
    #allocation3 [shape = 's32[1]{0}', space=sflag, size = 0x4, scoped, tag = 'scoped memory for tpu_custom_call.1']
    #allocation4 [shape = 's32[1]{0}', space=sflag, size = 0x4, scoped, tag = 'scoped memory for tpu_custom_call.1']
    #allocation5 [shape = 's32[1]{0}', space=sflag, size = 0x4, scoped, tag = 'scoped memory for tpu_custom_call.1']
    #allocation6 [shape = 'u8[512]{0}', space=smem, size = 0x200, scoped, tag = 'input window, operand 2, single buffered']
    #allocation7 [shape = 'u8[32768]{0}', space=vmem, size = 0x8000, scoped, tag = 'input window, operand 3, single buffered']
    #allocation8 [shape = 's32[1]{0}', space=sflag, size = 0x4, scoped, tag = 'scoped memory for tpu_custom_call.1']
    #allocation9 [shape = 'u8[512]{0}', space=vmem, size = 0x400, scoped, tag = 'input window, operand 4, single buffered']
    #allocation10 [shape = 'u8[65536]{0}', space=vmem, size = 0x10000, scoped, tag = 'input window, operand 7, single buffered']
    #allocation11 [shape = 's32[1]{0}', space=sflag, size = 0x4, scoped, tag = 'scoped memory for tpu_custom_call.1']
    #allocation12 [shape = 'u8[32768]{0}', space=vmem, size = 0x8000, scoped, tag = 'input window, operand 8, single buffered']
    #allocation13 [shape = 'u8[262144]{0}', space=vmem, size = 0x40000, scoped, tag = 'input window, operand 9, single buffered']
    #allocation14 [shape = 's32[1]{0}', space=sflag, size = 0x4, scoped, tag = 'scoped memory for tpu_custom_call.1']
    #allocation15 [shape = 'u8[4096]{0}', space=vmem, size = 0x1000, scoped, tag = 'output window, operand 0, single buffered']
    %17 = vsyncpa [#allocation3], 0
    %18 = vsyncpa [#allocation5], 0
    %19 = vsyncpa [#allocation8], 0
    %20 = vsyncpa [#allocation11], 0
    %21 = vsyncpa [#allocation14], 0
    %22 = vsyncpa [#allocation4], 0
    // Predicated region
    $region2: #{tpu_custom_call.1} parent=1 // pred_check
      _
    $region3: #{tpu_custom_call.1} parent=1 // pred_check_branch
      %24 = sbr.rel (0) target = $region5
    $region4: #{tpu_custom_call.1} parent=1 // pred_region
      %s26 = ssub.s32 1024, 1024
      %27 = vsyncadd [#allocation3], %s26
      %s28 = sshll.u32 [#allocation2], 4
      %s29 = int_to_ptr.vmem [resolvable:$true] %s28
      %34 = dma.hbm_to_vmem [thread:$0]  %s0, 1024, %s29, [#allocation3], 128, 128, 8
    $region5: #{tpu_custom_call.1} parent=1 // pred_fallthru
      _
    // Predicated region
    $region6: #{tpu_custom_call.1} parent=1 // pred_check
      _
    $region7: #{tpu_custom_call.1} parent=1 // pred_check_branch
      %36 = sbr.rel (0) target = $region9
    $region8: #{tpu_custom_call.1} parent=1 // pred_region
      _
    $region9: #{tpu_custom_call.1} parent=1 // pred_fallthru
      _
    // Predicated region
    $region10: #{tpu_custom_call.1} parent=1 // pred_check
      _
    $region11: #{tpu_custom_call.1} parent=1 // pred_check_branch
      %38 = sbr.rel (0) target = $region13
    $region12: #{tpu_custom_call.1} parent=1 // pred_region
      %s40 = ssub.s32 16, 16
      %41 = vsyncadd [#allocation5], %s40
      %s43 = sshll.u32 %s2, 4
      %s44 = int_to_ptr.vmem [resolvable:$true] %s43
      %46 = dma.vmem_to_smem %s44, 16, [#allocation6], [#allocation5]
    $region13: #{tpu_custom_call.1} parent=1 // pred_fallthru
      _
    // Predicated region
    $region14: #{tpu_custom_call.1} parent=1 // pred_check
      _
    $region15: #{tpu_custom_call.1} parent=1 // pred_check_branch
      %48 = sbr.rel (0) target = $region17
    $region16: #{tpu_custom_call.1} parent=1 // pred_region
      %s50 = ssub.s32 1024, 1024
      %51 = vsyncadd [#allocation8], %s50
      %s52 = sshll.u32 [#allocation7], 4
      %s53 = int_to_ptr.vmem [resolvable:$true] %s52
      %58 = dma.hbm_to_vmem [thread:$0]  %s3, 1024, %s53, [#allocation8], 64, 64, 4
    $region17: #{tpu_custom_call.1} parent=1 // pred_fallthru
      _
    // Predicated region
    $region18: #{tpu_custom_call.1} parent=1 // pred_check
      _
    $region19: #{tpu_custom_call.1} parent=1 // pred_check_branch
      %60 = sbr.rel (0) target = $region21
    $region20: #{tpu_custom_call.1} parent=1 // pred_region
      %s62 = ssub.s32 16, 16
      %63 = vsyncadd [#allocation8], %s62
      %s65 = sshll.u32 [#allocation9], 4
      %s66 = int_to_ptr.vmem [resolvable:$true] %s65
      %68 = dma.hbm_to_vmem [thread:$0]  %s4, 16, %s66, [#allocation8]
    $region21: #{tpu_custom_call.1} parent=1 // pred_fallthru
      _
    // Predicated region
    $region22: #{tpu_custom_call.1} parent=1 // pred_check
      _
    $region23: #{tpu_custom_call.1} parent=1 // pred_check_branch
      %70 = sbr.rel (0) target = $region25
    $region24: #{tpu_custom_call.1} parent=1 // pred_region
      _
    $region25: #{tpu_custom_call.1} parent=1 // pred_fallthru
      _
    // Predicated region
    $region26: #{tpu_custom_call.1} parent=1 // pred_check
      _
    $region27: #{tpu_custom_call.1} parent=1 // pred_check_branch
      %72 = sbr.rel (0) target = $region29
    $region28: #{tpu_custom_call.1} parent=1 // pred_region
      _
    $region29: #{tpu_custom_call.1} parent=1 // pred_fallthru
      _
    // Predicated region
    $region30: #{tpu_custom_call.1} parent=1 // pred_check
      _
    $region31: #{tpu_custom_call.1} parent=1 // pred_check_branch
      %74 = sbr.rel (0) target = $region33
    $region32: #{tpu_custom_call.1} parent=1 // pred_region
      %s76 = ssub.s32 2048, 2048
      %77 = vsyncadd [#allocation11], %s76
      %s78 = sshll.u32 [#allocation10], 4
      %s79 = int_to_ptr.vmem [resolvable:$true] %s78
      %84 = dma.hbm_to_vmem [thread:$0]  %s7, 2048, %s79, [#allocation11], 128, 128, 8
    $region33: #{tpu_custom_call.1} parent=1 // pred_fallthru
      _
    // Predicated region
    $region34: #{tpu_custom_call.1} parent=1 // pred_check
      _
    $region35: #{tpu_custom_call.1} parent=1 // pred_check_branch
      %86 = sbr.rel (0) target = $region37
    $region36: #{tpu_custom_call.1} parent=1 // pred_region
      %s88 = ssub.s32 1024, 1024
      %89 = vsyncadd [#allocation11], %s88
      %s90 = sshll.u32 [#allocation12], 4
      %s91 = int_to_ptr.vmem [resolvable:$true] %s90
      %96 = dma.hbm_to_vmem [thread:$0]  %s8, 1024, %s91, [#allocation11], 64, 64, 4
    $region37: #{tpu_custom_call.1} parent=1 // pred_fallthru
      _
    // Predicated region
    $region38: #{tpu_custom_call.1} parent=1 // pred_check
      _
    $region39: #{tpu_custom_call.1} parent=1 // pred_check_branch
      %98 = sbr.rel (0) target = $region41
    $region40: #{tpu_custom_call.1} parent=1 // pred_region
      %s100 = ssub.s32 8192, 8192
      %101 = vsyncadd [#allocation14], %s100
      %s102 = sshll.u32 [#allocation13], 4
      %s103 = int_to_ptr.vmem [resolvable:$true] %s102
      %108 = dma.hbm_to_vmem [thread:$0]  %s9, 8192, %s103, [#allocation14], 64, 64, 4
    $region41: #{tpu_custom_call.1} parent=1 // pred_fallthru
      _
    // Predicated region
    $region42: #{tpu_custom_call.1} parent=1 // pred_check
      _
    $region43: #{tpu_custom_call.1} parent=1 // pred_check_branch
      %110 = sbr.rel (0) target = $region45
    $region44: #{tpu_custom_call.1} parent=1 // pred_region
      _
    $region45: #{tpu_custom_call.1} parent=1 // pred_fallthru
      _
    // Predicated region
    $region46: #{tpu_custom_call.1} parent=1 // pred_check
      _
    $region47: #{tpu_custom_call.1} parent=1 // pred_check_branch
      %112 = sbr.rel (0) target = $region49
    $region48: #{tpu_custom_call.1} parent=1 // pred_region
      _
    $region49: #{tpu_custom_call.1} parent=1 // pred_fallthru
      _
    // Predicated region
    $region50: #{tpu_custom_call.1} parent=1 // pred_check
      _
    $region51: #{tpu_custom_call.1} parent=1 // pred_check_branch
      %114 = sbr.rel (0) target = $region53
    $region52: #{tpu_custom_call.1} parent=1 // pred_region
      %115 = dma.done [#allocation3], 1024
    $region53: #{tpu_custom_call.1} parent=1 // pred_fallthru
      _
    // Predicated region
    $region54: #{tpu_custom_call.1} parent=1 // pred_check
      _
    $region55: #{tpu_custom_call.1} parent=1 // pred_check_branch
      %117 = sbr.rel (0) target = $region57
    $region56: #{tpu_custom_call.1} parent=1 // pred_region
      %118 = dma.done [#allocation5], 16
    $region57: #{tpu_custom_call.1} parent=1 // pred_fallthru
      _
    // Predicated region
    $region58: #{tpu_custom_call.1} parent=1 // pred_check
      _
    $region59: #{tpu_custom_call.1} parent=1 // pred_check_branch
      %120 = sbr.rel (0) target = $region61
    $region60: #{tpu_custom_call.1} parent=1 // pred_region
      %121 = dma.done [#allocation8], 1024
    $region61: #{tpu_custom_call.1} parent=1 // pred_fallthru
      _
    // Predicated region
    $region62: #{tpu_custom_call.1} parent=1 // pred_check
      _
    $region63: #{tpu_custom_call.1} parent=1 // pred_check_branch
      %123 = sbr.rel (0) target = $region65
    $region64: #{tpu_custom_call.1} parent=1 // pred_region
      %124 = dma.done [#allocation8], 16
    $region65: #{tpu_custom_call.1} parent=1 // pred_fallthru
      _
    // Predicated region
    $region66: #{tpu_custom_call.1} parent=1 // pred_check
      _
    $region67: #{tpu_custom_call.1} parent=1 // pred_check_branch
      %126 = sbr.rel (0) target = $region69
    $region68: #{tpu_custom_call.1} parent=1 // pred_region
      %127 = dma.done [#allocation11], 2048
    $region69: #{tpu_custom_call.1} parent=1 // pred_fallthru
      _
    // Predicated region
    $region70: #{tpu_custom_call.1} parent=1 // pred_check
      _
    $region71: #{tpu_custom_call.1} parent=1 // pred_check_branch
      %129 = sbr.rel (0) target = $region73
    $region72: #{tpu_custom_call.1} parent=1 // pred_region
      %130 = dma.done [#allocation11], 1024
    $region73: #{tpu_custom_call.1} parent=1 // pred_fallthru
      _
    // Predicated region
    $region74: #{tpu_custom_call.1} parent=1 // pred_check
      _
    $region75: #{tpu_custom_call.1} parent=1 // pred_check_branch
      %132 = sbr.rel (0) target = $region77
    $region76: #{tpu_custom_call.1} parent=1 // pred_region
      %133 = dma.done [#allocation14], 8192
    $region77: #{tpu_custom_call.1} parent=1 // pred_fallthru
      _
    %134 = sfence
    %v136 = vld [vmem:[#allocation9] sm:$0x1]
    %v137 = vld [vmem:[%s6] sm:$0x7]
    %s138 = sld [smem:[#allocation6]]
    %v139 = vld [vmem:[#allocation7] sm:$0xf]
    %v140 = vld [vmem:[#allocation7 + $0x4] sm:$0xf]
    %v141 = vld [vmem:[#allocation7 + $0x8] sm:$0xf]
    %v142 = vld [vmem:[#allocation7 + $0xc] sm:$0xf]
    %v143 = vld [vmem:[#allocation7 + $0x10] sm:$0xf]
    %v144 = vld [vmem:[#allocation7 + $0x14] sm:$0xf]
    %v145 = vld [vmem:[#allocation7 + $0x18] sm:$0xf]
    %v146 = vld [vmem:[#allocation7 + $0x1c] sm:$0xf]
    %v147 = vld [vmem:[#allocation7 + $0x20] sm:$0xf]
    %v148 = vld [vmem:[#allocation7 + $0x24] sm:$0xf]
    %v149 = vld [vmem:[#allocation7 + $0x28] sm:$0xf]
    %v150 = vld [vmem:[#allocation7 + $0x2c] sm:$0xf]
    %v151 = vld [vmem:[#allocation7 + $0x30] sm:$0xf]
    %v152 = vld [vmem:[#allocation7 + $0x34] sm:$0xf]
    %v153 = vld [vmem:[#allocation7 + $0x38] sm:$0xf]
    %v154 = vld [vmem:[#allocation7 + $0x3c] sm:$0xf]
    %v156 = vlaneseq
    %v157 = vshrl.u32 %v156, 7
    %v158 = vsub.s32 0, %v157
    %v159 = vrot.slane %v136, %v158
    %v177 = vunpack.c.l.b16 %v139
    %v178 = vunpack.c.l.b16 %v140
    %v179 = vunpack.c.l.b16 %v141
    %v180 = vunpack.c.l.b16 %v142
    %v181 = vunpack.c.l.b16 %v143
    %v182 = vunpack.c.l.b16 %v144
    %v183 = vunpack.c.l.b16 %v145
    %v184 = vunpack.c.l.b16 %v146
    %v185 = vunpack.c.l.b16 %v147
    %v186 = vunpack.c.l.b16 %v148
    %v187 = vunpack.c.l.b16 %v149
    %v188 = vunpack.c.l.b16 %v150
    %v189 = vunpack.c.l.b16 %v151
    %v190 = vunpack.c.l.b16 %v152
    %v191 = vunpack.c.l.b16 %v153
    %v192 = vunpack.c.l.b16 %v154
    %v193 = vpack.c.b16 %v178, %v177
    %v194 = vpack.c.b16 %v180, %v179
    %v195 = vpack.c.b16 %v182, %v181
    %v196 = vpack.c.b16 %v184, %v183
    %v197 = vpack.c.b16 %v186, %v185
    %v198 = vpack.c.b16 %v188, %v187
    %v199 = vpack.c.b16 %v190, %v189
    %v200 = vpack.c.b16 %v192, %v191
    %209 = vmatprep.subr.bf16.mxu0 0
    %210 = vmatpush1.bf16.msra.mxu0 %v193
    %211 = vmatprep.subr.bf16.mxu0 0
    %212 = vmatpush1.bf16.msra.mxu0 %v194
    %213 = vmatprep.subr.bf16.mxu0 0
    %214 = vmatpush1.bf16.msra.mxu0 %v195
    %215 = vmatprep.subr.bf16.mxu0 0
    %216 = vmatpush1.bf16.msra.mxu0 %v196
    %217 = vmatprep.subr.bf16.mxu0 0
    %218 = vmatpush1.bf16.msra.mxu0 %v197
    %219 = vmatprep.subr.bf16.mxu0 0
    %220 = vmatpush1.bf16.msra.mxu0 %v198
    %221 = vmatprep.subr.bf16.mxu0 0
    %222 = vmatpush1.bf16.msra.mxu0 %v199
    %223 = vmatprep.subr.bf16.mxu0 0
    %224 = vmatpush1.bf16.msra.mxu0 %v200
    %225 = vmatprep.subr.bf16.mxu0 0
    %226 = vmatpush1.bf16.msra.mxu0 0
    %227 = vmatprep.subr.bf16.mxu0 0
    %228 = vmatpush1.bf16.msra.mxu0 0
    %229 = vmatprep.subr.bf16.mxu0 0
    %230 = vmatpush1.bf16.msra.mxu0 0
    %231 = vmatprep.subr.bf16.mxu0 0
    %232 = vmatpush1.bf16.msra.mxu0 0
    %233 = vmatprep.subr.bf16.mxu0 0
    %234 = vmatpush1.bf16.msra.mxu0 0
    %235 = vmatprep.subr.bf16.mxu0 0
    %236 = vmatpush1.bf16.msra.mxu0 0
    %237 = vmatprep.subr.bf16.mxu0 0
    %238 = vmatpush1.bf16.msra.mxu0 0
    %239 = vmatprep.subr.bf16.mxu0 0
    %240 = vmatpush1.bf16.msra.mxu0 0
    %241 = vmatprep.mubr.bf16.mxu0 0
    %242 = vmatmul.mubr.bf16.gmra.mrb[0].mxu0 0
    %v243 = vpop.f32.mrb[0].mxu0
    %v244 = vadd.f32 %v159, %v243
    %v245 = vpop.f32.mrb[0].mxu0
    %v246 = vpop.f32.mrb[0].mxu0
    %v247 = vpop.f32.mrb[0].mxu0
    %248 = vdwg.mxu0
    %v249 = vtanh.pop %v244
    %v250 = vstv %s138
    %v251 = vmul.f32 %v250, %v249
    %v252 = vadd.f32 %v251, 0.0
    %v253 = vld [vmem:[#allocation2] sm:$0xff]
    %v254 = vpack.c.bf16 %v253, %v253
    %v255 = vld [vmem:[%s5] sm:$0xff]
    %v256 = vld [vmem:[%s5 + $0x8] sm:$0xf]
    %v257 = vld [vmem:[%s5 + $0xc] sm:$0xff]
    %v258 = vld [vmem:[%s5 + $0x14] sm:$0xf]
    %v260 = vlaneseq
    %v261 = vshrl.u32 %v260, 7
    %v262 = vsub.s32 0, %v261
    %v263 = vrot.slane %v137, %v262
    %v264 = vlaneseq
    %v265 = vshrl.u32 %v264, 7
    %v266 = vsub.s32 1, %v265
    %v267 = vrot.slane %v137, %v266
    %v268 = vlaneseq
    %v269 = vshrl.u32 %v268, 7
    %v270 = vsub.s32 2, %v269
    %v271 = vrot.slane %v137, %v270
    %v279 = vunpack.c.l.b16 %v255
    %v280 = vunpack.c.h.b16 %v255
    %v281 = vunpack.c.l.b16 %v256
    %v282 = vunpack.c.l.b16 %v257
    %v283 = vunpack.c.h.b16 %v257
    %v284 = vunpack.c.l.b16 %v258
    %v285 = vpack.c.b16 %v282, %v279
    %v286 = vpack.c.b16 %v283, %v280
    %v287 = vpack.c.b16 %v284, %v281
    %vm291 = vcmask 130048
    %v293 = vsel %vm291, %v254, 0
    %295 = vmatprep.subr.bf16.mxu0 %v286
    %296 = vmatpush1.bf16.msra.mxu0 %v285
    %297 = vmatprep.subr.bf16.mxu0 0
    %298 = vmatpush1.bf16.msra.mxu0 0
    %299 = vmatprep.subr.bf16.mxu0 0
    %300 = vmatpush1.bf16.msra.mxu0 0
    %301 = vmatprep.subr.bf16.mxu0 0
    %302 = vmatpush1.bf16.msra.mxu0 0
    %303 = vmatprep.subr.bf16.mxu0 0
    %304 = vmatpush1.bf16.msra.mxu0 0
    %305 = vmatprep.subr.bf16.mxu0 0
    %306 = vmatpush1.bf16.msra.mxu0 0
    %307 = vmatprep.subr.bf16.mxu0 0
    %308 = vmatpush1.bf16.msra.mxu0 0
    %309 = vmatprep.subr.bf16.mxu0 0
    %310 = vmatpush1.bf16.msra.mxu0 0
    %311 = vmatprep.subr.bf16.mxu0 0
    %312 = vmatpush1.bf16.msra.mxu0 0
    %313 = vmatprep.subr.bf16.mxu0 0
    %314 = vmatpush1.bf16.msra.mxu0 0
    %315 = vmatprep.subr.bf16.mxu0 0
    %316 = vmatpush1.bf16.msra.mxu0 0
    %317 = vmatprep.subr.bf16.mxu0 0
    %318 = vmatpush1.bf16.msra.mxu0 0
    %319 = vmatprep.subr.bf16.mxu0 0
    %320 = vmatpush1.bf16.msra.mxu0 0
    %321 = vmatprep.subr.bf16.mxu0 0
    %322 = vmatpush1.bf16.msra.mxu0 0
    %323 = vmatprep.subr.bf16.mxu0 0
    %324 = vmatpush1.bf16.msra.mxu0 0
    %325 = vmatprep.subr.bf16.mxu0 0
    %326 = vmatpush1.bf16.msra.mxu0 0
    %327 = vmatprep.mubr.bf16.mxu0 0
    %328 = vmatmul.mubr.bf16.gmra.mrb[0].mxu0 %v293
    %v329 = vpop.f32.mrb[0].mxu0
    %v330 = vadd.f32 %v263, %v329
    %v331 = vpop.f32.mrb[0].mxu0
    %v332 = vadd.f32 %v267, %v331
    %v333 = vpop.f32.mrb[0].mxu0
    %v334 = vpop.f32.mrb[0].mxu0
    %335 = vdwg.mxu0
    %336 = vmatprep.subr.bf16.mxu0 0
    %337 = vmatpush1.bf16.msra.mxu0 %v287
    %338 = vmatprep.subr.bf16.mxu0 0
    %339 = vmatpush1.bf16.msra.mxu0 0
    %340 = vmatprep.subr.bf16.mxu0 0
    %341 = vmatpush1.bf16.msra.mxu0 0
    %342 = vmatprep.subr.bf16.mxu0 0
    %343 = vmatpush1.bf16.msra.mxu0 0
    %344 = vmatprep.subr.bf16.mxu0 0
    %345 = vmatpush1.bf16.msra.mxu0 0
    %346 = vmatprep.subr.bf16.mxu0 0
    %347 = vmatpush1.bf16.msra.mxu0 0
    %348 = vmatprep.subr.bf16.mxu0 0
    %349 = vmatpush1.bf16.msra.mxu0 0
    %350 = vmatprep.subr.bf16.mxu0 0
    %351 = vmatpush1.bf16.msra.mxu0 0
    %352 = vmatprep.subr.bf16.mxu0 0
    %353 = vmatpush1.bf16.msra.mxu0 0
    %354 = vmatprep.subr.bf16.mxu0 0
    %355 = vmatpush1.bf16.msra.mxu0 0
    %356 = vmatprep.subr.bf16.mxu0 0
    %357 = vmatpush1.bf16.msra.mxu0 0
    %358 = vmatprep.subr.bf16.mxu0 0
    %359 = vmatpush1.bf16.msra.mxu0 0
    %360 = vmatprep.subr.bf16.mxu0 0
    %361 = vmatpush1.bf16.msra.mxu0 0
    %362 = vmatprep.subr.bf16.mxu0 0
    %363 = vmatpush1.bf16.msra.mxu0 0
    %364 = vmatprep.subr.bf16.mxu0 0
    %365 = vmatpush1.bf16.msra.mxu0 0
    %366 = vmatprep.subr.bf16.mxu0 0
    %367 = vmatpush1.bf16.msra.mxu0 0
    %368 = vmatprep.mubr.bf16.mxu0 0
    %369 = vmatmul.mubr.bf16.gmra.mrb[0].mxu0 %v293
    %v370 = vpop.f32.mrb[0].mxu0
    %v371 = vadd.f32 %v271, %v370
    %v372 = vpop.f32.mrb[0].mxu0
    %v373 = vpop.f32.mrb[0].mxu0
    %v374 = vpop.f32.mrb[0].mxu0
    %375 = vdwg.mxu0
    %v376 = vpack.c.bf16 %v252, %v252
    %v377 = vld [vmem:[#allocation10] sm:$0xff]
    %v378 = vld [vmem:[#allocation10 + $0x8] sm:$0xff]
    %v379 = vld [vmem:[#allocation10 + $0x10] sm:$0xff]
    %v380 = vld [vmem:[#allocation10 + $0x18] sm:$0xff]
    %v381 = vld [vmem:[#allocation10 + $0x20] sm:$0xff]
    %v382 = vld [vmem:[#allocation10 + $0x28] sm:$0xff]
    %v383 = vld [vmem:[#allocation10 + $0x30] sm:$0xff]
    %v384 = vld [vmem:[#allocation10 + $0x38] sm:$0xff]
    %v385 = vld [vmem:[#allocation10 + $0x40] sm:$0xff]
    %v386 = vld [vmem:[#allocation10 + $0x48] sm:$0xff]
    %v387 = vld [vmem:[#allocation10 + $0x50] sm:$0xff]
    %v388 = vld [vmem:[#allocation10 + $0x58] sm:$0xff]
    %v389 = vld [vmem:[#allocation10 + $0x60] sm:$0xff]
    %v390 = vld [vmem:[#allocation10 + $0x68] sm:$0xff]
    %v391 = vld [vmem:[#allocation10 + $0x70] sm:$0xff]
    %v392 = vld [vmem:[#allocation10 + $0x78] sm:$0xff]
    %v409 = vunpack.c.l.b16 %v377
    %v410 = vunpack.c.h.b16 %v377
    %v411 = vunpack.c.l.b16 %v378
    %v412 = vunpack.c.h.b16 %v378
    %v413 = vunpack.c.l.b16 %v379
    %v414 = vunpack.c.h.b16 %v379
    %v415 = vunpack.c.l.b16 %v380
    %v416 = vunpack.c.h.b16 %v380
    %v417 = vunpack.c.l.b16 %v381
    %v418 = vunpack.c.h.b16 %v381
    %v419 = vunpack.c.l.b16 %v382
    %v420 = vunpack.c.h.b16 %v382
    %v421 = vunpack.c.l.b16 %v383
    %v422 = vunpack.c.h.b16 %v383
    %v423 = vunpack.c.l.b16 %v384
    %v424 = vunpack.c.h.b16 %v384
    %v425 = vunpack.c.l.b16 %v385
    %v426 = vunpack.c.h.b16 %v385
    %v427 = vunpack.c.l.b16 %v386
    %v428 = vunpack.c.h.b16 %v386
    %v429 = vunpack.c.l.b16 %v387
    %v430 = vunpack.c.h.b16 %v387
    %v431 = vunpack.c.l.b16 %v388
    %v432 = vunpack.c.h.b16 %v388
    %v433 = vunpack.c.l.b16 %v389
    %v434 = vunpack.c.h.b16 %v389
    %v435 = vunpack.c.l.b16 %v390
    %v436 = vunpack.c.h.b16 %v390
    %v437 = vunpack.c.l.b16 %v391
    %v438 = vunpack.c.h.b16 %v391
    %v439 = vunpack.c.l.b16 %v392
    %v440 = vunpack.c.h.b16 %v392
    %v441 = vpack.c.b16 %v411, %v409
    %v442 = vpack.c.b16 %v412, %v410
    %v443 = vpack.c.b16 %v415, %v413
    %v444 = vpack.c.b16 %v416, %v414
    %v445 = vpack.c.b16 %v419, %v417
    %v446 = vpack.c.b16 %v420, %v418
    %v447 = vpack.c.b16 %v423, %v421
    %v448 = vpack.c.b16 %v424, %v422
    %v449 = vpack.c.b16 %v427, %v425
    %v450 = vpack.c.b16 %v428, %v426
    %v451 = vpack.c.b16 %v431, %v429
    %v452 = vpack.c.b16 %v432, %v430
    %v453 = vpack.c.b16 %v435, %v433
    %v454 = vpack.c.b16 %v436, %v434
    %v455 = vpack.c.b16 %v439, %v437
    %v456 = vpack.c.b16 %v440, %v438
    %473 = vmatprep.subr.bf16.mxu0 %v442
    %474 = vmatpush1.bf16.msra.mxu0 %v441
    %475 = vmatprep.subr.bf16.mxu0 %v444
    %476 = vmatpush1.bf16.msra.mxu0 %v443
    %477 = vmatprep.subr.bf16.mxu0 %v446
    %478 = vmatpush1.bf16.msra.mxu0 %v445
    %479 = vmatprep.subr.bf16.mxu0 %v448
    %480 = vmatpush1.bf16.msra.mxu0 %v447
    %481 = vmatprep.subr.bf16.mxu0 %v450
    %482 = vmatpush1.bf16.msra.mxu0 %v449
    %483 = vmatprep.subr.bf16.mxu0 %v452
    %484 = vmatpush1.bf16.msra.mxu0 %v451
    %485 = vmatprep.subr.bf16.mxu0 %v454
    %486 = vmatpush1.bf16.msra.mxu0 %v453
    %487 = vmatprep.subr.bf16.mxu0 %v456
    %488 = vmatpush1.bf16.msra.mxu0 %v455
    %489 = vmatprep.subr.bf16.mxu0 0
    %490 = vmatpush1.bf16.msra.mxu0 0
    %491 = vmatprep.subr.bf16.mxu0 0
    %492 = vmatpush1.bf16.msra.mxu0 0
    %493 = vmatprep.subr.bf16.mxu0 0
    %494 = vmatpush1.bf16.msra.mxu0 0
    %495 = vmatprep.subr.bf16.mxu0 0
    %496 = vmatpush1.bf16.msra.mxu0 0
    %497 = vmatprep.subr.bf16.mxu0 0
    %498 = vmatpush1.bf16.msra.mxu0 0
    %499 = vmatprep.subr.bf16.mxu0 0
    %500 = vmatpush1.bf16.msra.mxu0 0
    %501 = vmatprep.subr.bf16.mxu0 0
    %502 = vmatpush1.bf16.msra.mxu0 0
    %503 = vmatprep.subr.bf16.mxu0 0
    %504 = vmatpush1.bf16.msra.mxu0 0
    %505 = vmatprep.mubr.bf16.mxu0 0
    %506 = vmatmul.mubr.bf16.gmra.mrb[0].mxu0 %v376
    %v507 = vpop.f32.mrb[0].mxu0
    %v508 = vadd.f32 %v330, %v507
    %v509 = vpop.f32.mrb[0].mxu0
    %v510 = vadd.f32 %v332, %v509
    %v511 = vpop.f32.mrb[0].mxu0
    %v512 = vpop.f32.mrb[0].mxu0
    %513 = vdwg.mxu0
    %v514 = vxor.u32 %v508, 2147483648
    %v515 = vmul.f32 %v514, 1.442695
    %v516 = vpow.pop %v515
    %v517 = vadd.f32 %v516, 1.0
    %v518 = vrcp.pop %v517
    %v519 = vmul.f32 1.0, %v518
    %v520 = vxor.u32 %v510, 2147483648
    %v521 = vmul.f32 %v520, 1.442695
    %v522 = vpow.pop %v521
    %v523 = vadd.f32 %v522, 1.0
    %v524 = vrcp.pop %v523
    %v525 = vmul.f32 1.0, %v524
    %v526 = vmul.f32 %v252, %v525
    %v527 = vpack.c.bf16 %v526, %v526
    %v528 = vld [vmem:[#allocation12] sm:$0xf]
    %v529 = vld [vmem:[#allocation12 + $0x4] sm:$0xf]
    %v530 = vld [vmem:[#allocation12 + $0x8] sm:$0xf]
    %v531 = vld [vmem:[#allocation12 + $0xc] sm:$0xf]
    %v532 = vld [vmem:[#allocation12 + $0x10] sm:$0xf]
    %v533 = vld [vmem:[#allocation12 + $0x14] sm:$0xf]
    %v534 = vld [vmem:[#allocation12 + $0x18] sm:$0xf]
    %v535 = vld [vmem:[#allocation12 + $0x1c] sm:$0xf]
    %v536 = vld [vmem:[#allocation12 + $0x20] sm:$0xf]
    %v537 = vld [vmem:[#allocation12 + $0x24] sm:$0xf]
    %v538 = vld [vmem:[#allocation12 + $0x28] sm:$0xf]
    %v539 = vld [vmem:[#allocation12 + $0x2c] sm:$0xf]
    %v540 = vld [vmem:[#allocation12 + $0x30] sm:$0xf]
    %v541 = vld [vmem:[#allocation12 + $0x34] sm:$0xf]
    %v542 = vld [vmem:[#allocation12 + $0x38] sm:$0xf]
    %v543 = vld [vmem:[#allocation12 + $0x3c] sm:$0xf]
    %v560 = vunpack.c.l.b16 %v528
    %v561 = vunpack.c.l.b16 %v529
    %v562 = vunpack.c.l.b16 %v530
    %v563 = vunpack.c.l.b16 %v531
    %v564 = vunpack.c.l.b16 %v532
    %v565 = vunpack.c.l.b16 %v533
    %v566 = vunpack.c.l.b16 %v534
    %v567 = vunpack.c.l.b16 %v535
    %v568 = vunpack.c.l.b16 %v536
    %v569 = vunpack.c.l.b16 %v537
    %v570 = vunpack.c.l.b16 %v538
    %v571 = vunpack.c.l.b16 %v539
    %v572 = vunpack.c.l.b16 %v540
    %v573 = vunpack.c.l.b16 %v541
    %v574 = vunpack.c.l.b16 %v542
    %v575 = vunpack.c.l.b16 %v543
    %v576 = vpack.c.b16 %v561, %v560
    %v577 = vpack.c.b16 %v563, %v562
    %v578 = vpack.c.b16 %v565, %v564
    %v579 = vpack.c.b16 %v567, %v566
    %v580 = vpack.c.b16 %v569, %v568
    %v581 = vpack.c.b16 %v571, %v570
    %v582 = vpack.c.b16 %v573, %v572
    %v583 = vpack.c.b16 %v575, %v574
    %592 = vmatprep.subr.bf16.mxu0 0
    %593 = vmatpush1.bf16.msra.mxu0 %v576
    %594 = vmatprep.subr.bf16.mxu0 0
    %595 = vmatpush1.bf16.msra.mxu0 %v577
    %596 = vmatprep.subr.bf16.mxu0 0
    %597 = vmatpush1.bf16.msra.mxu0 %v578
    %598 = vmatprep.subr.bf16.mxu0 0
    %599 = vmatpush1.bf16.msra.mxu0 %v579
    %600 = vmatprep.subr.bf16.mxu0 0
    %601 = vmatpush1.bf16.msra.mxu0 %v580
    %602 = vmatprep.subr.bf16.mxu0 0
    %603 = vmatpush1.bf16.msra.mxu0 %v581
    %604 = vmatprep.subr.bf16.mxu0 0
    %605 = vmatpush1.bf16.msra.mxu0 %v582
    %606 = vmatprep.subr.bf16.mxu0 0
    %607 = vmatpush1.bf16.msra.mxu0 %v583
    %608 = vmatprep.subr.bf16.mxu0 0
    %609 = vmatpush1.bf16.msra.mxu0 0
    %610 = vmatprep.subr.bf16.mxu0 0
    %611 = vmatpush1.bf16.msra.mxu0 0
    %612 = vmatprep.subr.bf16.mxu0 0
    %613 = vmatpush1.bf16.msra.mxu0 0
    %614 = vmatprep.subr.bf16.mxu0 0
    %615 = vmatpush1.bf16.msra.mxu0 0
    %616 = vmatprep.subr.bf16.mxu0 0
    %617 = vmatpush1.bf16.msra.mxu0 0
    %618 = vmatprep.subr.bf16.mxu0 0
    %619 = vmatpush1.bf16.msra.mxu0 0
    %620 = vmatprep.subr.bf16.mxu0 0
    %621 = vmatpush1.bf16.msra.mxu0 0
    %622 = vmatprep.subr.bf16.mxu0 0
    %623 = vmatpush1.bf16.msra.mxu0 0
    %624 = vmatprep.mubr.bf16.mxu0 0
    %625 = vmatmul.mubr.bf16.gmra.mrb[0].mxu0 %v527
    %v626 = vpop.f32.mrb[0].mxu0
    %v627 = vadd.f32 %v371, %v626
    %v628 = vpop.f32.mrb[0].mxu0
    %v629 = vpop.f32.mrb[0].mxu0
    %v630 = vpop.f32.mrb[0].mxu0
    %631 = vdwg.mxu0
    %v632 = vsub.f32 1.0, %v519
    %v633 = vmul.f32 %v632, %v627
    %v634 = vmul.f32 %v519, %v252
    %v635 = vadd.f32 %v633, %v634
    %v636 = vpack.c.bf16 %v635, %v635
    %v637 = vld [vmem:[#allocation13] sm:$0xf]
    %v638 = vld [vmem:[#allocation13 + $0x4] sm:$0xf]
    %v639 = vld [vmem:[#allocation13 + $0x8] sm:$0xf]
    %v640 = vld [vmem:[#allocation13 + $0xc] sm:$0xf]
    %v641 = vld [vmem:[#allocation13 + $0x10] sm:$0xf]
    %v642 = vld [vmem:[#allocation13 + $0x14] sm:$0xf]
    %v643 = vld [vmem:[#allocation13 + $0x18] sm:$0xf]
    %v644 = vld [vmem:[#allocation13 + $0x1c] sm:$0xf]
    %v645 = vld [vmem:[#allocation13 + $0x20] sm:$0xf]
    %v646 = vld [vmem:[#allocation13 + $0x24] sm:$0xf]
    %v647 = vld [vmem:[#allocation13 + $0x28] sm:$0xf]
    %v648 = vld [vmem:[#allocation13 + $0x2c] sm:$0xf]
    %v649 = vld [vmem:[#allocation13 + $0x30] sm:$0xf]
    %v650 = vld [vmem:[#allocation13 + $0x34] sm:$0xf]
    %v651 = vld [vmem:[#allocation13 + $0x38] sm:$0xf]
    %v652 = vld [vmem:[#allocation13 + $0x3c] sm:$0xf]
    %s653 = sld [smem:[#allocation6 + $0x1]]
    %654 = vmatprep.subr.bf16.mxu0 0
    %655 = vmatpush1.bf16.msra.mxu0 %v193
    %656 = vmatprep.subr.bf16.mxu0 0
    %657 = vmatpush1.bf16.msra.mxu0 %v194
    %658 = vmatprep.subr.bf16.mxu0 0
    %659 = vmatpush1.bf16.msra.mxu0 %v195
    %660 = vmatprep.subr.bf16.mxu0 0
    %661 = vmatpush1.bf16.msra.mxu0 %v196
    %662 = vmatprep.subr.bf16.mxu0 0
    %663 = vmatpush1.bf16.msra.mxu0 %v197
    %664 = vmatprep.subr.bf16.mxu0 0
    %665 = vmatpush1.bf16.msra.mxu0 %v198
    %666 = vmatprep.subr.bf16.mxu0 0
    %667 = vmatpush1.bf16.msra.mxu0 %v199
    %668 = vmatprep.subr.bf16.mxu0 0
    %669 = vmatpush1.bf16.msra.mxu0 %v200
    %670 = vmatprep.subr.bf16.mxu0 0
    %671 = vmatpush1.bf16.msra.mxu0 0
    %672 = vmatprep.subr.bf16.mxu0 0
    %673 = vmatpush1.bf16.msra.mxu0 0
    %674 = vmatprep.subr.bf16.mxu0 0
    %675 = vmatpush1.bf16.msra.mxu0 0
    %676 = vmatprep.subr.bf16.mxu0 0
    %677 = vmatpush1.bf16.msra.mxu0 0
    %678 = vmatprep.subr.bf16.mxu0 0
    %679 = vmatpush1.bf16.msra.mxu0 0
    %680 = vmatprep.subr.bf16.mxu0 0
    %681 = vmatpush1.bf16.msra.mxu0 0
    %682 = vmatprep.subr.bf16.mxu0 0
    %683 = vmatpush1.bf16.msra.mxu0 0
    %684 = vmatprep.subr.bf16.mxu0 0
    %685 = vmatpush1.bf16.msra.mxu0 0
    %686 = vmatprep.mubr.bf16.mxu0 0
    %687 = vmatmul.mubr.bf16.gmra.mrb[0].mxu0 %v636
    %v688 = vpop.f32.mrb[0].mxu0
    %v689 = vadd.f32 %v159, %v688
    %v690 = vpop.f32.mrb[0].mxu0
    %v691 = vpop.f32.mrb[0].mxu0
    %v692 = vpop.f32.mrb[0].mxu0
    %693 = vdwg.mxu0
    %v694 = vtanh.pop %v689
    %v695 = vstv %s653
    %v696 = vmul.f32 %v695, %v694
    %v697 = vadd.f32 %v635, %v696
    %s698 = scalar_lea.vmem [#allocation2], 8
    %v699 = vld [vmem:[%s698] sm:$0xff]
    %v700 = vpack.c.bf16 %v699, %v699
    %v702 = vsel %vm291, %v700, 0
    %704 = vmatprep.subr.bf16.mxu0 %v286
    %705 = vmatpush1.bf16.msra.mxu0 %v285
    %706 = vmatprep.subr.bf16.mxu0 0
    %707 = vmatpush1.bf16.msra.mxu0 0
    %708 = vmatprep.subr.bf16.mxu0 0
    %709 = vmatpush1.bf16.msra.mxu0 0
    %710 = vmatprep.subr.bf16.mxu0 0
    %711 = vmatpush1.bf16.msra.mxu0 0
    %712 = vmatprep.subr.bf16.mxu0 0
    %713 = vmatpush1.bf16.msra.mxu0 0
    %714 = vmatprep.subr.bf16.mxu0 0
    %715 = vmatpush1.bf16.msra.mxu0 0
    %716 = vmatprep.subr.bf16.mxu0 0
    %717 = vmatpush1.bf16.msra.mxu0 0
    %718 = vmatprep.subr.bf16.mxu0 0
    %719 = vmatpush1.bf16.msra.mxu0 0
    %720 = vmatprep.subr.bf16.mxu0 0
    %721 = vmatpush1.bf16.msra.mxu0 0
    %722 = vmatprep.subr.bf16.mxu0 0
    %723 = vmatpush1.bf16.msra.mxu0 0
    %724 = vmatprep.subr.bf16.mxu0 0
    %725 = vmatpush1.bf16.msra.mxu0 0
    %726 = vmatprep.subr.bf16.mxu0 0
    %727 = vmatpush1.bf16.msra.mxu0 0
    %728 = vmatprep.subr.bf16.mxu0 0
    %729 = vmatpush1.bf16.msra.mxu0 0
    %730 = vmatprep.subr.bf16.mxu0 0
    %731 = vmatpush1.bf16.msra.mxu0 0
    %732 = vmatprep.subr.bf16.mxu0 0
    %733 = vmatpush1.bf16.msra.mxu0 0
    %734 = vmatprep.subr.bf16.mxu0 0
    %735 = vmatpush1.bf16.msra.mxu0 0
    %736 = vmatprep.mubr.bf16.mxu0 0
    %737 = vmatmul.mubr.bf16.gmra.mrb[0].mxu0 %v702
    %v738 = vpop.f32.mrb[0].mxu0
    %v739 = vadd.f32 %v263, %v738
    %v740 = vpop.f32.mrb[0].mxu0
    %v741 = vadd.f32 %v267, %v740
    %v742 = vpop.f32.mrb[0].mxu0
    %v743 = vpop.f32.mrb[0].mxu0
    %744 = vdwg.mxu0
    %745 = vmatprep.subr.bf16.mxu0 0
    %746 = vmatpush1.bf16.msra.mxu0 %v287
    %747 = vmatprep.subr.bf16.mxu0 0
    %748 = vmatpush1.bf16.msra.mxu0 0
    %749 = vmatprep.subr.bf16.mxu0 0
    %750 = vmatpush1.bf16.msra.mxu0 0
    %751 = vmatprep.subr.bf16.mxu0 0
    %752 = vmatpush1.bf16.msra.mxu0 0
    %753 = vmatprep.subr.bf16.mxu0 0
    %754 = vmatpush1.bf16.msra.mxu0 0
    %755 = vmatprep.subr.bf16.mxu0 0
    %756 = vmatpush1.bf16.msra.mxu0 0
    %757 = vmatprep.subr.bf16.mxu0 0
    %758 = vmatpush1.bf16.msra.mxu0 0
    %759 = vmatprep.subr.bf16.mxu0 0
    %760 = vmatpush1.bf16.msra.mxu0 0
    %761 = vmatprep.subr.bf16.mxu0 0
    %762 = vmatpush1.bf16.msra.mxu0 0
    %763 = vmatprep.subr.bf16.mxu0 0
    %764 = vmatpush1.bf16.msra.mxu0 0
    %765 = vmatprep.subr.bf16.mxu0 0
    %766 = vmatpush1.bf16.msra.mxu0 0
    %767 = vmatprep.subr.bf16.mxu0 0
    %768 = vmatpush1.bf16.msra.mxu0 0
    %769 = vmatprep.subr.bf16.mxu0 0
    %770 = vmatpush1.bf16.msra.mxu0 0
    %771 = vmatprep.subr.bf16.mxu0 0
    %772 = vmatpush1.bf16.msra.mxu0 0
    %773 = vmatprep.subr.bf16.mxu0 0
    %774 = vmatpush1.bf16.msra.mxu0 0
    %775 = vmatprep.subr.bf16.mxu0 0
    %776 = vmatpush1.bf16.msra.mxu0 0
    %777 = vmatprep.mubr.bf16.mxu0 0
    %778 = vmatmul.mubr.bf16.gmra.mrb[0].mxu0 %v702
    %v779 = vpop.f32.mrb[0].mxu0
    %v780 = vadd.f32 %v271, %v779
    %v781 = vpop.f32.mrb[0].mxu0
    %v782 = vpop.f32.mrb[0].mxu0
    %v783 = vpop.f32.mrb[0].mxu0
    %784 = vdwg.mxu0
    %v785 = vpack.c.bf16 %v697, %v697
    %786 = vmatprep.subr.bf16.mxu0 %v442
    %787 = vmatpush1.bf16.msra.mxu0 %v441
    %788 = vmatprep.subr.bf16.mxu0 %v444
    %789 = vmatpush1.bf16.msra.mxu0 %v443
    %790 = vmatprep.subr.bf16.mxu0 %v446
    %791 = vmatpush1.bf16.msra.mxu0 %v445
    %792 = vmatprep.subr.bf16.mxu0 %v448
    %793 = vmatpush1.bf16.msra.mxu0 %v447
    %794 = vmatprep.subr.bf16.mxu0 %v450
    %795 = vmatpush1.bf16.msra.mxu0 %v449
    %796 = vmatprep.subr.bf16.mxu0 %v452
    %797 = vmatpush1.bf16.msra.mxu0 %v451
    %798 = vmatprep.subr.bf16.mxu0 %v454
    %799 = vmatpush1.bf16.msra.mxu0 %v453
    %800 = vmatprep.subr.bf16.mxu0 %v456
    %801 = vmatpush1.bf16.msra.mxu0 %v455
    %802 = vmatprep.subr.bf16.mxu0 0
    %803 = vmatpush1.bf16.msra.mxu0 0
    %804 = vmatprep.subr.bf16.mxu0 0
    %805 = vmatpush1.bf16.msra.mxu0 0
    %806 = vmatprep.subr.bf16.mxu0 0
    %807 = vmatpush1.bf16.msra.mxu0 0
    %808 = vmatprep.subr.bf16.mxu0 0
    %809 = vmatpush1.bf16.msra.mxu0 0
    %810 = vmatprep.subr.bf16.mxu0 0
    %811 = vmatpush1.bf16.msra.mxu0 0
    %812 = vmatprep.subr.bf16.mxu0 0
    %813 = vmatpush1.bf16.msra.mxu0 0
    %814 = vmatprep.subr.bf16.mxu0 0
    %815 = vmatpush1.bf16.msra.mxu0 0
    %816 = vmatprep.subr.bf16.mxu0 0
    %817 = vmatpush1.bf16.msra.mxu0 0
    %818 = vmatprep.mubr.bf16.mxu0 0
    %819 = vmatmul.mubr.bf16.gmra.mrb[0].mxu0 %v785
    %v820 = vpop.f32.mrb[0].mxu0
    %v821 = vadd.f32 %v739, %v820
    %v822 = vpop.f32.mrb[0].mxu0
    %v823 = vadd.f32 %v741, %v822
    %v824 = vpop.f32.mrb[0].mxu0
    %v825 = vpop.f32.mrb[0].mxu0
    %826 = vdwg.mxu0
    %v827 = vxor.u32 %v821, 2147483648
    %v828 = vmul.f32 %v827, 1.442695
    %v829 = vpow.pop %v828
    %v830 = vadd.f32 %v829, 1.0
    %v831 = vrcp.pop %v830
    %v832 = vmul.f32 1.0, %v831
    %v833 = vxor.u32 %v823, 2147483648
    %v834 = vmul.f32 %v833, 1.442695
    %v835 = vpow.pop %v834
    %v836 = vadd.f32 %v835, 1.0
    %v837 = vrcp.pop %v836
    %v838 = vmul.f32 1.0, %v837
    %v839 = vmul.f32 %v697, %v838
    %v840 = vpack.c.bf16 %v839, %v839
    %841 = vmatprep.subr.bf16.mxu0 0
    %842 = vmatpush1.bf16.msra.mxu0 %v576
    %843 = vmatprep.subr.bf16.mxu0 0
    %844 = vmatpush1.bf16.msra.mxu0 %v577
    %845 = vmatprep.subr.bf16.mxu0 0
    %846 = vmatpush1.bf16.msra.mxu0 %v578
    %847 = vmatprep.subr.bf16.mxu0 0
    %848 = vmatpush1.bf16.msra.mxu0 %v579
    %849 = vmatprep.subr.bf16.mxu0 0
    %850 = vmatpush1.bf16.msra.mxu0 %v580
    %851 = vmatprep.subr.bf16.mxu0 0
    %852 = vmatpush1.bf16.msra.mxu0 %v581
    %853 = vmatprep.subr.bf16.mxu0 0
    %854 = vmatpush1.bf16.msra.mxu0 %v582
    %855 = vmatprep.subr.bf16.mxu0 0
    %856 = vmatpush1.bf16.msra.mxu0 %v583
    %857 = vmatprep.subr.bf16.mxu0 0
    %858 = vmatpush1.bf16.msra.mxu0 0
    %859 = vmatprep.subr.bf16.mxu0 0
    %860 = vmatpush1.bf16.msra.mxu0 0
    %861 = vmatprep.subr.bf16.mxu0 0
    %862 = vmatpush1.bf16.msra.mxu0 0
    %863 = vmatprep.subr.bf16.mxu0 0
    %864 = vmatpush1.bf16.msra.mxu0 0
    %865 = vmatprep.subr.bf16.mxu0 0
    %866 = vmatpush1.bf16.msra.mxu0 0
    %867 = vmatprep.subr.bf16.mxu0 0
    %868 = vmatpush1.bf16.msra.mxu0 0
    %869 = vmatprep.subr.bf16.mxu0 0
    %870 = vmatpush1.bf16.msra.mxu0 0
    %871 = vmatprep.subr.bf16.mxu0 0
    %872 = vmatpush1.bf16.msra.mxu0 0
    %873 = vmatprep.mubr.bf16.mxu0 0
    %874 = vmatmul.mubr.bf16.gmra.mrb[0].mxu0 %v840
    %v875 = vpop.f32.mrb[0].mxu0
    %v876 = vadd.f32 %v780, %v875
    %v877 = vpop.f32.mrb[0].mxu0
    %v878 = vpop.f32.mrb[0].mxu0
    %v879 = vpop.f32.mrb[0].mxu0
    %880 = vdwg.mxu0
    %v881 = vsub.f32 1.0, %v832
    %v882 = vmul.f32 %v881, %v876
    %v883 = vmul.f32 %v832, %v697
    %v884 = vadd.f32 %v882, %v883
    %v885 = vpack.c.bf16 %v884, %v884
    %s886 = scalar_lea.vmem [#allocation13], 64
    %v887 = vld [vmem:[%s886] sm:$0xf]
    %v888 = vld [vmem:[%s886 + $0x4] sm:$0xf]
    %v889 = vld [vmem:[%s886 + $0x8] sm:$0xf]
    %v890 = vld [vmem:[%s886 + $0xc] sm:$0xf]
    %v891 = vld [vmem:[%s886 + $0x10] sm:$0xf]
    %v892 = vld [vmem:[%s886 + $0x14] sm:$0xf]
    %v893 = vld [vmem:[%s886 + $0x18] sm:$0xf]
    %v894 = vld [vmem:[%s886 + $0x1c] sm:$0xf]
    %v895 = vld [vmem:[%s886 + $0x20] sm:$0xf]
    %v896 = vld [vmem:[%s886 + $0x24] sm:$0xf]
    %v897 = vld [vmem:[%s886 + $0x28] sm:$0xf]
    %v898 = vld [vmem:[%s886 + $0x2c] sm:$0xf]
    %v899 = vld [vmem:[%s886 + $0x30] sm:$0xf]
    %v900 = vld [vmem:[%s886 + $0x34] sm:$0xf]
    %v901 = vld [vmem:[%s886 + $0x38] sm:$0xf]
    %v902 = vld [vmem:[%s886 + $0x3c] sm:$0xf]
    %v919 = vunpack.c.l.b16 %v887
    %v920 = vunpack.c.l.b16 %v888
    %v921 = vunpack.c.l.b16 %v889
    %v922 = vunpack.c.l.b16 %v890
    %v923 = vunpack.c.l.b16 %v891
    %v924 = vunpack.c.l.b16 %v892
    %v925 = vunpack.c.l.b16 %v893
    %v926 = vunpack.c.l.b16 %v894
    %v927 = vunpack.c.l.b16 %v895
    %v928 = vunpack.c.l.b16 %v896
    %v929 = vunpack.c.l.b16 %v897
    %v930 = vunpack.c.l.b16 %v898
    %v931 = vunpack.c.l.b16 %v899
    %v932 = vunpack.c.l.b16 %v900
    %v933 = vunpack.c.l.b16 %v901
    %v934 = vunpack.c.l.b16 %v902
    %v935 = vpack.c.b16 %v920, %v919
    %v936 = vpack.c.b16 %v922, %v921
    %v937 = vpack.c.b16 %v924, %v923
    %v938 = vpack.c.b16 %v926, %v925
    %v939 = vpack.c.b16 %v928, %v927
    %v940 = vpack.c.b16 %v930, %v929
    %v941 = vpack.c.b16 %v932, %v931
    %v942 = vpack.c.b16 %v934, %v933
    %951 = vmatprep.subr.bf16.mxu0 0
    %952 = vmatpush1.bf16.msra.mxu0 %v935
    %953 = vmatprep.subr.bf16.mxu0 0
    %954 = vmatpush1.bf16.msra.mxu0 %v936
    %955 = vmatprep.subr.bf16.mxu0 0
    %956 = vmatpush1.bf16.msra.mxu0 %v937
    %957 = vmatprep.subr.bf16.mxu0 0
    %958 = vmatpush1.bf16.msra.mxu0 %v938
    %959 = vmatprep.subr.bf16.mxu0 0
    %960 = vmatpush1.bf16.msra.mxu0 %v939
    %961 = vmatprep.subr.bf16.mxu0 0
    %962 = vmatpush1.bf16.msra.mxu0 %v940
    %963 = vmatprep.subr.bf16.mxu0 0
    %964 = vmatpush1.bf16.msra.mxu0 %v941
    %965 = vmatprep.subr.bf16.mxu0 0
    %966 = vmatpush1.bf16.msra.mxu0 %v942
    %967 = vmatprep.subr.bf16.mxu0 0
    %968 = vmatpush1.bf16.msra.mxu0 0
    %969 = vmatprep.subr.bf16.mxu0 0
    %970 = vmatpush1.bf16.msra.mxu0 0
    %971 = vmatprep.subr.bf16.mxu0 0
    %972 = vmatpush1.bf16.msra.mxu0 0
    %973 = vmatprep.subr.bf16.mxu0 0
    %974 = vmatpush1.bf16.msra.mxu0 0
    %975 = vmatprep.subr.bf16.mxu0 0
    %976 = vmatpush1.bf16.msra.mxu0 0
    %977 = vmatprep.subr.bf16.mxu0 0
    %978 = vmatpush1.bf16.msra.mxu0 0
    %979 = vmatprep.subr.bf16.mxu0 0
    %980 = vmatpush1.bf16.msra.mxu0 0
    %981 = vmatprep.subr.bf16.mxu0 0
    %982 = vmatpush1.bf16.msra.mxu0 0
    %983 = vmatprep.mubr.bf16.mxu0 0
    %984 = vmatmul.mubr.bf16.gmra.mrb[0].mxu0 %v885
    %v985 = vpop.f32.mrb[0].mxu0
    %v986 = vadd.f32 0.0, %v985
    %v987 = vpop.f32.mrb[0].mxu0
    %v988 = vpop.f32.mrb[0].mxu0
    %v989 = vpop.f32.mrb[0].mxu0
    %990 = vdwg.mxu0
    %v1007 = vunpack.c.l.b16 %v637
    %v1008 = vunpack.c.l.b16 %v638
    %v1009 = vunpack.c.l.b16 %v639
    %v1010 = vunpack.c.l.b16 %v640
    %v1011 = vunpack.c.l.b16 %v641
    %v1012 = vunpack.c.l.b16 %v642
    %v1013 = vunpack.c.l.b16 %v643
    %v1014 = vunpack.c.l.b16 %v644
    %v1015 = vunpack.c.l.b16 %v645
    %v1016 = vunpack.c.l.b16 %v646
    %v1017 = vunpack.c.l.b16 %v647
    %v1018 = vunpack.c.l.b16 %v648
    %v1019 = vunpack.c.l.b16 %v649
    %v1020 = vunpack.c.l.b16 %v650
    %v1021 = vunpack.c.l.b16 %v651
    %v1022 = vunpack.c.l.b16 %v652
    %v1023 = vpack.c.b16 %v1008, %v1007
    %v1024 = vpack.c.b16 %v1010, %v1009
    %v1025 = vpack.c.b16 %v1012, %v1011
    %v1026 = vpack.c.b16 %v1014, %v1013
    %v1027 = vpack.c.b16 %v1016, %v1015
    %v1028 = vpack.c.b16 %v1018, %v1017
    %v1029 = vpack.c.b16 %v1020, %v1019
    %v1030 = vpack.c.b16 %v1022, %v1021
    %1039 = vmatprep.subr.bf16.mxu0 0
    %1040 = vmatpush1.bf16.msra.mxu0 %v1023
    %1041 = vmatprep.subr.bf16.mxu0 0
    %1042 = vmatpush1.bf16.msra.mxu0 %v1024
    %1043 = vmatprep.subr.bf16.mxu0 0
    %1044 = vmatpush1.bf16.msra.mxu0 %v1025
    %1045 = vmatprep.subr.bf16.mxu0 0
    %1046 = vmatpush1.bf16.msra.mxu0 %v1026
    %1047 = vmatprep.subr.bf16.mxu0 0
    %1048 = vmatpush1.bf16.msra.mxu0 %v1027
    %1049 = vmatprep.subr.bf16.mxu0 0
    %1050 = vmatpush1.bf16.msra.mxu0 %v1028
    %1051 = vmatprep.subr.bf16.mxu0 0
    %1052 = vmatpush1.bf16.msra.mxu0 %v1029
    %1053 = vmatprep.subr.bf16.mxu0 0
    %1054 = vmatpush1.bf16.msra.mxu0 %v1030
    %1055 = vmatprep.subr.bf16.mxu0 0
    %1056 = vmatpush1.bf16.msra.mxu0 0
    %1057 = vmatprep.subr.bf16.mxu0 0
    %1058 = vmatpush1.bf16.msra.mxu0 0
    %1059 = vmatprep.subr.bf16.mxu0 0
    %1060 = vmatpush1.bf16.msra.mxu0 0
    %1061 = vmatprep.subr.bf16.mxu0 0
    %1062 = vmatpush1.bf16.msra.mxu0 0
    %1063 = vmatprep.subr.bf16.mxu0 0
    %1064 = vmatpush1.bf16.msra.mxu0 0
    %1065 = vmatprep.subr.bf16.mxu0 0
    %1066 = vmatpush1.bf16.msra.mxu0 0
    %1067 = vmatprep.subr.bf16.mxu0 0
    %1068 = vmatpush1.bf16.msra.mxu0 0
    %1069 = vmatprep.subr.bf16.mxu0 0
    %1070 = vmatpush1.bf16.msra.mxu0 0
    %1071 = vmatprep.mubr.bf16.mxu0 0
    %1072 = vmatmul.mubr.bf16.gmra.mrb[0].mxu0 %v636
    %v1073 = vpop.f32.mrb[0].mxu0
    %v1074 = vadd.f32 %v986, %v1073
    %v1075 = vpop.f32.mrb[0].mxu0
    %v1076 = vpop.f32.mrb[0].mxu0
    %v1077 = vpop.f32.mrb[0].mxu0
    %1078 = vdwg.mxu0
    %s1079 = sld [smem:[#allocation6 + $0x2]]
    %1080 = vmatprep.subr.bf16.mxu0 0
    %1081 = vmatpush1.bf16.msra.mxu0 %v193
    %1082 = vmatprep.subr.bf16.mxu0 0
    %1083 = vmatpush1.bf16.msra.mxu0 %v194
    %1084 = vmatprep.subr.bf16.mxu0 0
    %1085 = vmatpush1.bf16.msra.mxu0 %v195
    %1086 = vmatprep.subr.bf16.mxu0 0
    %1087 = vmatpush1.bf16.msra.mxu0 %v196
    %1088 = vmatprep.subr.bf16.mxu0 0
    %1089 = vmatpush1.bf16.msra.mxu0 %v197
    %1090 = vmatprep.subr.bf16.mxu0 0
    %1091 = vmatpush1.bf16.msra.mxu0 %v198
    %1092 = vmatprep.subr.bf16.mxu0 0
    %1093 = vmatpush1.bf16.msra.mxu0 %v199
    %1094 = vmatprep.subr.bf16.mxu0 0
    %1095 = vmatpush1.bf16.msra.mxu0 %v200
    %1096 = vmatprep.subr.bf16.mxu0 0
    %1097 = vmatpush1.bf16.msra.mxu0 0
    %1098 = vmatprep.subr.bf16.mxu0 0
    %1099 = vmatpush1.bf16.msra.mxu0 0
    %1100 = vmatprep.subr.bf16.mxu0 0
    %1101 = vmatpush1.bf16.msra.mxu0 0
    %1102 = vmatprep.subr.bf16.mxu0 0
    %1103 = vmatpush1.bf16.msra.mxu0 0
    %1104 = vmatprep.subr.bf16.mxu0 0
    %1105 = vmatpush1.bf16.msra.mxu0 0
    %1106 = vmatprep.subr.bf16.mxu0 0
    %1107 = vmatpush1.bf16.msra.mxu0 0
    %1108 = vmatprep.subr.bf16.mxu0 0
    %1109 = vmatpush1.bf16.msra.mxu0 0
    %1110 = vmatprep.subr.bf16.mxu0 0
    %1111 = vmatpush1.bf16.msra.mxu0 0
    %1112 = vmatprep.mubr.bf16.mxu0 0
    %1113 = vmatmul.mubr.bf16.gmra.mrb[0].mxu0 %v885
    %v1114 = vpop.f32.mrb[0].mxu0
    %v1115 = vadd.f32 %v159, %v1114
    %v1116 = vpop.f32.mrb[0].mxu0
    %v1117 = vpop.f32.mrb[0].mxu0
    %v1118 = vpop.f32.mrb[0].mxu0
    %1119 = vdwg.mxu0
    %v1120 = vtanh.pop %v1115
    %v1121 = vstv %s1079
    %v1122 = vmul.f32 %v1121, %v1120
    %v1123 = vadd.f32 %v884, %v1122
    %s1124 = scalar_lea.vmem [#allocation2], 16
    %v1125 = vld [vmem:[%s1124] sm:$0xff]
    %v1126 = vpack.c.bf16 %v1125, %v1125
    %v1128 = vsel %vm291, %v1126, 0
    %1130 = vmatprep.subr.bf16.mxu0 %v286
    %1131 = vmatpush1.bf16.msra.mxu0 %v285
    %1132 = vmatprep.subr.bf16.mxu0 0
    %1133 = vmatpush1.bf16.msra.mxu0 0
    %1134 = vmatprep.subr.bf16.mxu0 0
    %1135 = vmatpush1.bf16.msra.mxu0 0
    %1136 = vmatprep.subr.bf16.mxu0 0
    %1137 = vmatpush1.bf16.msra.mxu0 0
    %1138 = vmatprep.subr.bf16.mxu0 0
    %1139 = vmatpush1.bf16.msra.mxu0 0
    %1140 = vmatprep.subr.bf16.mxu0 0
    %1141 = vmatpush1.bf16.msra.mxu0 0
    %1142 = vmatprep.subr.bf16.mxu0 0
    %1143 = vmatpush1.bf16.msra.mxu0 0
    %1144 = vmatprep.subr.bf16.mxu0 0
    %1145 = vmatpush1.bf16.msra.mxu0 0
    %1146 = vmatprep.subr.bf16.mxu0 0
    %1147 = vmatpush1.bf16.msra.mxu0 0
    %1148 = vmatprep.subr.bf16.mxu0 0
    %1149 = vmatpush1.bf16.msra.mxu0 0
    %1150 = vmatprep.subr.bf16.mxu0 0
    %1151 = vmatpush1.bf16.msra.mxu0 0
    %1152 = vmatprep.subr.bf16.mxu0 0
    %1153 = vmatpush1.bf16.msra.mxu0 0
    %1154 = vmatprep.subr.bf16.mxu0 0
    %1155 = vmatpush1.bf16.msra.mxu0 0
    %1156 = vmatprep.subr.bf16.mxu0 0
    %1157 = vmatpush1.bf16.msra.mxu0 0
    %1158 = vmatprep.subr.bf16.mxu0 0
    %1159 = vmatpush1.bf16.msra.mxu0 0
    %1160 = vmatprep.subr.bf16.mxu0 0
    %1161 = vmatpush1.bf16.msra.mxu0 0
    %1162 = vmatprep.mubr.bf16.mxu0 0
    %1163 = vmatmul.mubr.bf16.gmra.mrb[0].mxu0 %v1128
    %v1164 = vpop.f32.mrb[0].mxu0
    %v1165 = vadd.f32 %v263, %v1164
    %v1166 = vpop.f32.mrb[0].mxu0
    %v1167 = vadd.f32 %v267, %v1166
    %v1168 = vpop.f32.mrb[0].mxu0
    %v1169 = vpop.f32.mrb[0].mxu0
    %1170 = vdwg.mxu0
    %1171 = vmatprep.subr.bf16.mxu0 0
    %1172 = vmatpush1.bf16.msra.mxu0 %v287
    %1173 = vmatprep.subr.bf16.mxu0 0
    %1174 = vmatpush1.bf16.msra.mxu0 0
    %1175 = vmatprep.subr.bf16.mxu0 0
    %1176 = vmatpush1.bf16.msra.mxu0 0
    %1177 = vmatprep.subr.bf16.mxu0 0
    %1178 = vmatpush1.bf16.msra.mxu0 0
    %1179 = vmatprep.subr.bf16.mxu0 0
    %1180 = vmatpush1.bf16.msra.mxu0 0
    %1181 = vmatprep.subr.bf16.mxu0 0
    %1182 = vmatpush1.bf16.msra.mxu0 0
    %1183 = vmatprep.subr.bf16.mxu0 0
    %1184 = vmatpush1.bf16.msra.mxu0 0
    %1185 = vmatprep.subr.bf16.mxu0 0
    %1186 = vmatpush1.bf16.msra.mxu0 0
    %1187 = vmatprep.subr.bf16.mxu0 0
    %1188 = vmatpush1.bf16.msra.mxu0 0
    %1189 = vmatprep.subr.bf16.mxu0 0
    %1190 = vmatpush1.bf16.msra.mxu0 0
    %1191 = vmatprep.subr.bf16.mxu0 0
    %1192 = vmatpush1.bf16.msra.mxu0 0
    %1193 = vmatprep.subr.bf16.mxu0 0
    %1194 = vmatpush1.bf16.msra.mxu0 0
    %1195 = vmatprep.subr.bf16.mxu0 0
    %1196 = vmatpush1.bf16.msra.mxu0 0
    %1197 = vmatprep.subr.bf16.mxu0 0
    %1198 = vmatpush1.bf16.msra.mxu0 0
    %1199 = vmatprep.subr.bf16.mxu0 0
    %1200 = vmatpush1.bf16.msra.mxu0 0
    %1201 = vmatprep.subr.bf16.mxu0 0
    %1202 = vmatpush1.bf16.msra.mxu0 0
    %1203 = vmatprep.mubr.bf16.mxu0 0
    %1204 = vmatmul.mubr.bf16.gmra.mrb[0].mxu0 %v1128
    %v1205 = vpop.f32.mrb[0].mxu0
    %v1206 = vadd.f32 %v271, %v1205
    %v1207 = vpop.f32.mrb[0].mxu0
    %v1208 = vpop.f32.mrb[0].mxu0
    %v1209 = vpop.f32.mrb[0].mxu0
    %1210 = vdwg.mxu0
    %v1211 = vpack.c.bf16 %v1123, %v1123
    %1212 = vmatprep.subr.bf16.mxu0 %v442
    %1213 = vmatpush1.bf16.msra.mxu0 %v441
    %1214 = vmatprep.subr.bf16.mxu0 %v444
    %1215 = vmatpush1.bf16.msra.mxu0 %v443
    %1216 = vmatprep.subr.bf16.mxu0 %v446
    %1217 = vmatpush1.bf16.msra.mxu0 %v445
    %1218 = vmatprep.subr.bf16.mxu0 %v448
    %1219 = vmatpush1.bf16.msra.mxu0 %v447
    %1220 = vmatprep.subr.bf16.mxu0 %v450
    %1221 = vmatpush1.bf16.msra.mxu0 %v449
    %1222 = vmatprep.subr.bf16.mxu0 %v452
    %1223 = vmatpush1.bf16.msra.mxu0 %v451
    %1224 = vmatprep.subr.bf16.mxu0 %v454
    %1225 = vmatpush1.bf16.msra.mxu0 %v453
    %1226 = vmatprep.subr.bf16.mxu0 %v456
    %1227 = vmatpush1.bf16.msra.mxu0 %v455
    %1228 = vmatprep.subr.bf16.mxu0 0
    %1229 = vmatpush1.bf16.msra.mxu0 0
    %1230 = vmatprep.subr.bf16.mxu0 0
    %1231 = vmatpush1.bf16.msra.mxu0 0
    %1232 = vmatprep.subr.bf16.mxu0 0
    %1233 = vmatpush1.bf16.msra.mxu0 0
    %1234 = vmatprep.subr.bf16.mxu0 0
    %1235 = vmatpush1.bf16.msra.mxu0 0
    %1236 = vmatprep.subr.bf16.mxu0 0
    %1237 = vmatpush1.bf16.msra.mxu0 0
    %1238 = vmatprep.subr.bf16.mxu0 0
    %1239 = vmatpush1.bf16.msra.mxu0 0
    %1240 = vmatprep.subr.bf16.mxu0 0
    %1241 = vmatpush1.bf16.msra.mxu0 0
    %1242 = vmatprep.subr.bf16.mxu0 0
    %1243 = vmatpush1.bf16.msra.mxu0 0
    %1244 = vmatprep.mubr.bf16.mxu0 0
    %1245 = vmatmul.mubr.bf16.gmra.mrb[0].mxu0 %v1211
    %v1246 = vpop.f32.mrb[0].mxu0
    %v1247 = vadd.f32 %v1165, %v1246
    %v1248 = vpop.f32.mrb[0].mxu0
    %v1249 = vadd.f32 %v1167, %v1248
    %v1250 = vpop.f32.mrb[0].mxu0
    %v1251 = vpop.f32.mrb[0].mxu0
    %1252 = vdwg.mxu0
    %v1253 = vxor.u32 %v1247, 2147483648
    %v1254 = vmul.f32 %v1253, 1.442695
    %v1255 = vpow.pop %v1254
    %v1256 = vadd.f32 %v1255, 1.0
    %v1257 = vrcp.pop %v1256
    %v1258 = vmul.f32 1.0, %v1257
    %v1259 = vxor.u32 %v1249, 2147483648
    %v1260 = vmul.f32 %v1259, 1.442695
    %v1261 = vpow.pop %v1260
    %v1262 = vadd.f32 %v1261, 1.0
    %v1263 = vrcp.pop %v1262
    %v1264 = vmul.f32 1.0, %v1263
    %v1265 = vmul.f32 %v1123, %v1264
    %v1266 = vpack.c.bf16 %v1265, %v1265
    %1267 = vmatprep.subr.bf16.mxu0 0
    %1268 = vmatpush1.bf16.msra.mxu0 %v576
    %1269 = vmatprep.subr.bf16.mxu0 0
    %1270 = vmatpush1.bf16.msra.mxu0 %v577
    %1271 = vmatprep.subr.bf16.mxu0 0
    %1272 = vmatpush1.bf16.msra.mxu0 %v578
    %1273 = vmatprep.subr.bf16.mxu0 0
    %1274 = vmatpush1.bf16.msra.mxu0 %v579
    %1275 = vmatprep.subr.bf16.mxu0 0
    %1276 = vmatpush1.bf16.msra.mxu0 %v580
    %1277 = vmatprep.subr.bf16.mxu0 0
    %1278 = vmatpush1.bf16.msra.mxu0 %v581
    %1279 = vmatprep.subr.bf16.mxu0 0
    %1280 = vmatpush1.bf16.msra.mxu0 %v582
    %1281 = vmatprep.subr.bf16.mxu0 0
    %1282 = vmatpush1.bf16.msra.mxu0 %v583
    %1283 = vmatprep.subr.bf16.mxu0 0
    %1284 = vmatpush1.bf16.msra.mxu0 0
    %1285 = vmatprep.subr.bf16.mxu0 0
    %1286 = vmatpush1.bf16.msra.mxu0 0
    %1287 = vmatprep.subr.bf16.mxu0 0
    %1288 = vmatpush1.bf16.msra.mxu0 0
    %1289 = vmatprep.subr.bf16.mxu0 0
    %1290 = vmatpush1.bf16.msra.mxu0 0
    %1291 = vmatprep.subr.bf16.mxu0 0
    %1292 = vmatpush1.bf16.msra.mxu0 0
    %1293 = vmatprep.subr.bf16.mxu0 0
    %1294 = vmatpush1.bf16.msra.mxu0 0
    %1295 = vmatprep.subr.bf16.mxu0 0
    %1296 = vmatpush1.bf16.msra.mxu0 0
    %1297 = vmatprep.subr.bf16.mxu0 0
    %1298 = vmatpush1.bf16.msra.mxu0 0
    %1299 = vmatprep.mubr.bf16.mxu0 0
    %1300 = vmatmul.mubr.bf16.gmra.mrb[0].mxu0 %v1266
    %v1301 = vpop.f32.mrb[0].mxu0
    %v1302 = vadd.f32 %v1206, %v1301
    %v1303 = vpop.f32.mrb[0].mxu0
    %v1304 = vpop.f32.mrb[0].mxu0
    %v1305 = vpop.f32.mrb[0].mxu0
    %1306 = vdwg.mxu0
    %v1307 = vsub.f32 1.0, %v1258
    %v1308 = vmul.f32 %v1307, %v1302
    %v1309 = vmul.f32 %v1258, %v1123
    %v1310 = vadd.f32 %v1308, %v1309
    %v1311 = vpack.c.bf16 %v1310, %v1310
    %s1312 = scalar_lea.vmem [#allocation13], 128
    %v1313 = vld [vmem:[%s1312] sm:$0xf]
    %v1314 = vld [vmem:[%s1312 + $0x4] sm:$0xf]
    %v1315 = vld [vmem:[%s1312 + $0x8] sm:$0xf]
    %v1316 = vld [vmem:[%s1312 + $0xc] sm:$0xf]
    %v1317 = vld [vmem:[%s1312 + $0x10] sm:$0xf]
    %v1318 = vld [vmem:[%s1312 + $0x14] sm:$0xf]
    %v1319 = vld [vmem:[%s1312 + $0x18] sm:$0xf]
    %v1320 = vld [vmem:[%s1312 + $0x1c] sm:$0xf]
    %v1321 = vld [vmem:[%s1312 + $0x20] sm:$0xf]
    %v1322 = vld [vmem:[%s1312 + $0x24] sm:$0xf]
    %v1323 = vld [vmem:[%s1312 + $0x28] sm:$0xf]
    %v1324 = vld [vmem:[%s1312 + $0x2c] sm:$0xf]
    %v1325 = vld [vmem:[%s1312 + $0x30] sm:$0xf]
    %v1326 = vld [vmem:[%s1312 + $0x34] sm:$0xf]
    %v1327 = vld [vmem:[%s1312 + $0x38] sm:$0xf]
    %v1328 = vld [vmem:[%s1312 + $0x3c] sm:$0xf]
    %v1345 = vunpack.c.l.b16 %v1313
    %v1346 = vunpack.c.l.b16 %v1314
    %v1347 = vunpack.c.l.b16 %v1315
    %v1348 = vunpack.c.l.b16 %v1316
    %v1349 = vunpack.c.l.b16 %v1317
    %v1350 = vunpack.c.l.b16 %v1318
    %v1351 = vunpack.c.l.b16 %v1319
    %v1352 = vunpack.c.l.b16 %v1320
    %v1353 = vunpack.c.l.b16 %v1321
    %v1354 = vunpack.c.l.b16 %v1322
    %v1355 = vunpack.c.l.b16 %v1323
    %v1356 = vunpack.c.l.b16 %v1324
    %v1357 = vunpack.c.l.b16 %v1325
    %v1358 = vunpack.c.l.b16 %v1326
    %v1359 = vunpack.c.l.b16 %v1327
    %v1360 = vunpack.c.l.b16 %v1328
    %v1361 = vpack.c.b16 %v1346, %v1345
    %v1362 = vpack.c.b16 %v1348, %v1347
    %v1363 = vpack.c.b16 %v1350, %v1349
    %v1364 = vpack.c.b16 %v1352, %v1351
    %v1365 = vpack.c.b16 %v1354, %v1353
    %v1366 = vpack.c.b16 %v1356, %v1355
    %v1367 = vpack.c.b16 %v1358, %v1357
    %v1368 = vpack.c.b16 %v1360, %v1359
    %1377 = vmatprep.subr.bf16.mxu0 0
    %1378 = vmatpush1.bf16.msra.mxu0 %v1361
    %1379 = vmatprep.subr.bf16.mxu0 0
    %1380 = vmatpush1.bf16.msra.mxu0 %v1362
    %1381 = vmatprep.subr.bf16.mxu0 0
    %1382 = vmatpush1.bf16.msra.mxu0 %v1363
    %1383 = vmatprep.subr.bf16.mxu0 0
    %1384 = vmatpush1.bf16.msra.mxu0 %v1364
    %1385 = vmatprep.subr.bf16.mxu0 0
    %1386 = vmatpush1.bf16.msra.mxu0 %v1365
    %1387 = vmatprep.subr.bf16.mxu0 0
    %1388 = vmatpush1.bf16.msra.mxu0 %v1366
    %1389 = vmatprep.subr.bf16.mxu0 0
    %1390 = vmatpush1.bf16.msra.mxu0 %v1367
    %1391 = vmatprep.subr.bf16.mxu0 0
    %1392 = vmatpush1.bf16.msra.mxu0 %v1368
    %1393 = vmatprep.subr.bf16.mxu0 0
    %1394 = vmatpush1.bf16.msra.mxu0 0
    %1395 = vmatprep.subr.bf16.mxu0 0
    %1396 = vmatpush1.bf16.msra.mxu0 0
    %1397 = vmatprep.subr.bf16.mxu0 0
    %1398 = vmatpush1.bf16.msra.mxu0 0
    %1399 = vmatprep.subr.bf16.mxu0 0
    %1400 = vmatpush1.bf16.msra.mxu0 0
    %1401 = vmatprep.subr.bf16.mxu0 0
    %1402 = vmatpush1.bf16.msra.mxu0 0
    %1403 = vmatprep.subr.bf16.mxu0 0
    %1404 = vmatpush1.bf16.msra.mxu0 0
    %1405 = vmatprep.subr.bf16.mxu0 0
    %1406 = vmatpush1.bf16.msra.mxu0 0
    %1407 = vmatprep.subr.bf16.mxu0 0
    %1408 = vmatpush1.bf16.msra.mxu0 0
    %1409 = vmatprep.mubr.bf16.mxu0 0
    %1410 = vmatmul.mubr.bf16.gmra.mrb[0].mxu0 %v1311
    %v1411 = vpop.f32.mrb[0].mxu0
    %v1412 = vadd.f32 0.0, %v1411
    %v1413 = vpop.f32.mrb[0].mxu0
    %v1414 = vpop.f32.mrb[0].mxu0
    %v1415 = vpop.f32.mrb[0].mxu0
    %1416 = vdwg.mxu0
    %v1417 = vadd.f32 %v1074, %v1412
    %s1418 = sld [smem:[#allocation6 + $0x3]]
    %1419 = vmatprep.subr.bf16.mxu0 0
    %1420 = vmatpush1.bf16.msra.mxu0 %v193
    %1421 = vmatprep.subr.bf16.mxu0 0
    %1422 = vmatpush1.bf16.msra.mxu0 %v194
    %1423 = vmatprep.subr.bf16.mxu0 0
    %1424 = vmatpush1.bf16.msra.mxu0 %v195
    %1425 = vmatprep.subr.bf16.mxu0 0
    %1426 = vmatpush1.bf16.msra.mxu0 %v196
    %1427 = vmatprep.subr.bf16.mxu0 0
    %1428 = vmatpush1.bf16.msra.mxu0 %v197
    %1429 = vmatprep.subr.bf16.mxu0 0
    %1430 = vmatpush1.bf16.msra.mxu0 %v198
    %1431 = vmatprep.subr.bf16.mxu0 0
    %1432 = vmatpush1.bf16.msra.mxu0 %v199
    %1433 = vmatprep.subr.bf16.mxu0 0
    %1434 = vmatpush1.bf16.msra.mxu0 %v200
    %1435 = vmatprep.subr.bf16.mxu0 0
    %1436 = vmatpush1.bf16.msra.mxu0 0
    %1437 = vmatprep.subr.bf16.mxu0 0
    %1438 = vmatpush1.bf16.msra.mxu0 0
    %1439 = vmatprep.subr.bf16.mxu0 0
    %1440 = vmatpush1.bf16.msra.mxu0 0
    %1441 = vmatprep.subr.bf16.mxu0 0
    %1442 = vmatpush1.bf16.msra.mxu0 0
    %1443 = vmatprep.subr.bf16.mxu0 0
    %1444 = vmatpush1.bf16.msra.mxu0 0
    %1445 = vmatprep.subr.bf16.mxu0 0
    %1446 = vmatpush1.bf16.msra.mxu0 0
    %1447 = vmatprep.subr.bf16.mxu0 0
    %1448 = vmatpush1.bf16.msra.mxu0 0
    %1449 = vmatprep.subr.bf16.mxu0 0
    %1450 = vmatpush1.bf16.msra.mxu0 0
    %1451 = vmatprep.mubr.bf16.mxu0 0
    %1452 = vmatmul.mubr.bf16.gmra.mrb[0].mxu0 %v1311
    %v1453 = vpop.f32.mrb[0].mxu0
    %v1454 = vadd.f32 %v159, %v1453
    %v1455 = vpop.f32.mrb[0].mxu0
    %v1456 = vpop.f32.mrb[0].mxu0
    %v1457 = vpop.f32.mrb[0].mxu0
    %1458 = vdwg.mxu0
    %v1459 = vtanh.pop %v1454
    %v1460 = vstv %s1418
    %v1461 = vmul.f32 %v1460, %v1459
    %v1462 = vadd.f32 %v1310, %v1461
    %s1463 = scalar_lea.vmem [#allocation2], 24
    %v1464 = vld [vmem:[%s1463] sm:$0xff]
    %v1465 = vpack.c.bf16 %v1464, %v1464
    %v1467 = vsel %vm291, %v1465, 0
    %1469 = vmatprep.subr.bf16.mxu0 %v286
    %1470 = vmatpush1.bf16.msra.mxu0 %v285
    %1471 = vmatprep.subr.bf16.mxu0 0
    %1472 = vmatpush1.bf16.msra.mxu0 0
    %1473 = vmatprep.subr.bf16.mxu0 0
    %1474 = vmatpush1.bf16.msra.mxu0 0
    %1475 = vmatprep.subr.bf16.mxu0 0
    %1476 = vmatpush1.bf16.msra.mxu0 0
    %1477 = vmatprep.subr.bf16.mxu0 0
    %1478 = vmatpush1.bf16.msra.mxu0 0
    %1479 = vmatprep.subr.bf16.mxu0 0
    %1480 = vmatpush1.bf16.msra.mxu0 0
    %1481 = vmatprep.subr.bf16.mxu0 0
    %1482 = vmatpush1.bf16.msra.mxu0 0
    %1483 = vmatprep.subr.bf16.mxu0 0
    %1484 = vmatpush1.bf16.msra.mxu0 0
    %1485 = vmatprep.subr.bf16.mxu0 0
    %1486 = vmatpush1.bf16.msra.mxu0 0
    %1487 = vmatprep.subr.bf16.mxu0 0
    %1488 = vmatpush1.bf16.msra.mxu0 0
    %1489 = vmatprep.subr.bf16.mxu0 0
    %1490 = vmatpush1.bf16.msra.mxu0 0
    %1491 = vmatprep.subr.bf16.mxu0 0
    %1492 = vmatpush1.bf16.msra.mxu0 0
    %1493 = vmatprep.subr.bf16.mxu0 0
    %1494 = vmatpush1.bf16.msra.mxu0 0
    %1495 = vmatprep.subr.bf16.mxu0 0
    %1496 = vmatpush1.bf16.msra.mxu0 0
    %1497 = vmatprep.subr.bf16.mxu0 0
    %1498 = vmatpush1.bf16.msra.mxu0 0
    %1499 = vmatprep.subr.bf16.mxu0 0
    %1500 = vmatpush1.bf16.msra.mxu0 0
    %1501 = vmatprep.mubr.bf16.mxu0 0
    %1502 = vmatmul.mubr.bf16.gmra.mrb[0].mxu0 %v1467
    %v1503 = vpop.f32.mrb[0].mxu0
    %v1504 = vadd.f32 %v263, %v1503
    %v1505 = vpop.f32.mrb[0].mxu0
    %v1506 = vadd.f32 %v267, %v1505
    %v1507 = vpop.f32.mrb[0].mxu0
    %v1508 = vpop.f32.mrb[0].mxu0
    %1509 = vdwg.mxu0
    %1510 = vmatprep.subr.bf16.mxu0 0
    %1511 = vmatpush1.bf16.msra.mxu0 %v287
    %1512 = vmatprep.subr.bf16.mxu0 0
    %1513 = vmatpush1.bf16.msra.mxu0 0
    %1514 = vmatprep.subr.bf16.mxu0 0
    %1515 = vmatpush1.bf16.msra.mxu0 0
    %1516 = vmatprep.subr.bf16.mxu0 0
    %1517 = vmatpush1.bf16.msra.mxu0 0
    %1518 = vmatprep.subr.bf16.mxu0 0
    %1519 = vmatpush1.bf16.msra.mxu0 0
    %1520 = vmatprep.subr.bf16.mxu0 0
    %1521 = vmatpush1.bf16.msra.mxu0 0
    %1522 = vmatprep.subr.bf16.mxu0 0
    %1523 = vmatpush1.bf16.msra.mxu0 0
    %1524 = vmatprep.subr.bf16.mxu0 0
    %1525 = vmatpush1.bf16.msra.mxu0 0
    %1526 = vmatprep.subr.bf16.mxu0 0
    %1527 = vmatpush1.bf16.msra.mxu0 0
    %1528 = vmatprep.subr.bf16.mxu0 0
    %1529 = vmatpush1.bf16.msra.mxu0 0
    %1530 = vmatprep.subr.bf16.mxu0 0
    %1531 = vmatpush1.bf16.msra.mxu0 0
    %1532 = vmatprep.subr.bf16.mxu0 0
    %1533 = vmatpush1.bf16.msra.mxu0 0
    %1534 = vmatprep.subr.bf16.mxu0 0
    %1535 = vmatpush1.bf16.msra.mxu0 0
    %1536 = vmatprep.subr.bf16.mxu0 0
    %1537 = vmatpush1.bf16.msra.mxu0 0
    %1538 = vmatprep.subr.bf16.mxu0 0
    %1539 = vmatpush1.bf16.msra.mxu0 0
    %1540 = vmatprep.subr.bf16.mxu0 0
    %1541 = vmatpush1.bf16.msra.mxu0 0
    %1542 = vmatprep.mubr.bf16.mxu0 0
    %1543 = vmatmul.mubr.bf16.gmra.mrb[0].mxu0 %v1467
    %v1544 = vpop.f32.mrb[0].mxu0
    %v1545 = vadd.f32 %v271, %v1544
    %v1546 = vpop.f32.mrb[0].mxu0
    %v1547 = vpop.f32.mrb[0].mxu0
    %v1548 = vpop.f32.mrb[0].mxu0
    %1549 = vdwg.mxu0
    %v1550 = vpack.c.bf16 %v1462, %v1462
    %1551 = vmatprep.subr.bf16.mxu0 %v442
    %1552 = vmatpush1.bf16.msra.mxu0 %v441
    %1553 = vmatprep.subr.bf16.mxu0 %v444
    %1554 = vmatpush1.bf16.msra.mxu0 %v443
    %1555 = vmatprep.subr.bf16.mxu0 %v446
    %1556 = vmatpush1.bf16.msra.mxu0 %v445
    %1557 = vmatprep.subr.bf16.mxu0 %v448
    %1558 = vmatpush1.bf16.msra.mxu0 %v447
    %1559 = vmatprep.subr.bf16.mxu0 %v450
    %1560 = vmatpush1.bf16.msra.mxu0 %v449
    %1561 = vmatprep.subr.bf16.mxu0 %v452
    %1562 = vmatpush1.bf16.msra.mxu0 %v451
    %1563 = vmatprep.subr.bf16.mxu0 %v454
    %1564 = vmatpush1.bf16.msra.mxu0 %v453
    %1565 = vmatprep.subr.bf16.mxu0 %v456
    %1566 = vmatpush1.bf16.msra.mxu0 %v455
    %1567 = vmatprep.subr.bf16.mxu0 0
    %1568 = vmatpush1.bf16.msra.mxu0 0
    %1569 = vmatprep.subr.bf16.mxu0 0
    %1570 = vmatpush1.bf16.msra.mxu0 0
    %1571 = vmatprep.subr.bf16.mxu0 0
    %1572 = vmatpush1.bf16.msra.mxu0 0
    %1573 = vmatprep.subr.bf16.mxu0 0
    %1574 = vmatpush1.bf16.msra.mxu0 0
    %1575 = vmatprep.subr.bf16.mxu0 0
    %1576 = vmatpush1.bf16.msra.mxu0 0
    %1577 = vmatprep.subr.bf16.mxu0 0
    %1578 = vmatpush1.bf16.msra.mxu0 0
    %1579 = vmatprep.subr.bf16.mxu0 0
    %1580 = vmatpush1.bf16.msra.mxu0 0
    %1581 = vmatprep.subr.bf16.mxu0 0
    %1582 = vmatpush1.bf16.msra.mxu0 0
    %1583 = vmatprep.mubr.bf16.mxu0 0
    %1584 = vmatmul.mubr.bf16.gmra.mrb[0].mxu0 %v1550
    %v1585 = vpop.f32.mrb[0].mxu0
    %v1586 = vadd.f32 %v1504, %v1585
    %v1587 = vpop.f32.mrb[0].mxu0
    %v1588 = vadd.f32 %v1506, %v1587
    %v1589 = vpop.f32.mrb[0].mxu0
    %v1590 = vpop.f32.mrb[0].mxu0
    %1591 = vdwg.mxu0
    %v1592 = vxor.u32 %v1586, 2147483648
    %v1593 = vmul.f32 %v1592, 1.442695
    %v1594 = vpow.pop %v1593
    %v1595 = vadd.f32 %v1594, 1.0
    %v1596 = vrcp.pop %v1595
    %v1597 = vmul.f32 1.0, %v1596
    %v1598 = vxor.u32 %v1588, 2147483648
    %v1599 = vmul.f32 %v1598, 1.442695
    %v1600 = vpow.pop %v1599
    %v1601 = vadd.f32 %v1600, 1.0
    %v1602 = vrcp.pop %v1601
    %v1603 = vmul.f32 1.0, %v1602
    %v1604 = vmul.f32 %v1462, %v1603
    %v1605 = vpack.c.bf16 %v1604, %v1604
    %1606 = vmatprep.subr.bf16.mxu0 0
    %1607 = vmatpush1.bf16.msra.mxu0 %v576
    %1608 = vmatprep.subr.bf16.mxu0 0
    %1609 = vmatpush1.bf16.msra.mxu0 %v577
    %1610 = vmatprep.subr.bf16.mxu0 0
    %1611 = vmatpush1.bf16.msra.mxu0 %v578
    %1612 = vmatprep.subr.bf16.mxu0 0
    %1613 = vmatpush1.bf16.msra.mxu0 %v579
    %1614 = vmatprep.subr.bf16.mxu0 0
    %1615 = vmatpush1.bf16.msra.mxu0 %v580
    %1616 = vmatprep.subr.bf16.mxu0 0
    %1617 = vmatpush1.bf16.msra.mxu0 %v581
    %1618 = vmatprep.subr.bf16.mxu0 0
    %1619 = vmatpush1.bf16.msra.mxu0 %v582
    %1620 = vmatprep.subr.bf16.mxu0 0
    %1621 = vmatpush1.bf16.msra.mxu0 %v583
    %1622 = vmatprep.subr.bf16.mxu0 0
    %1623 = vmatpush1.bf16.msra.mxu0 0
    %1624 = vmatprep.subr.bf16.mxu0 0
    %1625 = vmatpush1.bf16.msra.mxu0 0
    %1626 = vmatprep.subr.bf16.mxu0 0
    %1627 = vmatpush1.bf16.msra.mxu0 0
    %1628 = vmatprep.subr.bf16.mxu0 0
    %1629 = vmatpush1.bf16.msra.mxu0 0
    %1630 = vmatprep.subr.bf16.mxu0 0
    %1631 = vmatpush1.bf16.msra.mxu0 0
    %1632 = vmatprep.subr.bf16.mxu0 0
    %1633 = vmatpush1.bf16.msra.mxu0 0
    %1634 = vmatprep.subr.bf16.mxu0 0
    %1635 = vmatpush1.bf16.msra.mxu0 0
    %1636 = vmatprep.subr.bf16.mxu0 0
    %1637 = vmatpush1.bf16.msra.mxu0 0
    %1638 = vmatprep.mubr.bf16.mxu0 0
    %1639 = vmatmul.mubr.bf16.gmra.mrb[0].mxu0 %v1605
    %v1640 = vpop.f32.mrb[0].mxu0
    %v1641 = vadd.f32 %v1545, %v1640
    %v1642 = vpop.f32.mrb[0].mxu0
    %v1643 = vpop.f32.mrb[0].mxu0
    %v1644 = vpop.f32.mrb[0].mxu0
    %1645 = vdwg.mxu0
    %v1646 = vsub.f32 1.0, %v1597
    %v1647 = vmul.f32 %v1646, %v1641
    %v1648 = vmul.f32 %v1597, %v1462
    %v1649 = vadd.f32 %v1647, %v1648
    %v1650 = vpack.c.bf16 %v1649, %v1649
    %s1651 = scalar_lea.vmem [#allocation13], 192
    %v1652 = vld [vmem:[%s1651] sm:$0xf]
    %v1653 = vld [vmem:[%s1651 + $0x4] sm:$0xf]
    %v1654 = vld [vmem:[%s1651 + $0x8] sm:$0xf]
    %v1655 = vld [vmem:[%s1651 + $0xc] sm:$0xf]
    %v1656 = vld [vmem:[%s1651 + $0x10] sm:$0xf]
    %v1657 = vld [vmem:[%s1651 + $0x14] sm:$0xf]
    %v1658 = vld [vmem:[%s1651 + $0x18] sm:$0xf]
    %v1659 = vld [vmem:[%s1651 + $0x1c] sm:$0xf]
    %v1660 = vld [vmem:[%s1651 + $0x20] sm:$0xf]
    %v1661 = vld [vmem:[%s1651 + $0x24] sm:$0xf]
    %v1662 = vld [vmem:[%s1651 + $0x28] sm:$0xf]
    %v1663 = vld [vmem:[%s1651 + $0x2c] sm:$0xf]
    %v1664 = vld [vmem:[%s1651 + $0x30] sm:$0xf]
    %v1665 = vld [vmem:[%s1651 + $0x34] sm:$0xf]
    %v1666 = vld [vmem:[%s1651 + $0x38] sm:$0xf]
    %v1667 = vld [vmem:[%s1651 + $0x3c] sm:$0xf]
    %v1684 = vunpack.c.l.b16 %v1652
    %v1685 = vunpack.c.l.b16 %v1653
    %v1686 = vunpack.c.l.b16 %v1654
    %v1687 = vunpack.c.l.b16 %v1655
    %v1688 = vunpack.c.l.b16 %v1656
    %v1689 = vunpack.c.l.b16 %v1657
    %v1690 = vunpack.c.l.b16 %v1658
    %v1691 = vunpack.c.l.b16 %v1659
    %v1692 = vunpack.c.l.b16 %v1660
    %v1693 = vunpack.c.l.b16 %v1661
    %v1694 = vunpack.c.l.b16 %v1662
    %v1695 = vunpack.c.l.b16 %v1663
    %v1696 = vunpack.c.l.b16 %v1664
    %v1697 = vunpack.c.l.b16 %v1665
    %v1698 = vunpack.c.l.b16 %v1666
    %v1699 = vunpack.c.l.b16 %v1667
    %v1700 = vpack.c.b16 %v1685, %v1684
    %v1701 = vpack.c.b16 %v1687, %v1686
    %v1702 = vpack.c.b16 %v1689, %v1688
    %v1703 = vpack.c.b16 %v1691, %v1690
    %v1704 = vpack.c.b16 %v1693, %v1692
    %v1705 = vpack.c.b16 %v1695, %v1694
    %v1706 = vpack.c.b16 %v1697, %v1696
    %v1707 = vpack.c.b16 %v1699, %v1698
    %1716 = vmatprep.subr.bf16.mxu0 0
    %1717 = vmatpush1.bf16.msra.mxu0 %v1700
    %1718 = vmatprep.subr.bf16.mxu0 0
    %1719 = vmatpush1.bf16.msra.mxu0 %v1701
    %1720 = vmatprep.subr.bf16.mxu0 0
    %1721 = vmatpush1.bf16.msra.mxu0 %v1702
    %1722 = vmatprep.subr.bf16.mxu0 0
    %1723 = vmatpush1.bf16.msra.mxu0 %v1703
    %1724 = vmatprep.subr.bf16.mxu0 0
    %1725 = vmatpush1.bf16.msra.mxu0 %v1704
    %1726 = vmatprep.subr.bf16.mxu0 0
    %1727 = vmatpush1.bf16.msra.mxu0 %v1705
    %1728 = vmatprep.subr.bf16.mxu0 0
    %1729 = vmatpush1.bf16.msra.mxu0 %v1706
    %1730 = vmatprep.subr.bf16.mxu0 0
    %1731 = vmatpush1.bf16.msra.mxu0 %v1707
    %1732 = vmatprep.subr.bf16.mxu0 0
    %1733 = vmatpush1.bf16.msra.mxu0 0
    %1734 = vmatprep.subr.bf16.mxu0 0
    %1735 = vmatpush1.bf16.msra.mxu0 0
    %1736 = vmatprep.subr.bf16.mxu0 0
    %1737 = vmatpush1.bf16.msra.mxu0 0
    %1738 = vmatprep.subr.bf16.mxu0 0
    %1739 = vmatpush1.bf16.msra.mxu0 0
    %1740 = vmatprep.subr.bf16.mxu0 0
    %1741 = vmatpush1.bf16.msra.mxu0 0
    %1742 = vmatprep.subr.bf16.mxu0 0
    %1743 = vmatpush1.bf16.msra.mxu0 0
    %1744 = vmatprep.subr.bf16.mxu0 0
    %1745 = vmatpush1.bf16.msra.mxu0 0
    %1746 = vmatprep.subr.bf16.mxu0 0
    %1747 = vmatpush1.bf16.msra.mxu0 0
    %1748 = vmatprep.mubr.bf16.mxu0 0
    %1749 = vmatmul.mubr.bf16.gmra.mrb[0].mxu0 %v1650
    %v1750 = vpop.f32.mrb[0].mxu0
    %v1751 = vadd.f32 0.0, %v1750
    %v1752 = vpop.f32.mrb[0].mxu0
    %v1753 = vpop.f32.mrb[0].mxu0
    %v1754 = vpop.f32.mrb[0].mxu0
    %1755 = vdwg.mxu0
    %v1756 = vadd.f32 %v1417, %v1751
    %s1757 = sld [smem:[#allocation6 + $0x4]]
    %1758 = vmatprep.subr.bf16.mxu0 0
    %1759 = vmatpush1.bf16.msra.mxu0 %v193
    %1760 = vmatprep.subr.bf16.mxu0 0
    %1761 = vmatpush1.bf16.msra.mxu0 %v194
    %1762 = vmatprep.subr.bf16.mxu0 0
    %1763 = vmatpush1.bf16.msra.mxu0 %v195
    %1764 = vmatprep.subr.bf16.mxu0 0
    %1765 = vmatpush1.bf16.msra.mxu0 %v196
    %1766 = vmatprep.subr.bf16.mxu0 0
    %1767 = vmatpush1.bf16.msra.mxu0 %v197
    %1768 = vmatprep.subr.bf16.mxu0 0
    %1769 = vmatpush1.bf16.msra.mxu0 %v198
    %1770 = vmatprep.subr.bf16.mxu0 0
    %1771 = vmatpush1.bf16.msra.mxu0 %v199
    %1772 = vmatprep.subr.bf16.mxu0 0
    %1773 = vmatpush1.bf16.msra.mxu0 %v200
    %1774 = vmatprep.subr.bf16.mxu0 0
    %1775 = vmatpush1.bf16.msra.mxu0 0
    %1776 = vmatprep.subr.bf16.mxu0 0
    %1777 = vmatpush1.bf16.msra.mxu0 0
    %1778 = vmatprep.subr.bf16.mxu0 0
    %1779 = vmatpush1.bf16.msra.mxu0 0
    %1780 = vmatprep.subr.bf16.mxu0 0
    %1781 = vmatpush1.bf16.msra.mxu0 0
    %1782 = vmatprep.subr.bf16.mxu0 0
    %1783 = vmatpush1.bf16.msra.mxu0 0
    %1784 = vmatprep.subr.bf16.mxu0 0
    %1785 = vmatpush1.bf16.msra.mxu0 0
    %1786 = vmatprep.subr.bf16.mxu0 0
    %1787 = vmatpush1.bf16.msra.mxu0 0
    %1788 = vmatprep.subr.bf16.mxu0 0
    %1789 = vmatpush1.bf16.msra.mxu0 0
    %1790 = vmatprep.mubr.bf16.mxu0 0
    %1791 = vmatmul.mubr.bf16.gmra.mrb[0].mxu0 %v1650
    %v1792 = vpop.f32.mrb[0].mxu0
    %v1793 = vadd.f32 %v159, %v1792
    %v1794 = vpop.f32.mrb[0].mxu0
    %v1795 = vpop.f32.mrb[0].mxu0
    %v1796 = vpop.f32.mrb[0].mxu0
    %1797 = vdwg.mxu0
    %v1798 = vtanh.pop %v1793
    %v1799 = vstv %s1757
    %v1800 = vmul.f32 %v1799, %v1798
    %v1801 = vadd.f32 %v1649, %v1800
    %s1802 = scalar_lea.vmem [#allocation2], 32
    %v1803 = vld [vmem:[%s1802] sm:$0xff]
    %v1804 = vpack.c.bf16 %v1803, %v1803
    %v1806 = vsel %vm291, %v1804, 0
    %1808 = vmatprep.subr.bf16.mxu0 %v286
    %1809 = vmatpush1.bf16.msra.mxu0 %v285
    %1810 = vmatprep.subr.bf16.mxu0 0
    %1811 = vmatpush1.bf16.msra.mxu0 0
    %1812 = vmatprep.subr.bf16.mxu0 0
    %1813 = vmatpush1.bf16.msra.mxu0 0
    %1814 = vmatprep.subr.bf16.mxu0 0
    %1815 = vmatpush1.bf16.msra.mxu0 0
    %1816 = vmatprep.subr.bf16.mxu0 0
    %1817 = vmatpush1.bf16.msra.mxu0 0
    %1818 = vmatprep.subr.bf16.mxu0 0
    %1819 = vmatpush1.bf16.msra.mxu0 0
    %1820 = vmatprep.subr.bf16.mxu0 0
    %1821 = vmatpush1.bf16.msra.mxu0 0
    %1822 = vmatprep.subr.bf16.mxu0 0
    %1823 = vmatpush1.bf16.msra.mxu0 0
    %1824 = vmatprep.subr.bf16.mxu0 0
    %1825 = vmatpush1.bf16.msra.mxu0 0
    %1826 = vmatprep.subr.bf16.mxu0 0
    %1827 = vmatpush1.bf16.msra.mxu0 0
    %1828 = vmatprep.subr.bf16.mxu0 0
    %1829 = vmatpush1.bf16.msra.mxu0 0
    %1830 = vmatprep.subr.bf16.mxu0 0
    %1831 = vmatpush1.bf16.msra.mxu0 0
    %1832 = vmatprep.subr.bf16.mxu0 0
    %1833 = vmatpush1.bf16.msra.mxu0 0
    %1834 = vmatprep.subr.bf16.mxu0 0
    %1835 = vmatpush1.bf16.msra.mxu0 0
    %1836 = vmatprep.subr.bf16.mxu0 0
    %1837 = vmatpush1.bf16.msra.mxu0 0
    %1838 = vmatprep.subr.bf16.mxu0 0
    %1839 = vmatpush1.bf16.msra.mxu0 0
    %1840 = vmatprep.mubr.bf16.mxu0 0
    %1841 = vmatmul.mubr.bf16.gmra.mrb[0].mxu0 %v1806
    %v1842 = vpop.f32.mrb[0].mxu0
    %v1843 = vadd.f32 %v263, %v1842
    %v1844 = vpop.f32.mrb[0].mxu0
    %v1845 = vadd.f32 %v267, %v1844
    %v1846 = vpop.f32.mrb[0].mxu0
    %v1847 = vpop.f32.mrb[0].mxu0
    %1848 = vdwg.mxu0
    %1849 = vmatprep.subr.bf16.mxu0 0
    %1850 = vmatpush1.bf16.msra.mxu0 %v287
    %1851 = vmatprep.subr.bf16.mxu0 0
    %1852 = vmatpush1.bf16.msra.mxu0 0
    %1853 = vmatprep.subr.bf16.mxu0 0
    %1854 = vmatpush1.bf16.msra.mxu0 0
    %1855 = vmatprep.subr.bf16.mxu0 0
    %1856 = vmatpush1.bf16.msra.mxu0 0
    %1857 = vmatprep.subr.bf16.mxu0 0
    %1858 = vmatpush1.bf16.msra.mxu0 0
    %1859 = vmatprep.subr.bf16.mxu0 0
    %1860 = vmatpush1.bf16.msra.mxu0 0
    %1861 = vmatprep.subr.bf16.mxu0 0
    %1862 = vmatpush1.bf16.msra.mxu0 0
    %1863 = vmatprep.subr.bf16.mxu0 0
    %1864 = vmatpush1.bf16.msra.mxu0 0
    %1865 = vmatprep.subr.bf16.mxu0 0
    %1866 = vmatpush1.bf16.msra.mxu0 0
    %1867 = vmatprep.subr.bf16.mxu0 0
    %1868 = vmatpush1.bf16.msra.mxu0 0
    %1869 = vmatprep.subr.bf16.mxu0 0
    %1870 = vmatpush1.bf16.msra.mxu0 0
    %1871 = vmatprep.subr.bf16.mxu0 0
    %1872 = vmatpush1.bf16.msra.mxu0 0
    %1873 = vmatprep.subr.bf16.mxu0 0
    %1874 = vmatpush1.bf16.msra.mxu0 0
    %1875 = vmatprep.subr.bf16.mxu0 0
    %1876 = vmatpush1.bf16.msra.mxu0 0
    %1877 = vmatprep.subr.bf16.mxu0 0
    %1878 = vmatpush1.bf16.msra.mxu0 0
    %1879 = vmatprep.subr.bf16.mxu0 0
    %1880 = vmatpush1.bf16.msra.mxu0 0
    %1881 = vmatprep.mubr.bf16.mxu0 0
    %1882 = vmatmul.mubr.bf16.gmra.mrb[0].mxu0 %v1806
    %v1883 = vpop.f32.mrb[0].mxu0
    %v1884 = vadd.f32 %v271, %v1883
    %v1885 = vpop.f32.mrb[0].mxu0
    %v1886 = vpop.f32.mrb[0].mxu0
    %v1887 = vpop.f32.mrb[0].mxu0
    %1888 = vdwg.mxu0
    %v1889 = vpack.c.bf16 %v1801, %v1801
    %1890 = vmatprep.subr.bf16.mxu0 %v442
    %1891 = vmatpush1.bf16.msra.mxu0 %v441
    %1892 = vmatprep.subr.bf16.mxu0 %v444
    %1893 = vmatpush1.bf16.msra.mxu0 %v443
    %1894 = vmatprep.subr.bf16.mxu0 %v446
    %1895 = vmatpush1.bf16.msra.mxu0 %v445
    %1896 = vmatprep.subr.bf16.mxu0 %v448
    %1897 = vmatpush1.bf16.msra.mxu0 %v447
    %1898 = vmatprep.subr.bf16.mxu0 %v450
    %1899 = vmatpush1.bf16.msra.mxu0 %v449
    %1900 = vmatprep.subr.bf16.mxu0 %v452
    %1901 = vmatpush1.bf16.msra.mxu0 %v451
    %1902 = vmatprep.subr.bf16.mxu0 %v454
    %1903 = vmatpush1.bf16.msra.mxu0 %v453
    %1904 = vmatprep.subr.bf16.mxu0 %v456
    %1905 = vmatpush1.bf16.msra.mxu0 %v455
    %1906 = vmatprep.subr.bf16.mxu0 0
    %1907 = vmatpush1.bf16.msra.mxu0 0
    %1908 = vmatprep.subr.bf16.mxu0 0
    %1909 = vmatpush1.bf16.msra.mxu0 0
    %1910 = vmatprep.subr.bf16.mxu0 0
    %1911 = vmatpush1.bf16.msra.mxu0 0
    %1912 = vmatprep.subr.bf16.mxu0 0
    %1913 = vmatpush1.bf16.msra.mxu0 0
    %1914 = vmatprep.subr.bf16.mxu0 0
    %1915 = vmatpush1.bf16.msra.mxu0 0
    %1916 = vmatprep.subr.bf16.mxu0 0
    %1917 = vmatpush1.bf16.msra.mxu0 0
    %1918 = vmatprep.subr.bf16.mxu0 0
    %1919 = vmatpush1.bf16.msra.mxu0 0
    %1920 = vmatprep.subr.bf16.mxu0 0
    %1921 = vmatpush1.bf16.msra.mxu0 0
    %1922 = vmatprep.mubr.bf16.mxu0 0
    %1923 = vmatmul.mubr.bf16.gmra.mrb[0].mxu0 %v1889
    %v1924 = vpop.f32.mrb[0].mxu0
    %v1925 = vadd.f32 %v1843, %v1924
    %v1926 = vpop.f32.mrb[0].mxu0
    %v1927 = vadd.f32 %v1845, %v1926
    %v1928 = vpop.f32.mrb[0].mxu0
    %v1929 = vpop.f32.mrb[0].mxu0
    %1930 = vdwg.mxu0
    %v1931 = vxor.u32 %v1925, 2147483648
    %v1932 = vmul.f32 %v1931, 1.442695
    %v1933 = vpow.pop %v1932
    %v1934 = vadd.f32 %v1933, 1.0
    %v1935 = vrcp.pop %v1934
    %v1936 = vmul.f32 1.0, %v1935
    %v1937 = vxor.u32 %v1927, 2147483648
    %v1938 = vmul.f32 %v1937, 1.442695
    %v1939 = vpow.pop %v1938
    %v1940 = vadd.f32 %v1939, 1.0
    %v1941 = vrcp.pop %v1940
    %v1942 = vmul.f32 1.0, %v1941
    %v1943 = vmul.f32 %v1801, %v1942
    %v1944 = vpack.c.bf16 %v1943, %v1943
    %1945 = vmatprep.subr.bf16.mxu0 0
    %1946 = vmatpush1.bf16.msra.mxu0 %v576
    %1947 = vmatprep.subr.bf16.mxu0 0
    %1948 = vmatpush1.bf16.msra.mxu0 %v577
    %1949 = vmatprep.subr.bf16.mxu0 0
    %1950 = vmatpush1.bf16.msra.mxu0 %v578
    %1951 = vmatprep.subr.bf16.mxu0 0
    %1952 = vmatpush1.bf16.msra.mxu0 %v579
    %1953 = vmatprep.subr.bf16.mxu0 0
    %1954 = vmatpush1.bf16.msra.mxu0 %v580
    %1955 = vmatprep.subr.bf16.mxu0 0
    %1956 = vmatpush1.bf16.msra.mxu0 %v581
    %1957 = vmatprep.subr.bf16.mxu0 0
    %1958 = vmatpush1.bf16.msra.mxu0 %v582
    %1959 = vmatprep.subr.bf16.mxu0 0
    %1960 = vmatpush1.bf16.msra.mxu0 %v583
    %1961 = vmatprep.subr.bf16.mxu0 0
    %1962 = vmatpush1.bf16.msra.mxu0 0
    %1963 = vmatprep.subr.bf16.mxu0 0
    %1964 = vmatpush1.bf16.msra.mxu0 0
    %1965 = vmatprep.subr.bf16.mxu0 0
    %1966 = vmatpush1.bf16.msra.mxu0 0
    %1967 = vmatprep.subr.bf16.mxu0 0
    %1968 = vmatpush1.bf16.msra.mxu0 0
    %1969 = vmatprep.subr.bf16.mxu0 0
    %1970 = vmatpush1.bf16.msra.mxu0 0
    %1971 = vmatprep.subr.bf16.mxu0 0
    %1972 = vmatpush1.bf16.msra.mxu0 0
    %1973 = vmatprep.subr.bf16.mxu0 0
    %1974 = vmatpush1.bf16.msra.mxu0 0
    %1975 = vmatprep.subr.bf16.mxu0 0
    %1976 = vmatpush1.bf16.msra.mxu0 0
    %1977 = vmatprep.mubr.bf16.mxu0 0
    %1978 = vmatmul.mubr.bf16.gmra.mrb[0].mxu0 %v1944
    %v1979 = vpop.f32.mrb[0].mxu0
    %v1980 = vadd.f32 %v1884, %v1979
    %v1981 = vpop.f32.mrb[0].mxu0
    %v1982 = vpop.f32.mrb[0].mxu0
    %v1983 = vpop.f32.mrb[0].mxu0
    %1984 = vdwg.mxu0
    %v1985 = vsub.f32 1.0, %v1936
    %v1986 = vmul.f32 %v1985, %v1980
    %v1987 = vmul.f32 %v1936, %v1801
    %v1988 = vadd.f32 %v1986, %v1987
    %v1989 = vpack.c.bf16 %v1988, %v1988
    %s1990 = scalar_lea.vmem [#allocation13], 256
    %v1991 = vld [vmem:[%s1990] sm:$0xf]
    %v1992 = vld [vmem:[%s1990 + $0x4] sm:$0xf]
    %v1993 = vld [vmem:[%s1990 + $0x8] sm:$0xf]
    %v1994 = vld [vmem:[%s1990 + $0xc] sm:$0xf]
    %v1995 = vld [vmem:[%s1990 + $0x10] sm:$0xf]
    %v1996 = vld [vmem:[%s1990 + $0x14] sm:$0xf]
    %v1997 = vld [vmem:[%s1990 + $0x18] sm:$0xf]
    %v1998 = vld [vmem:[%s1990 + $0x1c] sm:$0xf]
    %v1999 = vld [vmem:[%s1990 + $0x20] sm:$0xf]
    %v2000 = vld [vmem:[%s1990 + $0x24] sm:$0xf]
    %v2001 = vld [vmem:[%s1990 + $0x28] sm:$0xf]
    %v2002 = vld [vmem:[%s1990 + $0x2c] sm:$0xf]
    %v2003 = vld [vmem:[%s1990 + $0x30] sm:$0xf]
    %v2004 = vld [vmem:[%s1990 + $0x34] sm:$0xf]
    %v2005 = vld [vmem:[%s1990 + $0x38] sm:$0xf]
    %v2006 = vld [vmem:[%s1990 + $0x3c] sm:$0xf]
    %v2023 = vunpack.c.l.b16 %v1991
    %v2024 = vunpack.c.l.b16 %v1992
    %v2025 = vunpack.c.l.b16 %v1993
    %v2026 = vunpack.c.l.b16 %v1994
    %v2027 = vunpack.c.l.b16 %v1995
    %v2028 = vunpack.c.l.b16 %v1996
    %v2029 = vunpack.c.l.b16 %v1997
    %v2030 = vunpack.c.l.b16 %v1998
    %v2031 = vunpack.c.l.b16 %v1999
    %v2032 = vunpack.c.l.b16 %v2000
    %v2033 = vunpack.c.l.b16 %v2001
    %v2034 = vunpack.c.l.b16 %v2002
    %v2035 = vunpack.c.l.b16 %v2003
    %v2036 = vunpack.c.l.b16 %v2004
    %v2037 = vunpack.c.l.b16 %v2005
    %v2038 = vunpack.c.l.b16 %v2006
    %v2039 = vpack.c.b16 %v2024, %v2023
    %v2040 = vpack.c.b16 %v2026, %v2025
    %v2041 = vpack.c.b16 %v2028, %v2027
    %v2042 = vpack.c.b16 %v2030, %v2029
    %v2043 = vpack.c.b16 %v2032, %v2031
    %v2044 = vpack.c.b16 %v2034, %v2033
    %v2045 = vpack.c.b16 %v2036, %v2035
    %v2046 = vpack.c.b16 %v2038, %v2037
    %2055 = vmatprep.subr.bf16.mxu0 0
    %2056 = vmatpush1.bf16.msra.mxu0 %v2039
    %2057 = vmatprep.subr.bf16.mxu0 0
    %2058 = vmatpush1.bf16.msra.mxu0 %v2040
    %2059 = vmatprep.subr.bf16.mxu0 0
    %2060 = vmatpush1.bf16.msra.mxu0 %v2041
    %2061 = vmatprep.subr.bf16.mxu0 0
    %2062 = vmatpush1.bf16.msra.mxu0 %v2042
    %2063 = vmatprep.subr.bf16.mxu0 0
    %2064 = vmatpush1.bf16.msra.mxu0 %v2043
    %2065 = vmatprep.subr.bf16.mxu0 0
    %2066 = vmatpush1.bf16.msra.mxu0 %v2044
    %2067 = vmatprep.subr.bf16.mxu0 0
    %2068 = vmatpush1.bf16.msra.mxu0 %v2045
    %2069 = vmatprep.subr.bf16.mxu0 0
    %2070 = vmatpush1.bf16.msra.mxu0 %v2046
    %2071 = vmatprep.subr.bf16.mxu0 0
    %2072 = vmatpush1.bf16.msra.mxu0 0
    %2073 = vmatprep.subr.bf16.mxu0 0
    %2074 = vmatpush1.bf16.msra.mxu0 0
    %2075 = vmatprep.subr.bf16.mxu0 0
    %2076 = vmatpush1.bf16.msra.mxu0 0
    %2077 = vmatprep.subr.bf16.mxu0 0
    %2078 = vmatpush1.bf16.msra.mxu0 0
    %2079 = vmatprep.subr.bf16.mxu0 0
    %2080 = vmatpush1.bf16.msra.mxu0 0
    %2081 = vmatprep.subr.bf16.mxu0 0
    %2082 = vmatpush1.bf16.msra.mxu0 0
    %2083 = vmatprep.subr.bf16.mxu0 0
    %2084 = vmatpush1.bf16.msra.mxu0 0
    %2085 = vmatprep.subr.bf16.mxu0 0
    %2086 = vmatpush1.bf16.msra.mxu0 0
    %2087 = vmatprep.mubr.bf16.mxu0 0
    %2088 = vmatmul.mubr.bf16.gmra.mrb[0].mxu0 %v1989
    %v2089 = vpop.f32.mrb[0].mxu0
    %v2090 = vadd.f32 0.0, %v2089
    %v2091 = vpop.f32.mrb[0].mxu0
    %v2092 = vpop.f32.mrb[0].mxu0
    %v2093 = vpop.f32.mrb[0].mxu0
    %2094 = vdwg.mxu0
    %v2095 = vadd.f32 %v1756, %v2090
    %s2096 = sld [smem:[#allocation6 + $0x5]]
    %2097 = vmatprep.subr.bf16.mxu0 0
    %2098 = vmatpush1.bf16.msra.mxu0 %v193
    %2099 = vmatprep.subr.bf16.mxu0 0
    %2100 = vmatpush1.bf16.msra.mxu0 %v194
    %2101 = vmatprep.subr.bf16.mxu0 0
    %2102 = vmatpush1.bf16.msra.mxu0 %v195
    %2103 = vmatprep.subr.bf16.mxu0 0
    %2104 = vmatpush1.bf16.msra.mxu0 %v196
    %2105 = vmatprep.subr.bf16.mxu0 0
    %2106 = vmatpush1.bf16.msra.mxu0 %v197
    %2107 = vmatprep.subr.bf16.mxu0 0
    %2108 = vmatpush1.bf16.msra.mxu0 %v198
    %2109 = vmatprep.subr.bf16.mxu0 0
    %2110 = vmatpush1.bf16.msra.mxu0 %v199
    %2111 = vmatprep.subr.bf16.mxu0 0
    %2112 = vmatpush1.bf16.msra.mxu0 %v200
    %2113 = vmatprep.subr.bf16.mxu0 0
    %2114 = vmatpush1.bf16.msra.mxu0 0
    %2115 = vmatprep.subr.bf16.mxu0 0
    %2116 = vmatpush1.bf16.msra.mxu0 0
    %2117 = vmatprep.subr.bf16.mxu0 0
    %2118 = vmatpush1.bf16.msra.mxu0 0
    %2119 = vmatprep.subr.bf16.mxu0 0
    %2120 = vmatpush1.bf16.msra.mxu0 0
    %2121 = vmatprep.subr.bf16.mxu0 0
    %2122 = vmatpush1.bf16.msra.mxu0 0
    %2123 = vmatprep.subr.bf16.mxu0 0
    %2124 = vmatpush1.bf16.msra.mxu0 0
    %2125 = vmatprep.subr.bf16.mxu0 0
    %2126 = vmatpush1.bf16.msra.mxu0 0
    %2127 = vmatprep.subr.bf16.mxu0 0
    %2128 = vmatpush1.bf16.msra.mxu0 0
    %2129 = vmatprep.mubr.bf16.mxu0 0
    %2130 = vmatmul.mubr.bf16.gmra.mrb[0].mxu0 %v1989
    %v2131 = vpop.f32.mrb[0].mxu0
    %v2132 = vadd.f32 %v159, %v2131
    %v2133 = vpop.f32.mrb[0].mxu0
    %v2134 = vpop.f32.mrb[0].mxu0
    %v2135 = vpop.f32.mrb[0].mxu0
    %2136 = vdwg.mxu0
    %v2137 = vtanh.pop %v2132
    %v2138 = vstv %s2096
    %v2139 = vmul.f32 %v2138, %v2137
    %v2140 = vadd.f32 %v1988, %v2139
    %s2141 = scalar_lea.vmem [#allocation2], 40
    %v2142 = vld [vmem:[%s2141] sm:$0xff]
    %v2143 = vpack.c.bf16 %v2142, %v2142
    %v2145 = vsel %vm291, %v2143, 0
    %2147 = vmatprep.subr.bf16.mxu0 %v286
    %2148 = vmatpush1.bf16.msra.mxu0 %v285
    %2149 = vmatprep.subr.bf16.mxu0 0
    %2150 = vmatpush1.bf16.msra.mxu0 0
    %2151 = vmatprep.subr.bf16.mxu0 0
    %2152 = vmatpush1.bf16.msra.mxu0 0
    %2153 = vmatprep.subr.bf16.mxu0 0
    %2154 = vmatpush1.bf16.msra.mxu0 0
    %2155 = vmatprep.subr.bf16.mxu0 0
    %2156 = vmatpush1.bf16.msra.mxu0 0
    %2157 = vmatprep.subr.bf16.mxu0 0
    %2158 = vmatpush1.bf16.msra.mxu0 0
    %2159 = vmatprep.subr.bf16.mxu0 0
    %2160 = vmatpush1.bf16.msra.mxu0 0
    %2161 = vmatprep.subr.bf16.mxu0 0
    %2162 = vmatpush1.bf16.msra.mxu0 0
    %2163 = vmatprep.subr.bf16.mxu0 0
    %2164 = vmatpush1.bf16.msra.mxu0 0
    %2165 = vmatprep.subr.bf16.mxu0 0
    %2166 = vmatpush1.bf16.msra.mxu0 0
    %2167 = vmatprep.subr.bf16.mxu0 0
    %2168 = vmatpush1.bf16.msra.mxu0 0
    %2169 = vmatprep.subr.bf16.mxu0 0
    %2170 = vmatpush1.bf16.msra.mxu0 0
    %2171 = vmatprep.subr.bf16.mxu0 0
    %2172 = vmatpush1.bf16.msra.mxu0 0
    %2173 = vmatprep.subr.bf16.mxu0 0
    %2174 = vmatpush1.bf16.msra.mxu0 0
    %2175 = vmatprep.subr.bf16.mxu0 0
    %2176 = vmatpush1.bf16.msra.mxu0 0
    %2177 = vmatprep.subr.bf16.mxu0 0
    %2178 = vmatpush1.bf16.msra.mxu0 0
    %2179 = vmatprep.mubr.bf16.mxu0 0
    %2180 = vmatmul.mubr.bf16.gmra.mrb[0].mxu0 %v2145
    %v2181 = vpop.f32.mrb[0].mxu0
    %v2182 = vadd.f32 %v263, %v2181
    %v2183 = vpop.f32.mrb[0].mxu0
    %v2184 = vadd.f32 %v267, %v2183
    %v2185 = vpop.f32.mrb[0].mxu0
    %v2186 = vpop.f32.mrb[0].mxu0
    %2187 = vdwg.mxu0
    %2188 = vmatprep.subr.bf16.mxu0 0
    %2189 = vmatpush1.bf16.msra.mxu0 %v287
    %2190 = vmatprep.subr.bf16.mxu0 0
    %2191 = vmatpush1.bf16.msra.mxu0 0
    %2192 = vmatprep.subr.bf16.mxu0 0
    %2193 = vmatpush1.bf16.msra.mxu0 0
    %2194 = vmatprep.subr.bf16.mxu0 0
    %2195 = vmatpush1.bf16.msra.mxu0 0
    %2196 = vmatprep.subr.bf16.mxu0 0
    %2197 = vmatpush1.bf16.msra.mxu0 0
    %2198 = vmatprep.subr.bf16.mxu0 0
    %2199 = vmatpush1.bf16.msra.mxu0 0
    %2200 = vmatprep.subr.bf16.mxu0 0
    %2201 = vmatpush1.bf16.msra.mxu0 0
    %2202 = vmatprep.subr.bf16.mxu0 0
    %2203 = vmatpush1.bf16.msra.mxu0 0
    %2204 = vmatprep.subr.bf16.mxu0 0
    %2205 = vmatpush1.bf16.msra.mxu0 0
    %2206 = vmatprep.subr.bf16.mxu0 0
    %2207 = vmatpush1.bf16.msra.mxu0 0
    %2208 = vmatprep.subr.bf16.mxu0 0
    %2209 = vmatpush1.bf16.msra.mxu0 0
    %2210 = vmatprep.subr.bf16.mxu0 0
    %2211 = vmatpush1.bf16.msra.mxu0 0
    %2212 = vmatprep.subr.bf16.mxu0 0
    %2213 = vmatpush1.bf16.msra.mxu0 0
    %2214 = vmatprep.subr.bf16.mxu0 0
    %2215 = vmatpush1.bf16.msra.mxu0 0
    %2216 = vmatprep.subr.bf16.mxu0 0
    %2217 = vmatpush1.bf16.msra.mxu0 0
    %2218 = vmatprep.subr.bf16.mxu0 0
    %2219 = vmatpush1.bf16.msra.mxu0 0
    %2220 = vmatprep.mubr.bf16.mxu0 0
    %2221 = vmatmul.mubr.bf16.gmra.mrb[0].mxu0 %v2145
    %v2222 = vpop.f32.mrb[0].mxu0
    %v2223 = vadd.f32 %v271, %v2222
    %v2224 = vpop.f32.mrb[0].mxu0
    %v2225 = vpop.f32.mrb[0].mxu0
    %v2226 = vpop.f32.mrb[0].mxu0
    %2227 = vdwg.mxu0
    %v2228 = vpack.c.bf16 %v2140, %v2140
    %2229 = vmatprep.subr.bf16.mxu0 %v442
    %2230 = vmatpush1.bf16.msra.mxu0 %v441
    %2231 = vmatprep.subr.bf16.mxu0 %v444
    %2232 = vmatpush1.bf16.msra.mxu0 %v443
    %2233 = vmatprep.subr.bf16.mxu0 %v446
    %2234 = vmatpush1.bf16.msra.mxu0 %v445
    %2235 = vmatprep.subr.bf16.mxu0 %v448
    %2236 = vmatpush1.bf16.msra.mxu0 %v447
    %2237 = vmatprep.subr.bf16.mxu0 %v450
    %2238 = vmatpush1.bf16.msra.mxu0 %v449
    %2239 = vmatprep.subr.bf16.mxu0 %v452
    %2240 = vmatpush1.bf16.msra.mxu0 %v451
    %2241 = vmatprep.subr.bf16.mxu0 %v454
    %2242 = vmatpush1.bf16.msra.mxu0 %v453
    %2243 = vmatprep.subr.bf16.mxu0 %v456
    %2244 = vmatpush1.bf16.msra.mxu0 %v455
    %2245 = vmatprep.subr.bf16.mxu0 0
    %2246 = vmatpush1.bf16.msra.mxu0 0
    %2247 = vmatprep.subr.bf16.mxu0 0
    %2248 = vmatpush1.bf16.msra.mxu0 0
    %2249 = vmatprep.subr.bf16.mxu0 0
    %2250 = vmatpush1.bf16.msra.mxu0 0
    %2251 = vmatprep.subr.bf16.mxu0 0
    %2252 = vmatpush1.bf16.msra.mxu0 0
    %2253 = vmatprep.subr.bf16.mxu0 0
    %2254 = vmatpush1.bf16.msra.mxu0 0
    %2255 = vmatprep.subr.bf16.mxu0 0
    %2256 = vmatpush1.bf16.msra.mxu0 0
    %2257 = vmatprep.subr.bf16.mxu0 0
    %2258 = vmatpush1.bf16.msra.mxu0 0
    %2259 = vmatprep.subr.bf16.mxu0 0
    %2260 = vmatpush1.bf16.msra.mxu0 0
    %2261 = vmatprep.mubr.bf16.mxu0 0
    %2262 = vmatmul.mubr.bf16.gmra.mrb[0].mxu0 %v2228
    %v2263 = vpop.f32.mrb[0].mxu0
    %v2264 = vadd.f32 %v2182, %v2263
    %v2265 = vpop.f32.mrb[0].mxu0
    %v2266 = vadd.f32 %v2184, %v2265
    %v2267 = vpop.f32.mrb[0].mxu0
    %v2268 = vpop.f32.mrb[0].mxu0
    %2269 = vdwg.mxu0
    %v2270 = vxor.u32 %v2264, 2147483648
    %v2271 = vmul.f32 %v2270, 1.442695
    %v2272 = vpow.pop %v2271
    %v2273 = vadd.f32 %v2272, 1.0
    %v2274 = vrcp.pop %v2273
    %v2275 = vmul.f32 1.0, %v2274
    %v2276 = vxor.u32 %v2266, 2147483648
    %v2277 = vmul.f32 %v2276, 1.442695
    %v2278 = vpow.pop %v2277
    %v2279 = vadd.f32 %v2278, 1.0
    %v2280 = vrcp.pop %v2279
    %v2281 = vmul.f32 1.0, %v2280
    %v2282 = vmul.f32 %v2140, %v2281
    %v2283 = vpack.c.bf16 %v2282, %v2282
    %2284 = vmatprep.subr.bf16.mxu0 0
    %2285 = vmatpush1.bf16.msra.mxu0 %v576
    %2286 = vmatprep.subr.bf16.mxu0 0
    %2287 = vmatpush1.bf16.msra.mxu0 %v577
    %2288 = vmatprep.subr.bf16.mxu0 0
    %2289 = vmatpush1.bf16.msra.mxu0 %v578
    %2290 = vmatprep.subr.bf16.mxu0 0
    %2291 = vmatpush1.bf16.msra.mxu0 %v579
    %2292 = vmatprep.subr.bf16.mxu0 0
    %2293 = vmatpush1.bf16.msra.mxu0 %v580
    %2294 = vmatprep.subr.bf16.mxu0 0
    %2295 = vmatpush1.bf16.msra.mxu0 %v581
    %2296 = vmatprep.subr.bf16.mxu0 0
    %2297 = vmatpush1.bf16.msra.mxu0 %v582
    %2298 = vmatprep.subr.bf16.mxu0 0
    %2299 = vmatpush1.bf16.msra.mxu0 %v583
    %2300 = vmatprep.subr.bf16.mxu0 0
    %2301 = vmatpush1.bf16.msra.mxu0 0
    %2302 = vmatprep.subr.bf16.mxu0 0
    %2303 = vmatpush1.bf16.msra.mxu0 0
    %2304 = vmatprep.subr.bf16.mxu0 0
    %2305 = vmatpush1.bf16.msra.mxu0 0
    %2306 = vmatprep.subr.bf16.mxu0 0
    %2307 = vmatpush1.bf16.msra.mxu0 0
    %2308 = vmatprep.subr.bf16.mxu0 0
    %2309 = vmatpush1.bf16.msra.mxu0 0
    %2310 = vmatprep.subr.bf16.mxu0 0
    %2311 = vmatpush1.bf16.msra.mxu0 0
    %2312 = vmatprep.subr.bf16.mxu0 0
    %2313 = vmatpush1.bf16.msra.mxu0 0
    %2314 = vmatprep.subr.bf16.mxu0 0
    %2315 = vmatpush1.bf16.msra.mxu0 0
    %2316 = vmatprep.mubr.bf16.mxu0 0
    %2317 = vmatmul.mubr.bf16.gmra.mrb[0].mxu0 %v2283
    %v2318 = vpop.f32.mrb[0].mxu0
    %v2319 = vadd.f32 %v2223, %v2318
    %v2320 = vpop.f32.mrb[0].mxu0
    %v2321 = vpop.f32.mrb[0].mxu0
    %v2322 = vpop.f32.mrb[0].mxu0
    %2323 = vdwg.mxu0
    %v2324 = vsub.f32 1.0, %v2275
    %v2325 = vmul.f32 %v2324, %v2319
    %v2326 = vmul.f32 %v2275, %v2140
    %v2327 = vadd.f32 %v2325, %v2326
    %v2328 = vpack.c.bf16 %v2327, %v2327
    %s2329 = scalar_lea.vmem [#allocation13], 320
    %v2330 = vld [vmem:[%s2329] sm:$0xf]
    %v2331 = vld [vmem:[%s2329 + $0x4] sm:$0xf]
    %v2332 = vld [vmem:[%s2329 + $0x8] sm:$0xf]
    %v2333 = vld [vmem:[%s2329 + $0xc] sm:$0xf]
    %v2334 = vld [vmem:[%s2329 + $0x10] sm:$0xf]
    %v2335 = vld [vmem:[%s2329 + $0x14] sm:$0xf]
    %v2336 = vld [vmem:[%s2329 + $0x18] sm:$0xf]
    %v2337 = vld [vmem:[%s2329 + $0x1c] sm:$0xf]
    %v2338 = vld [vmem:[%s2329 + $0x20] sm:$0xf]
    %v2339 = vld [vmem:[%s2329 + $0x24] sm:$0xf]
    %v2340 = vld [vmem:[%s2329 + $0x28] sm:$0xf]
    %v2341 = vld [vmem:[%s2329 + $0x2c] sm:$0xf]
    %v2342 = vld [vmem:[%s2329 + $0x30] sm:$0xf]
    %v2343 = vld [vmem:[%s2329 + $0x34] sm:$0xf]
    %v2344 = vld [vmem:[%s2329 + $0x38] sm:$0xf]
    %v2345 = vld [vmem:[%s2329 + $0x3c] sm:$0xf]
    %v2362 = vunpack.c.l.b16 %v2330
    %v2363 = vunpack.c.l.b16 %v2331
    %v2364 = vunpack.c.l.b16 %v2332
    %v2365 = vunpack.c.l.b16 %v2333
    %v2366 = vunpack.c.l.b16 %v2334
    %v2367 = vunpack.c.l.b16 %v2335
    %v2368 = vunpack.c.l.b16 %v2336
    %v2369 = vunpack.c.l.b16 %v2337
    %v2370 = vunpack.c.l.b16 %v2338
    %v2371 = vunpack.c.l.b16 %v2339
    %v2372 = vunpack.c.l.b16 %v2340
    %v2373 = vunpack.c.l.b16 %v2341
    %v2374 = vunpack.c.l.b16 %v2342
    %v2375 = vunpack.c.l.b16 %v2343
    %v2376 = vunpack.c.l.b16 %v2344
    %v2377 = vunpack.c.l.b16 %v2345
    %v2378 = vpack.c.b16 %v2363, %v2362
    %v2379 = vpack.c.b16 %v2365, %v2364
    %v2380 = vpack.c.b16 %v2367, %v2366
    %v2381 = vpack.c.b16 %v2369, %v2368
    %v2382 = vpack.c.b16 %v2371, %v2370
    %v2383 = vpack.c.b16 %v2373, %v2372
    %v2384 = vpack.c.b16 %v2375, %v2374
    %v2385 = vpack.c.b16 %v2377, %v2376
    %2394 = vmatprep.subr.bf16.mxu0 0
    %2395 = vmatpush1.bf16.msra.mxu0 %v2378
    %2396 = vmatprep.subr.bf16.mxu0 0
    %2397 = vmatpush1.bf16.msra.mxu0 %v2379
    %2398 = vmatprep.subr.bf16.mxu0 0
    %2399 = vmatpush1.bf16.msra.mxu0 %v2380
    %2400 = vmatprep.subr.bf16.mxu0 0
    %2401 = vmatpush1.bf16.msra.mxu0 %v2381
    %2402 = vmatprep.subr.bf16.mxu0 0
    %2403 = vmatpush1.bf16.msra.mxu0 %v2382
    %2404 = vmatprep.subr.bf16.mxu0 0
    %2405 = vmatpush1.bf16.msra.mxu0 %v2383
    %2406 = vmatprep.subr.bf16.mxu0 0
    %2407 = vmatpush1.bf16.msra.mxu0 %v2384
    %2408 = vmatprep.subr.bf16.mxu0 0
    %2409 = vmatpush1.bf16.msra.mxu0 %v2385
    %2410 = vmatprep.subr.bf16.mxu0 0
    %2411 = vmatpush1.bf16.msra.mxu0 0
    %2412 = vmatprep.subr.bf16.mxu0 0
    %2413 = vmatpush1.bf16.msra.mxu0 0
    %2414 = vmatprep.subr.bf16.mxu0 0
    %2415 = vmatpush1.bf16.msra.mxu0 0
    %2416 = vmatprep.subr.bf16.mxu0 0
    %2417 = vmatpush1.bf16.msra.mxu0 0
    %2418 = vmatprep.subr.bf16.mxu0 0
    %2419 = vmatpush1.bf16.msra.mxu0 0
    %2420 = vmatprep.subr.bf16.mxu0 0
    %2421 = vmatpush1.bf16.msra.mxu0 0
    %2422 = vmatprep.subr.bf16.mxu0 0
    %2423 = vmatpush1.bf16.msra.mxu0 0
    %2424 = vmatprep.subr.bf16.mxu0 0
    %2425 = vmatpush1.bf16.msra.mxu0 0
    %2426 = vmatprep.mubr.bf16.mxu0 0
    %2427 = vmatmul.mubr.bf16.gmra.mrb[0].mxu0 %v2328
    %v2428 = vpop.f32.mrb[0].mxu0
    %v2429 = vadd.f32 0.0, %v2428
    %v2430 = vpop.f32.mrb[0].mxu0
    %v2431 = vpop.f32.mrb[0].mxu0
    %v2432 = vpop.f32.mrb[0].mxu0
    %2433 = vdwg.mxu0
    %v2434 = vadd.f32 %v2095, %v2429
    %s2435 = sld [smem:[#allocation6 + $0x6]]
    %2436 = vmatprep.subr.bf16.mxu0 0
    %2437 = vmatpush1.bf16.msra.mxu0 %v193
    %2438 = vmatprep.subr.bf16.mxu0 0
    %2439 = vmatpush1.bf16.msra.mxu0 %v194
    %2440 = vmatprep.subr.bf16.mxu0 0
    %2441 = vmatpush1.bf16.msra.mxu0 %v195
    %2442 = vmatprep.subr.bf16.mxu0 0
    %2443 = vmatpush1.bf16.msra.mxu0 %v196
    %2444 = vmatprep.subr.bf16.mxu0 0
    %2445 = vmatpush1.bf16.msra.mxu0 %v197
    %2446 = vmatprep.subr.bf16.mxu0 0
    %2447 = vmatpush1.bf16.msra.mxu0 %v198
    %2448 = vmatprep.subr.bf16.mxu0 0
    %2449 = vmatpush1.bf16.msra.mxu0 %v199
    %2450 = vmatprep.subr.bf16.mxu0 0
    %2451 = vmatpush1.bf16.msra.mxu0 %v200
    %2452 = vmatprep.subr.bf16.mxu0 0
    %2453 = vmatpush1.bf16.msra.mxu0 0
    %2454 = vmatprep.subr.bf16.mxu0 0
    %2455 = vmatpush1.bf16.msra.mxu0 0
    %2456 = vmatprep.subr.bf16.mxu0 0
    %2457 = vmatpush1.bf16.msra.mxu0 0
    %2458 = vmatprep.subr.bf16.mxu0 0
    %2459 = vmatpush1.bf16.msra.mxu0 0
    %2460 = vmatprep.subr.bf16.mxu0 0
    %2461 = vmatpush1.bf16.msra.mxu0 0
    %2462 = vmatprep.subr.bf16.mxu0 0
    %2463 = vmatpush1.bf16.msra.mxu0 0
    %2464 = vmatprep.subr.bf16.mxu0 0
    %2465 = vmatpush1.bf16.msra.mxu0 0
    %2466 = vmatprep.subr.bf16.mxu0 0
    %2467 = vmatpush1.bf16.msra.mxu0 0
    %2468 = vmatprep.mubr.bf16.mxu0 0
    %2469 = vmatmul.mubr.bf16.gmra.mrb[0].mxu0 %v2328
    %v2470 = vpop.f32.mrb[0].mxu0
    %v2471 = vadd.f32 %v159, %v2470
    %v2472 = vpop.f32.mrb[0].mxu0
    %v2473 = vpop.f32.mrb[0].mxu0
    %v2474 = vpop.f32.mrb[0].mxu0
    %2475 = vdwg.mxu0
    %v2476 = vtanh.pop %v2471
    %v2477 = vstv %s2435
    %v2478 = vmul.f32 %v2477, %v2476
    %v2479 = vadd.f32 %v2327, %v2478
    %s2480 = scalar_lea.vmem [#allocation2], 48
    %v2481 = vld [vmem:[%s2480] sm:$0xff]
    %v2482 = vpack.c.bf16 %v2481, %v2481
    %v2484 = vsel %vm291, %v2482, 0
    %2486 = vmatprep.subr.bf16.mxu0 %v286
    %2487 = vmatpush1.bf16.msra.mxu0 %v285
    %2488 = vmatprep.subr.bf16.mxu0 0
    %2489 = vmatpush1.bf16.msra.mxu0 0
    %2490 = vmatprep.subr.bf16.mxu0 0
    %2491 = vmatpush1.bf16.msra.mxu0 0
    %2492 = vmatprep.subr.bf16.mxu0 0
    %2493 = vmatpush1.bf16.msra.mxu0 0
    %2494 = vmatprep.subr.bf16.mxu0 0
    %2495 = vmatpush1.bf16.msra.mxu0 0
    %2496 = vmatprep.subr.bf16.mxu0 0
    %2497 = vmatpush1.bf16.msra.mxu0 0
    %2498 = vmatprep.subr.bf16.mxu0 0
    %2499 = vmatpush1.bf16.msra.mxu0 0
    %2500 = vmatprep.subr.bf16.mxu0 0
    %2501 = vmatpush1.bf16.msra.mxu0 0
    %2502 = vmatprep.subr.bf16.mxu0 0
    %2503 = vmatpush1.bf16.msra.mxu0 0
    %2504 = vmatprep.subr.bf16.mxu0 0
    %2505 = vmatpush1.bf16.msra.mxu0 0
    %2506 = vmatprep.subr.bf16.mxu0 0
    %2507 = vmatpush1.bf16.msra.mxu0 0
    %2508 = vmatprep.subr.bf16.mxu0 0
    %2509 = vmatpush1.bf16.msra.mxu0 0
    %2510 = vmatprep.subr.bf16.mxu0 0
    %2511 = vmatpush1.bf16.msra.mxu0 0
    %2512 = vmatprep.subr.bf16.mxu0 0
    %2513 = vmatpush1.bf16.msra.mxu0 0
    %2514 = vmatprep.subr.bf16.mxu0 0
    %2515 = vmatpush1.bf16.msra.mxu0 0
    %2516 = vmatprep.subr.bf16.mxu0 0
    %2517 = vmatpush1.bf16.msra.mxu0 0
    %2518 = vmatprep.mubr.bf16.mxu0 0
    %2519 = vmatmul.mubr.bf16.gmra.mrb[0].mxu0 %v2484
    %v2520 = vpop.f32.mrb[0].mxu0
    %v2521 = vadd.f32 %v263, %v2520
    %v2522 = vpop.f32.mrb[0].mxu0
    %v2523 = vadd.f32 %v267, %v2522
    %v2524 = vpop.f32.mrb[0].mxu0
    %v2525 = vpop.f32.mrb[0].mxu0
    %2526 = vdwg.mxu0
    %2527 = vmatprep.subr.bf16.mxu0 0
    %2528 = vmatpush1.bf16.msra.mxu0 %v287
    %2529 = vmatprep.subr.bf16.mxu0 0
    %2530 = vmatpush1.bf16.msra.mxu0 0
    %2531 = vmatprep.subr.bf16.mxu0 0
    %2532 = vmatpush1.bf16.msra.mxu0 0
    %2533 = vmatprep.subr.bf16.mxu0 0
    %2534 = vmatpush1.bf16.msra.mxu0 0
    %2535 = vmatprep.subr.bf16.mxu0 0
    %2536 = vmatpush1.bf16.msra.mxu0 0
    %2537 = vmatprep.subr.bf16.mxu0 0
    %2538 = vmatpush1.bf16.msra.mxu0 0
    %2539 = vmatprep.subr.bf16.mxu0 0
    %2540 = vmatpush1.bf16.msra.mxu0 0
    %2541 = vmatprep.subr.bf16.mxu0 0
    %2542 = vmatpush1.bf16.msra.mxu0 0
    %2543 = vmatprep.subr.bf16.mxu0 0
    %2544 = vmatpush1.bf16.msra.mxu0 0
    %2545 = vmatprep.subr.bf16.mxu0 0
    %2546 = vmatpush1.bf16.msra.mxu0 0
    %2547 = vmatprep.subr.bf16.mxu0 0
    %2548 = vmatpush1.bf16.msra.mxu0 0
    %2549 = vmatprep.subr.bf16.mxu0 0
    %2550 = vmatpush1.bf16.msra.mxu0 0
    %2551 = vmatprep.subr.bf16.mxu0 0
    %2552 = vmatpush1.bf16.msra.mxu0 0
    %2553 = vmatprep.subr.bf16.mxu0 0
    %2554 = vmatpush1.bf16.msra.mxu0 0
    %2555 = vmatprep.subr.bf16.mxu0 0
    %2556 = vmatpush1.bf16.msra.mxu0 0
    %2557 = vmatprep.subr.bf16.mxu0 0
    %2558 = vmatpush1.bf16.msra.mxu0 0
    %2559 = vmatprep.mubr.bf16.mxu0 0
    %2560 = vmatmul.mubr.bf16.gmra.mrb[0].mxu0 %v2484
    %v2561 = vpop.f32.mrb[0].mxu0
    %v2562 = vadd.f32 %v271, %v2561
    %v2563 = vpop.f32.mrb[0].mxu0
    %v2564 = vpop.f32.mrb[0].mxu0
    %v2565 = vpop.f32.mrb[0].mxu0
    %2566 = vdwg.mxu0
    %v2567 = vpack.c.bf16 %v2479, %v2479
    %2568 = vmatprep.subr.bf16.mxu0 %v442
    %2569 = vmatpush1.bf16.msra.mxu0 %v441
    %2570 = vmatprep.subr.bf16.mxu0 %v444
    %2571 = vmatpush1.bf16.msra.mxu0 %v443
    %2572 = vmatprep.subr.bf16.mxu0 %v446
    %2573 = vmatpush1.bf16.msra.mxu0 %v445
    %2574 = vmatprep.subr.bf16.mxu0 %v448
    %2575 = vmatpush1.bf16.msra.mxu0 %v447
    %2576 = vmatprep.subr.bf16.mxu0 %v450
    %2577 = vmatpush1.bf16.msra.mxu0 %v449
    %2578 = vmatprep.subr.bf16.mxu0 %v452
    %2579 = vmatpush1.bf16.msra.mxu0 %v451
    %2580 = vmatprep.subr.bf16.mxu0 %v454
    %2581 = vmatpush1.bf16.msra.mxu0 %v453
    %2582 = vmatprep.subr.bf16.mxu0 %v456
    %2583 = vmatpush1.bf16.msra.mxu0 %v455
    %2584 = vmatprep.subr.bf16.mxu0 0
    %2585 = vmatpush1.bf16.msra.mxu0 0
    %2586 = vmatprep.subr.bf16.mxu0 0
    %2587 = vmatpush1.bf16.msra.mxu0 0
    %2588 = vmatprep.subr.bf16.mxu0 0
    %2589 = vmatpush1.bf16.msra.mxu0 0
    %2590 = vmatprep.subr.bf16.mxu0 0
    %2591 = vmatpush1.bf16.msra.mxu0 0
    %2592 = vmatprep.subr.bf16.mxu0 0
    %2593 = vmatpush1.bf16.msra.mxu0 0
    %2594 = vmatprep.subr.bf16.mxu0 0
    %2595 = vmatpush1.bf16.msra.mxu0 0
    %2596 = vmatprep.subr.bf16.mxu0 0
    %2597 = vmatpush1.bf16.msra.mxu0 0
    %2598 = vmatprep.subr.bf16.mxu0 0
    %2599 = vmatpush1.bf16.msra.mxu0 0
    %2600 = vmatprep.mubr.bf16.mxu0 0
    %2601 = vmatmul.mubr.bf16.gmra.mrb[0].mxu0 %v2567
    %v2602 = vpop.f32.mrb[0].mxu0
    %v2603 = vadd.f32 %v2521, %v2602
    %v2604 = vpop.f32.mrb[0].mxu0
    %v2605 = vadd.f32 %v2523, %v2604
    %v2606 = vpop.f32.mrb[0].mxu0
    %v2607 = vpop.f32.mrb[0].mxu0
    %2608 = vdwg.mxu0
    %v2609 = vxor.u32 %v2603, 2147483648
    %v2610 = vmul.f32 %v2609, 1.442695
    %v2611 = vpow.pop %v2610
    %v2612 = vadd.f32 %v2611, 1.0
    %v2613 = vrcp.pop %v2612
    %v2614 = vmul.f32 1.0, %v2613
    %v2615 = vxor.u32 %v2605, 2147483648
    %v2616 = vmul.f32 %v2615, 1.442695
    %v2617 = vpow.pop %v2616
    %v2618 = vadd.f32 %v2617, 1.0
    %v2619 = vrcp.pop %v2618
    %v2620 = vmul.f32 1.0, %v2619
    %v2621 = vmul.f32 %v2479, %v2620
    %v2622 = vpack.c.bf16 %v2621, %v2621
    %2623 = vmatprep.subr.bf16.mxu0 0
    %2624 = vmatpush1.bf16.msra.mxu0 %v576
    %2625 = vmatprep.subr.bf16.mxu0 0
    %2626 = vmatpush1.bf16.msra.mxu0 %v577
    %2627 = vmatprep.subr.bf16.mxu0 0
    %2628 = vmatpush1.bf16.msra.mxu0 %v578
    %2629 = vmatprep.subr.bf16.mxu0 0
    %2630 = vmatpush1.bf16.msra.mxu0 %v579
    %2631 = vmatprep.subr.bf16.mxu0 0
    %2632 = vmatpush1.bf16.msra.mxu0 %v580
    %2633 = vmatprep.subr.bf16.mxu0 0
    %2634 = vmatpush1.bf16.msra.mxu0 %v581
    %2635 = vmatprep.subr.bf16.mxu0 0
    %2636 = vmatpush1.bf16.msra.mxu0 %v582
    %2637 = vmatprep.subr.bf16.mxu0 0
    %2638 = vmatpush1.bf16.msra.mxu0 %v583
    %2639 = vmatprep.subr.bf16.mxu0 0
    %2640 = vmatpush1.bf16.msra.mxu0 0
    %2641 = vmatprep.subr.bf16.mxu0 0
    %2642 = vmatpush1.bf16.msra.mxu0 0
    %2643 = vmatprep.subr.bf16.mxu0 0
    %2644 = vmatpush1.bf16.msra.mxu0 0
    %2645 = vmatprep.subr.bf16.mxu0 0
    %2646 = vmatpush1.bf16.msra.mxu0 0
    %2647 = vmatprep.subr.bf16.mxu0 0
    %2648 = vmatpush1.bf16.msra.mxu0 0
    %2649 = vmatprep.subr.bf16.mxu0 0
    %2650 = vmatpush1.bf16.msra.mxu0 0
    %2651 = vmatprep.subr.bf16.mxu0 0
    %2652 = vmatpush1.bf16.msra.mxu0 0
    %2653 = vmatprep.subr.bf16.mxu0 0
    %2654 = vmatpush1.bf16.msra.mxu0 0
    %2655 = vmatprep.mubr.bf16.mxu0 0
    %2656 = vmatmul.mubr.bf16.gmra.mrb[0].mxu0 %v2622
    %v2657 = vpop.f32.mrb[0].mxu0
    %v2658 = vadd.f32 %v2562, %v2657
    %v2659 = vpop.f32.mrb[0].mxu0
    %v2660 = vpop.f32.mrb[0].mxu0
    %v2661 = vpop.f32.mrb[0].mxu0
    %2662 = vdwg.mxu0
    %v2663 = vsub.f32 1.0, %v2614
    %v2664 = vmul.f32 %v2663, %v2658
    %v2665 = vmul.f32 %v2614, %v2479
    %v2666 = vadd.f32 %v2664, %v2665
    %v2667 = vpack.c.bf16 %v2666, %v2666
    %s2668 = scalar_lea.vmem [#allocation13], 384
    %v2669 = vld [vmem:[%s2668] sm:$0xf]
    %v2670 = vld [vmem:[%s2668 + $0x4] sm:$0xf]
    %v2671 = vld [vmem:[%s2668 + $0x8] sm:$0xf]
    %v2672 = vld [vmem:[%s2668 + $0xc] sm:$0xf]
    %v2673 = vld [vmem:[%s2668 + $0x10] sm:$0xf]
    %v2674 = vld [vmem:[%s2668 + $0x14] sm:$0xf]
    %v2675 = vld [vmem:[%s2668 + $0x18] sm:$0xf]
    %v2676 = vld [vmem:[%s2668 + $0x1c] sm:$0xf]
    %v2677 = vld [vmem:[%s2668 + $0x20] sm:$0xf]
    %v2678 = vld [vmem:[%s2668 + $0x24] sm:$0xf]
    %v2679 = vld [vmem:[%s2668 + $0x28] sm:$0xf]
    %v2680 = vld [vmem:[%s2668 + $0x2c] sm:$0xf]
    %v2681 = vld [vmem:[%s2668 + $0x30] sm:$0xf]
    %v2682 = vld [vmem:[%s2668 + $0x34] sm:$0xf]
    %v2683 = vld [vmem:[%s2668 + $0x38] sm:$0xf]
    %v2684 = vld [vmem:[%s2668 + $0x3c] sm:$0xf]
    %v2701 = vunpack.c.l.b16 %v2669
    %v2702 = vunpack.c.l.b16 %v2670
    %v2703 = vunpack.c.l.b16 %v2671
    %v2704 = vunpack.c.l.b16 %v2672
    %v2705 = vunpack.c.l.b16 %v2673
    %v2706 = vunpack.c.l.b16 %v2674
    %v2707 = vunpack.c.l.b16 %v2675
    %v2708 = vunpack.c.l.b16 %v2676
    %v2709 = vunpack.c.l.b16 %v2677
    %v2710 = vunpack.c.l.b16 %v2678
    %v2711 = vunpack.c.l.b16 %v2679
    %v2712 = vunpack.c.l.b16 %v2680
    %v2713 = vunpack.c.l.b16 %v2681
    %v2714 = vunpack.c.l.b16 %v2682
    %v2715 = vunpack.c.l.b16 %v2683
    %v2716 = vunpack.c.l.b16 %v2684
    %v2717 = vpack.c.b16 %v2702, %v2701
    %v2718 = vpack.c.b16 %v2704, %v2703
    %v2719 = vpack.c.b16 %v2706, %v2705
    %v2720 = vpack.c.b16 %v2708, %v2707
    %v2721 = vpack.c.b16 %v2710, %v2709
    %v2722 = vpack.c.b16 %v2712, %v2711
    %v2723 = vpack.c.b16 %v2714, %v2713
    %v2724 = vpack.c.b16 %v2716, %v2715
    %2733 = vmatprep.subr.bf16.mxu0 0
    %2734 = vmatpush1.bf16.msra.mxu0 %v2717
    %2735 = vmatprep.subr.bf16.mxu0 0
    %2736 = vmatpush1.bf16.msra.mxu0 %v2718
    %2737 = vmatprep.subr.bf16.mxu0 0
    %2738 = vmatpush1.bf16.msra.mxu0 %v2719
    %2739 = vmatprep.subr.bf16.mxu0 0
    %2740 = vmatpush1.bf16.msra.mxu0 %v2720
    %2741 = vmatprep.subr.bf16.mxu0 0
    %2742 = vmatpush1.bf16.msra.mxu0 %v2721
    %2743 = vmatprep.subr.bf16.mxu0 0
    %2744 = vmatpush1.bf16.msra.mxu0 %v2722
    %2745 = vmatprep.subr.bf16.mxu0 0
    %2746 = vmatpush1.bf16.msra.mxu0 %v2723
    %2747 = vmatprep.subr.bf16.mxu0 0
    %2748 = vmatpush1.bf16.msra.mxu0 %v2724
    %2749 = vmatprep.subr.bf16.mxu0 0
    %2750 = vmatpush1.bf16.msra.mxu0 0
    %2751 = vmatprep.subr.bf16.mxu0 0
    %2752 = vmatpush1.bf16.msra.mxu0 0
    %2753 = vmatprep.subr.bf16.mxu0 0
    %2754 = vmatpush1.bf16.msra.mxu0 0
    %2755 = vmatprep.subr.bf16.mxu0 0
    %2756 = vmatpush1.bf16.msra.mxu0 0
    %2757 = vmatprep.subr.bf16.mxu0 0
    %2758 = vmatpush1.bf16.msra.mxu0 0
    %2759 = vmatprep.subr.bf16.mxu0 0
    %2760 = vmatpush1.bf16.msra.mxu0 0
    %2761 = vmatprep.subr.bf16.mxu0 0
    %2762 = vmatpush1.bf16.msra.mxu0 0
    %2763 = vmatprep.subr.bf16.mxu0 0
    %2764 = vmatpush1.bf16.msra.mxu0 0
    %2765 = vmatprep.mubr.bf16.mxu0 0
    %2766 = vmatmul.mubr.bf16.gmra.mrb[0].mxu0 %v2667
    %v2767 = vpop.f32.mrb[0].mxu0
    %v2768 = vadd.f32 0.0, %v2767
    %v2769 = vpop.f32.mrb[0].mxu0
    %v2770 = vpop.f32.mrb[0].mxu0
    %v2771 = vpop.f32.mrb[0].mxu0
    %2772 = vdwg.mxu0
    %v2773 = vadd.f32 %v2434, %v2768
    %s2774 = sld [smem:[#allocation6 + $0x7]]
    %2775 = vmatprep.subr.bf16.mxu0 0
    %2776 = vmatpush1.bf16.msra.mxu0 %v193
    %2777 = vmatprep.subr.bf16.mxu0 0
    %2778 = vmatpush1.bf16.msra.mxu0 %v194
    %2779 = vmatprep.subr.bf16.mxu0 0
    %2780 = vmatpush1.bf16.msra.mxu0 %v195
    %2781 = vmatprep.subr.bf16.mxu0 0
    %2782 = vmatpush1.bf16.msra.mxu0 %v196
    %2783 = vmatprep.subr.bf16.mxu0 0
    %2784 = vmatpush1.bf16.msra.mxu0 %v197
    %2785 = vmatprep.subr.bf16.mxu0 0
    %2786 = vmatpush1.bf16.msra.mxu0 %v198
    %2787 = vmatprep.subr.bf16.mxu0 0
    %2788 = vmatpush1.bf16.msra.mxu0 %v199
    %2789 = vmatprep.subr.bf16.mxu0 0
    %2790 = vmatpush1.bf16.msra.mxu0 %v200
    %2791 = vmatprep.subr.bf16.mxu0 0
    %2792 = vmatpush1.bf16.msra.mxu0 0
    %2793 = vmatprep.subr.bf16.mxu0 0
    %2794 = vmatpush1.bf16.msra.mxu0 0
    %2795 = vmatprep.subr.bf16.mxu0 0
    %2796 = vmatpush1.bf16.msra.mxu0 0
    %2797 = vmatprep.subr.bf16.mxu0 0
    %2798 = vmatpush1.bf16.msra.mxu0 0
    %2799 = vmatprep.subr.bf16.mxu0 0
    %2800 = vmatpush1.bf16.msra.mxu0 0
    %2801 = vmatprep.subr.bf16.mxu0 0
    %2802 = vmatpush1.bf16.msra.mxu0 0
    %2803 = vmatprep.subr.bf16.mxu0 0
    %2804 = vmatpush1.bf16.msra.mxu0 0
    %2805 = vmatprep.subr.bf16.mxu0 0
    %2806 = vmatpush1.bf16.msra.mxu0 0
    %2807 = vmatprep.mubr.bf16.mxu0 0
    %2808 = vmatmul.mubr.bf16.gmra.mrb[0].mxu0 %v2667
    %v2809 = vpop.f32.mrb[0].mxu0
    %v2810 = vadd.f32 %v159, %v2809
    %v2811 = vpop.f32.mrb[0].mxu0
    %v2812 = vpop.f32.mrb[0].mxu0
    %v2813 = vpop.f32.mrb[0].mxu0
    %2814 = vdwg.mxu0
    %v2815 = vtanh.pop %v2810
    %v2816 = vstv %s2774
    %v2817 = vmul.f32 %v2816, %v2815
    %v2818 = vadd.f32 %v2666, %v2817
    %s2819 = scalar_lea.vmem [#allocation2], 56
    %v2820 = vld [vmem:[%s2819] sm:$0xff]
    %v2821 = vpack.c.bf16 %v2820, %v2820
    %v2823 = vsel %vm291, %v2821, 0
    %2825 = vmatprep.subr.bf16.mxu0 %v286
    %2826 = vmatpush1.bf16.msra.mxu0 %v285
    %2827 = vmatprep.subr.bf16.mxu0 0
    %2828 = vmatpush1.bf16.msra.mxu0 0
    %2829 = vmatprep.subr.bf16.mxu0 0
    %2830 = vmatpush1.bf16.msra.mxu0 0
    %2831 = vmatprep.subr.bf16.mxu0 0
    %2832 = vmatpush1.bf16.msra.mxu0 0
    %2833 = vmatprep.subr.bf16.mxu0 0
    %2834 = vmatpush1.bf16.msra.mxu0 0
    %2835 = vmatprep.subr.bf16.mxu0 0
    %2836 = vmatpush1.bf16.msra.mxu0 0
    %2837 = vmatprep.subr.bf16.mxu0 0
    %2838 = vmatpush1.bf16.msra.mxu0 0
    %2839 = vmatprep.subr.bf16.mxu0 0
    %2840 = vmatpush1.bf16.msra.mxu0 0
    %2841 = vmatprep.subr.bf16.mxu0 0
    %2842 = vmatpush1.bf16.msra.mxu0 0
    %2843 = vmatprep.subr.bf16.mxu0 0
    %2844 = vmatpush1.bf16.msra.mxu0 0
    %2845 = vmatprep.subr.bf16.mxu0 0
    %2846 = vmatpush1.bf16.msra.mxu0 0
    %2847 = vmatprep.subr.bf16.mxu0 0
    %2848 = vmatpush1.bf16.msra.mxu0 0
    %2849 = vmatprep.subr.bf16.mxu0 0
    %2850 = vmatpush1.bf16.msra.mxu0 0
    %2851 = vmatprep.subr.bf16.mxu0 0
    %2852 = vmatpush1.bf16.msra.mxu0 0
    %2853 = vmatprep.subr.bf16.mxu0 0
    %2854 = vmatpush1.bf16.msra.mxu0 0
    %2855 = vmatprep.subr.bf16.mxu0 0
    %2856 = vmatpush1.bf16.msra.mxu0 0
    %2857 = vmatprep.mubr.bf16.mxu0 0
    %2858 = vmatmul.mubr.bf16.gmra.mrb[0].mxu0 %v2823
    %v2859 = vpop.f32.mrb[0].mxu0
    %v2860 = vadd.f32 %v263, %v2859
    %v2861 = vpop.f32.mrb[0].mxu0
    %v2862 = vadd.f32 %v267, %v2861
    %v2863 = vpop.f32.mrb[0].mxu0
    %v2864 = vpop.f32.mrb[0].mxu0
    %2865 = vdwg.mxu0
    %2866 = vmatprep.subr.bf16.mxu0 0
    %2867 = vmatpush1.bf16.msra.mxu0 %v287
    %2868 = vmatprep.subr.bf16.mxu0 0
    %2869 = vmatpush1.bf16.msra.mxu0 0
    %2870 = vmatprep.subr.bf16.mxu0 0
    %2871 = vmatpush1.bf16.msra.mxu0 0
    %2872 = vmatprep.subr.bf16.mxu0 0
    %2873 = vmatpush1.bf16.msra.mxu0 0
    %2874 = vmatprep.subr.bf16.mxu0 0
    %2875 = vmatpush1.bf16.msra.mxu0 0
    %2876 = vmatprep.subr.bf16.mxu0 0
    %2877 = vmatpush1.bf16.msra.mxu0 0
    %2878 = vmatprep.subr.bf16.mxu0 0
    %2879 = vmatpush1.bf16.msra.mxu0 0
    %2880 = vmatprep.subr.bf16.mxu0 0
    %2881 = vmatpush1.bf16.msra.mxu0 0
    %2882 = vmatprep.subr.bf16.mxu0 0
    %2883 = vmatpush1.bf16.msra.mxu0 0
    %2884 = vmatprep.subr.bf16.mxu0 0
    %2885 = vmatpush1.bf16.msra.mxu0 0
    %2886 = vmatprep.subr.bf16.mxu0 0
    %2887 = vmatpush1.bf16.msra.mxu0 0
    %2888 = vmatprep.subr.bf16.mxu0 0
    %2889 = vmatpush1.bf16.msra.mxu0 0
    %2890 = vmatprep.subr.bf16.mxu0 0
    %2891 = vmatpush1.bf16.msra.mxu0 0
    %2892 = vmatprep.subr.bf16.mxu0 0
    %2893 = vmatpush1.bf16.msra.mxu0 0
    %2894 = vmatprep.subr.bf16.mxu0 0
    %2895 = vmatpush1.bf16.msra.mxu0 0
    %2896 = vmatprep.subr.bf16.mxu0 0
    %2897 = vmatpush1.bf16.msra.mxu0 0
    %2898 = vmatprep.mubr.bf16.mxu0 0
    %2899 = vmatmul.mubr.bf16.gmra.mrb[0].mxu0 %v2823
    %v2900 = vpop.f32.mrb[0].mxu0
    %v2901 = vadd.f32 %v271, %v2900
    %v2902 = vpop.f32.mrb[0].mxu0
    %v2903 = vpop.f32.mrb[0].mxu0
    %v2904 = vpop.f32.mrb[0].mxu0
    %2905 = vdwg.mxu0
    %v2906 = vpack.c.bf16 %v2818, %v2818
    %2907 = vmatprep.subr.bf16.mxu0 %v442
    %2908 = vmatpush1.bf16.msra.mxu0 %v441
    %2909 = vmatprep.subr.bf16.mxu0 %v444
    %2910 = vmatpush1.bf16.msra.mxu0 %v443
    %2911 = vmatprep.subr.bf16.mxu0 %v446
    %2912 = vmatpush1.bf16.msra.mxu0 %v445
    %2913 = vmatprep.subr.bf16.mxu0 %v448
    %2914 = vmatpush1.bf16.msra.mxu0 %v447
    %2915 = vmatprep.subr.bf16.mxu0 %v450
    %2916 = vmatpush1.bf16.msra.mxu0 %v449
    %2917 = vmatprep.subr.bf16.mxu0 %v452
    %2918 = vmatpush1.bf16.msra.mxu0 %v451
    %2919 = vmatprep.subr.bf16.mxu0 %v454
    %2920 = vmatpush1.bf16.msra.mxu0 %v453
    %2921 = vmatprep.subr.bf16.mxu0 %v456
    %2922 = vmatpush1.bf16.msra.mxu0 %v455
    %2923 = vmatprep.subr.bf16.mxu0 0
    %2924 = vmatpush1.bf16.msra.mxu0 0
    %2925 = vmatprep.subr.bf16.mxu0 0
    %2926 = vmatpush1.bf16.msra.mxu0 0
    %2927 = vmatprep.subr.bf16.mxu0 0
    %2928 = vmatpush1.bf16.msra.mxu0 0
    %2929 = vmatprep.subr.bf16.mxu0 0
    %2930 = vmatpush1.bf16.msra.mxu0 0
    %2931 = vmatprep.subr.bf16.mxu0 0
    %2932 = vmatpush1.bf16.msra.mxu0 0
    %2933 = vmatprep.subr.bf16.mxu0 0
    %2934 = vmatpush1.bf16.msra.mxu0 0
    %2935 = vmatprep.subr.bf16.mxu0 0
    %2936 = vmatpush1.bf16.msra.mxu0 0
    %2937 = vmatprep.subr.bf16.mxu0 0
    %2938 = vmatpush1.bf16.msra.mxu0 0
    %2939 = vmatprep.mubr.bf16.mxu0 0
    %2940 = vmatmul.mubr.bf16.gmra.mrb[0].mxu0 %v2906
    %v2941 = vpop.f32.mrb[0].mxu0
    %v2942 = vadd.f32 %v2860, %v2941
    %v2943 = vpop.f32.mrb[0].mxu0
    %v2944 = vadd.f32 %v2862, %v2943
    %v2945 = vpop.f32.mrb[0].mxu0
    %v2946 = vpop.f32.mrb[0].mxu0
    %2947 = vdwg.mxu0
    %v2948 = vxor.u32 %v2942, 2147483648
    %v2949 = vmul.f32 %v2948, 1.442695
    %v2950 = vpow.pop %v2949
    %v2951 = vadd.f32 %v2950, 1.0
    %v2952 = vrcp.pop %v2951
    %v2953 = vmul.f32 1.0, %v2952
    %v2954 = vxor.u32 %v2944, 2147483648
    %v2955 = vmul.f32 %v2954, 1.442695
    %v2956 = vpow.pop %v2955
    %v2957 = vadd.f32 %v2956, 1.0
    %v2958 = vrcp.pop %v2957
    %v2959 = vmul.f32 1.0, %v2958
    %v2960 = vmul.f32 %v2818, %v2959
    %v2961 = vpack.c.bf16 %v2960, %v2960
    %2962 = vmatprep.subr.bf16.mxu0 0
    %2963 = vmatpush1.bf16.msra.mxu0 %v576
    %2964 = vmatprep.subr.bf16.mxu0 0
    %2965 = vmatpush1.bf16.msra.mxu0 %v577
    %2966 = vmatprep.subr.bf16.mxu0 0
    %2967 = vmatpush1.bf16.msra.mxu0 %v578
    %2968 = vmatprep.subr.bf16.mxu0 0
    %2969 = vmatpush1.bf16.msra.mxu0 %v579
    %2970 = vmatprep.subr.bf16.mxu0 0
    %2971 = vmatpush1.bf16.msra.mxu0 %v580
    %2972 = vmatprep.subr.bf16.mxu0 0
    %2973 = vmatpush1.bf16.msra.mxu0 %v581
    %2974 = vmatprep.subr.bf16.mxu0 0
    %2975 = vmatpush1.bf16.msra.mxu0 %v582
    %2976 = vmatprep.subr.bf16.mxu0 0
    %2977 = vmatpush1.bf16.msra.mxu0 %v583
    %2978 = vmatprep.subr.bf16.mxu0 0
    %2979 = vmatpush1.bf16.msra.mxu0 0
    %2980 = vmatprep.subr.bf16.mxu0 0
    %2981 = vmatpush1.bf16.msra.mxu0 0
    %2982 = vmatprep.subr.bf16.mxu0 0
    %2983 = vmatpush1.bf16.msra.mxu0 0
    %2984 = vmatprep.subr.bf16.mxu0 0
    %2985 = vmatpush1.bf16.msra.mxu0 0
    %2986 = vmatprep.subr.bf16.mxu0 0
    %2987 = vmatpush1.bf16.msra.mxu0 0
    %2988 = vmatprep.subr.bf16.mxu0 0
    %2989 = vmatpush1.bf16.msra.mxu0 0
    %2990 = vmatprep.subr.bf16.mxu0 0
    %2991 = vmatpush1.bf16.msra.mxu0 0
    %2992 = vmatprep.subr.bf16.mxu0 0
    %2993 = vmatpush1.bf16.msra.mxu0 0
    %2994 = vmatprep.mubr.bf16.mxu0 0
    %2995 = vmatmul.mubr.bf16.gmra.mrb[0].mxu0 %v2961
    %v2996 = vpop.f32.mrb[0].mxu0
    %v2997 = vadd.f32 %v2901, %v2996
    %v2998 = vpop.f32.mrb[0].mxu0
    %v2999 = vpop.f32.mrb[0].mxu0
    %v3000 = vpop.f32.mrb[0].mxu0
    %3001 = vdwg.mxu0
    %v3002 = vsub.f32 1.0, %v2953
    %v3003 = vmul.f32 %v3002, %v2997
    %v3004 = vmul.f32 %v2953, %v2818
    %v3005 = vadd.f32 %v3003, %v3004
    %v3006 = vpack.c.bf16 %v3005, %v3005
    %s3007 = scalar_lea.vmem [#allocation13], 448
    %v3008 = vld [vmem:[%s3007] sm:$0xf]
    %v3009 = vld [vmem:[%s3007 + $0x4] sm:$0xf]
    %v3010 = vld [vmem:[%s3007 + $0x8] sm:$0xf]
    %v3011 = vld [vmem:[%s3007 + $0xc] sm:$0xf]
    %v3012 = vld [vmem:[%s3007 + $0x10] sm:$0xf]
    %v3013 = vld [vmem:[%s3007 + $0x14] sm:$0xf]
    %v3014 = vld [vmem:[%s3007 + $0x18] sm:$0xf]
    %v3015 = vld [vmem:[%s3007 + $0x1c] sm:$0xf]
    %v3016 = vld [vmem:[%s3007 + $0x20] sm:$0xf]
    %v3017 = vld [vmem:[%s3007 + $0x24] sm:$0xf]
    %v3018 = vld [vmem:[%s3007 + $0x28] sm:$0xf]
    %v3019 = vld [vmem:[%s3007 + $0x2c] sm:$0xf]
    %v3020 = vld [vmem:[%s3007 + $0x30] sm:$0xf]
    %v3021 = vld [vmem:[%s3007 + $0x34] sm:$0xf]
    %v3022 = vld [vmem:[%s3007 + $0x38] sm:$0xf]
    %v3023 = vld [vmem:[%s3007 + $0x3c] sm:$0xf]
    %v3040 = vunpack.c.l.b16 %v3008
    %v3041 = vunpack.c.l.b16 %v3009
    %v3042 = vunpack.c.l.b16 %v3010
    %v3043 = vunpack.c.l.b16 %v3011
    %v3044 = vunpack.c.l.b16 %v3012
    %v3045 = vunpack.c.l.b16 %v3013
    %v3046 = vunpack.c.l.b16 %v3014
    %v3047 = vunpack.c.l.b16 %v3015
    %v3048 = vunpack.c.l.b16 %v3016
    %v3049 = vunpack.c.l.b16 %v3017
    %v3050 = vunpack.c.l.b16 %v3018
    %v3051 = vunpack.c.l.b16 %v3019
    %v3052 = vunpack.c.l.b16 %v3020
    %v3053 = vunpack.c.l.b16 %v3021
    %v3054 = vunpack.c.l.b16 %v3022
    %v3055 = vunpack.c.l.b16 %v3023
    %v3056 = vpack.c.b16 %v3041, %v3040
    %v3057 = vpack.c.b16 %v3043, %v3042
    %v3058 = vpack.c.b16 %v3045, %v3044
    %v3059 = vpack.c.b16 %v3047, %v3046
    %v3060 = vpack.c.b16 %v3049, %v3048
    %v3061 = vpack.c.b16 %v3051, %v3050
    %v3062 = vpack.c.b16 %v3053, %v3052
    %v3063 = vpack.c.b16 %v3055, %v3054
    %3072 = vmatprep.subr.bf16.mxu0 0
    %3073 = vmatpush1.bf16.msra.mxu0 %v3056
    %3074 = vmatprep.subr.bf16.mxu0 0
    %3075 = vmatpush1.bf16.msra.mxu0 %v3057
    %3076 = vmatprep.subr.bf16.mxu0 0
    %3077 = vmatpush1.bf16.msra.mxu0 %v3058
    %3078 = vmatprep.subr.bf16.mxu0 0
    %3079 = vmatpush1.bf16.msra.mxu0 %v3059
    %3080 = vmatprep.subr.bf16.mxu0 0
    %3081 = vmatpush1.bf16.msra.mxu0 %v3060
    %3082 = vmatprep.subr.bf16.mxu0 0
    %3083 = vmatpush1.bf16.msra.mxu0 %v3061
    %3084 = vmatprep.subr.bf16.mxu0 0
    %3085 = vmatpush1.bf16.msra.mxu0 %v3062
    %3086 = vmatprep.subr.bf16.mxu0 0
    %3087 = vmatpush1.bf16.msra.mxu0 %v3063
    %3088 = vmatprep.subr.bf16.mxu0 0
    %3089 = vmatpush1.bf16.msra.mxu0 0
    %3090 = vmatprep.subr.bf16.mxu0 0
    %3091 = vmatpush1.bf16.msra.mxu0 0
    %3092 = vmatprep.subr.bf16.mxu0 0
    %3093 = vmatpush1.bf16.msra.mxu0 0
    %3094 = vmatprep.subr.bf16.mxu0 0
    %3095 = vmatpush1.bf16.msra.mxu0 0
    %3096 = vmatprep.subr.bf16.mxu0 0
    %3097 = vmatpush1.bf16.msra.mxu0 0
    %3098 = vmatprep.subr.bf16.mxu0 0
    %3099 = vmatpush1.bf16.msra.mxu0 0
    %3100 = vmatprep.subr.bf16.mxu0 0
    %3101 = vmatpush1.bf16.msra.mxu0 0
    %3102 = vmatprep.subr.bf16.mxu0 0
    %3103 = vmatpush1.bf16.msra.mxu0 0
    %3104 = vmatprep.mubr.bf16.mxu0 0
    %3105 = vmatmul.mubr.bf16.gmra.mrb[0].mxu0 %v3006
    %v3106 = vpop.f32.mrb[0].mxu0
    %v3107 = vadd.f32 0.0, %v3106
    %v3108 = vpop.f32.mrb[0].mxu0
    %v3109 = vpop.f32.mrb[0].mxu0
    %v3110 = vpop.f32.mrb[0].mxu0
    %3111 = vdwg.mxu0
    %v3112 = vadd.f32 %v2773, %v3107
    %v3113 = vld [vmem:[%s1] sm:$0xff]
    %v3114 = vpack.c.bf16 %v3113, %v3113
    %v3115 = vld [vmem:[%s10] sm:$0x3]
    %vm3116 = vcmask 31744
    %v3118 = vsel %vm3116, %v3114, 0
    %vm3120 = vcmask 1041408
    %v3122 = vsel %vm3120, %v3115, 0
    %3124 = vmatprep.subr.bf16.mxu0 0
    %3125 = vmatpush1.bf16.msra.mxu0 %v3122
    %3126 = vmatprep.subr.bf16.mxu0 0
    %3127 = vmatpush1.bf16.msra.mxu0 0
    %3128 = vmatprep.subr.bf16.mxu0 0
    %3129 = vmatpush1.bf16.msra.mxu0 0
    %3130 = vmatprep.subr.bf16.mxu0 0
    %3131 = vmatpush1.bf16.msra.mxu0 0
    %3132 = vmatprep.subr.bf16.mxu0 0
    %3133 = vmatpush1.bf16.msra.mxu0 0
    %3134 = vmatprep.subr.bf16.mxu0 0
    %3135 = vmatpush1.bf16.msra.mxu0 0
    %3136 = vmatprep.subr.bf16.mxu0 0
    %3137 = vmatpush1.bf16.msra.mxu0 0
    %3138 = vmatprep.subr.bf16.mxu0 0
    %3139 = vmatpush1.bf16.msra.mxu0 0
    %3140 = vmatprep.subr.bf16.mxu0 0
    %3141 = vmatpush1.bf16.msra.mxu0 0
    %3142 = vmatprep.subr.bf16.mxu0 0
    %3143 = vmatpush1.bf16.msra.mxu0 0
    %3144 = vmatprep.subr.bf16.mxu0 0
    %3145 = vmatpush1.bf16.msra.mxu0 0
    %3146 = vmatprep.subr.bf16.mxu0 0
    %3147 = vmatpush1.bf16.msra.mxu0 0
    %3148 = vmatprep.subr.bf16.mxu0 0
    %3149 = vmatpush1.bf16.msra.mxu0 0
    %3150 = vmatprep.subr.bf16.mxu0 0
    %3151 = vmatpush1.bf16.msra.mxu0 0
    %3152 = vmatprep.subr.bf16.mxu0 0
    %3153 = vmatpush1.bf16.msra.mxu0 0
    %3154 = vmatprep.subr.bf16.mxu0 0
    %3155 = vmatpush1.bf16.msra.mxu0 0
    %3156 = vmatprep.mubr.bf16.mxu0 0
    %3157 = vmatmul.mubr.bf16.gmra.mrb[0].mxu0 %v3118
    %v3158 = vpop.f32.mrb[0].mxu0
    %v3159 = vadd.f32 0.0, %v3158
    %v3160 = vpop.f32.mrb[0].mxu0
    %v3161 = vpop.f32.mrb[0].mxu0
    %v3162 = vpop.f32.mrb[0].mxu0
    %3163 = vdwg.mxu0
    %v3164 = vadd.f32 %v3112, %v3159
    %v3165 = vld [vmem:[%s11] sm:$0x1]
    %v3167 = vlaneseq
    %v3168 = vshrl.u32 %v3167, 7
    %v3169 = vsub.s32 0, %v3168
    %v3170 = vrot.slane %v3165, %v3169
    %v3172 = vadd.f32 %v3164, %v3170
    %3173 = vst [vmem:[#allocation15] sm:$0xff] %v3172
    // Predicated region
    $region78: #{tpu_custom_call.1} parent=1 // pred_check
      _
    $region79: #{tpu_custom_call.1} parent=1 // pred_check_branch
      %3175 = sbr.rel (0) target = $region81
    $region80: #{tpu_custom_call.1} parent=1 // pred_region
      %s3177 = ssub.s32 128, 128
      %3178 = vsyncadd [#allocation4], %s3177
      %s3180 = sshll.u32 [#allocation15], 4
      %s3181 = int_to_ptr.vmem [resolvable:$true] %s3180
      %3183 = dma.vmem_to_hbm [thread:$0]  %s3181, 128, %s12, [#allocation4]
    $region81: #{tpu_custom_call.1} parent=1 // pred_fallthru
      _
    // Predicated region
    $region82: #{tpu_custom_call.1} parent=1 // pred_check
      _
    $region83: #{tpu_custom_call.1} parent=1 // pred_check_branch
      %3185 = sbr.rel (0) target = $region85
    $region84: #{tpu_custom_call.1} parent=1 // pred_region
      %3186 = dma.done [#allocation4], 128
    $region85: #{tpu_custom_call.1} parent=1 // pred_fallthru
      _
    %3187 = vsyncpa [#allocation3], 1
    %3188 = vsyncpa [#allocation8], 1
    %3189 = vsyncpa [#allocation11], 1
    %3190 = vsyncpa [#allocation14], 1
    %3191 = vsyncpa [#allocation4], 1
    %3192 = vsyncpa [#allocation5], 1

</llo_original>
